<compile_context>
chip_gen: v7x
topology: tpu7x:2x2x1
jax: 0.10.0
libtpu: 0.0.40
codegen_flags: <defaults>
</compile_context>

<pallas_src>
from functools import partial

import numpy as np
import jax
import jax.numpy as jnp
from jax.experimental import pallas as pl
from jax.experimental.pallas import tpu as pltpu


# --------------------------------- kernel ------------------------------------

def _autoencoder_kernel(x_ref, w1_ref, b1_ref, w2_ref, b2_ref, hid_ref, out_ref):
    # ae1: Linear(in -> hid) + ReLU. bf16 MXU inputs, f32 accumulation,
    # f32 bias + ReLU on the VPU.
    x_bf = x_ref[...].astype(jnp.bfloat16)                            # (TB, in)
    h = jnp.dot(x_bf, w1_ref[...], preferred_element_type=jnp.float32)  # (TB, hid)
    h = jnp.maximum(h + b1_ref[...], 0.0)
    hid_ref[...] = h

    # ae2: Linear(hid -> in).
    o = jnp.dot(h.astype(jnp.bfloat16), w2_ref[...],
                preferred_element_type=jnp.float32)                   # (TB, in)
    out_ref[...] = o + b2_ref[...]


# ------------------------------ wrapper / glue --------------------------------

def _round_up(x, m):
    return ((x + m - 1) // m) * m


def prepare_params(p):
    """One-time conversion to kernel-ready layout (hoisted out of the hot path).

    torch nn.Linear stores weight as (out_features, in_features); the kernel
    wants (in, out) so matmuls are plain (B, in) @ (in, out) with the output
    feature dim on lanes. Weights are pre-cast to bf16; biases stay f32.
    """
    return dict(
        w1=jnp.transpose(p["w1"]).astype(jnp.bfloat16),          # (in, hid)
        b1=p["b1"].reshape(1, -1).astype(jnp.float32),           # (1, hid)
        w2=jnp.transpose(p["w2"]).astype(jnp.bfloat16),          # (hid, in)
        b2=p["b2"].reshape(1, -1).astype(jnp.float32),           # (1, in)
    )


@partial(jax.jit, static_argnames=("tb",))
def autoencoder_pallas(x, prep, tb=512):
    x = x.astype(jnp.float32)
    B, in_layer = x.shape
    hid_layer = prep["w1"].shape[1]

    # Batch tile: at most `tb`, at least one (8-row aligned) tile.
    tb = min(tb, _round_up(B, 8))
    b_pad = _round_up(B, tb)
    if b_pad != B:
        x = jnp.pad(x, ((0, b_pad - B), (0, 0)))
    grid = (b_pad // tb,)

    flops = 2 * b_pad * (in_layer * hid_layer + hid_layer * in_layer)
    bytes_accessed = (
        b_pad * in_layer * 4                      # x (f32)
        + in_layer * hid_layer * 2 * 2            # w1 + w2 (bf16)
        + (hid_layer + in_layer) * 4              # biases
        + b_pad * hid_layer * 4                   # hid out
        + b_pad * in_layer * 4                    # out
    )

    hid, out = pl.pallas_call(
        _autoencoder_kernel,
        out_shape=(jax.ShapeDtypeStruct((b_pad, hid_layer), jnp.float32),
                   jax.ShapeDtypeStruct((b_pad, in_layer), jnp.float32)),
        grid=grid,
        in_specs=[
            pl.BlockSpec((tb, in_layer), lambda i: (i, 0)),            # x: tiled over B
            pl.BlockSpec((in_layer, hid_layer), lambda i: (0, 0)),     # w1: resident
            pl.BlockSpec((1, hid_layer), lambda i: (0, 0)),            # b1: resident
            pl.BlockSpec((hid_layer, in_layer), lambda i: (0, 0)),     # w2: resident
            pl.BlockSpec((1, in_layer), lambda i: (0, 0)),             # b2: resident
        ],
        out_specs=(pl.BlockSpec((tb, hid_layer), lambda i: (i, 0)),
                   pl.BlockSpec((tb, in_layer), lambda i: (i, 0))),
        compiler_params=pltpu.CompilerParams(
            dimension_semantics=("parallel",)),
        cost_estimate=pl.CostEstimate(flops=flops, transcendentals=0,
                                      bytes_accessed=bytes_accessed),
    )(x, prep["w1"], prep["b1"], prep["w2"], prep["b2"])

    return hid[:B], out[:B]


def init_params(key, in_layer=1024, hid_layer=512):
    # Matches torch.nn.Linear default init: U(-1/sqrt(fan_in), 1/sqrt(fan_in)),
    # stored in torch layout (out_features, in_features) for the reference.
    k1, k2, k3, k4 = jax.random.split(key, 4)

    def u(k, shape, fan_in):
        bound = 1.0 / np.sqrt(fan_in)
        return jax.random.uniform(k, shape, jnp.float32, -bound, bound)

    return dict(
        w1=u(k1, (hid_layer, in_layer), in_layer),
        b1=u(k2, (hid_layer,), in_layer),
        w2=u(k3, (in_layer, hid_layer), hid_layer),
        b2=u(k4, (in_layer,), hid_layer),
    )


# --------------------------- pure-JAX reference -------------------------------

def autoencoder_reference(x, p):
    x = x.astype(jnp.float32)
    hid = jax.nn.relu(x @ p["w1"].T + p["b1"][None, :])
    out = hid @ p["w2"].T + p["b2"][None, :]
    return hid, out


# ----------------------------------- main --------------------------------------

if __name__ == "__main__":
    key = jax.random.PRNGKey(0)
    kx, kp = jax.random.split(key)

    B, in_layer, hid_layer = 8, 1024, 512
    x = jax.random.normal(kx, (B, in_layer), jnp.float32)
    params = init_params(kp, in_layer, hid_layer)

    prep = prepare_params(params)              # one-time layout/dtype conversion
    prep = jax.tree_util.tree_map(jax.block_until_ready, prep)

    hid, out = autoencoder_pallas(x, prep)
    hid = jax.block_until_ready(hid)
    out = jax.block_until_ready(out)

    hid_ref, out_ref = autoencoder_reference(x, params)
    hid_ref = jax.block_until_ready(hid_ref)
    out_ref = jax.block_until_ready(out_ref)

    assert hid.shape == (B, hid_layer)
    assert out.shape == (B, in_layer)
    # bf16 MXU inputs (f32 accumulation) -> tolerance ~1e-2 instead of 1e-4.
    assert np.allclose(np.asarray(hid), np.asarray(hid_ref), atol=2e-2, rtol=2e-2)
    assert np.allclose(np.asarray(out), np.asarray(out_ref), atol=2e-2, rtol=2e-2)
    print("KERNEL_OK")
</pallas_src>

<mosaic_0001>
module attributes {stable_mosaic.version = 11 : i64} {
  func.func @_autoencoder_kernel(%arg0: i32, %arg1: memref<8x1024xf32, #tpu.memory_space<vmem>>, %arg2: memref<1024x512xbf16, #tpu.memory_space<vmem>>, %arg3: memref<1x512xf32, #tpu.memory_space<vmem>>, %arg4: memref<512x1024xbf16, #tpu.memory_space<vmem>>, %arg5: memref<1x1024xf32, #tpu.memory_space<vmem>>, %arg6: memref<8x512xf32, #tpu.memory_space<vmem>>, %arg7: memref<8x1024xf32, #tpu.memory_space<vmem>>) attributes {dimension_semantics = [#tpu.dimension_semantics<parallel>], iteration_bounds = array<i64: 1>, scalar_prefetch = 0 : i64, scratch_operands = 0 : i64, tpu.core_type = #tpu.core_type<tc>, window_params = [{transform_indices = @transform_0, window_bounds = array<i64: 8, 1024>}, {pipeline_mode = #tpu.pipeline_mode<synchronous>, transform_indices = @transform_1, window_bounds = array<i64: 1024, 512>}, {pipeline_mode = #tpu.pipeline_mode<synchronous>, transform_indices = @transform_2, window_bounds = array<i64: 1, 512>}, {pipeline_mode = #tpu.pipeline_mode<synchronous>, transform_indices = @transform_3, window_bounds = array<i64: 512, 1024>}, {pipeline_mode = #tpu.pipeline_mode<synchronous>, transform_indices = @transform_4, window_bounds = array<i64: 1, 1024>}, {transform_indices = @transform_5, window_bounds = array<i64: 8, 512>}, {transform_indices = @transform_6, window_bounds = array<i64: 8, 1024>}]} {
    %c0 = arith.constant 0 : index
    %c0_0 = arith.constant 0 : index
    %0 = vector.load %arg1[%c0, %c0_0] : memref<8x1024xf32, #tpu.memory_space<vmem>>, vector<8x1024xf32>
    %1 = arith.truncf %0 : vector<8x1024xf32> to vector<8x1024xbf16>
    %c0_1 = arith.constant 0 : index
    %c0_2 = arith.constant 0 : index
    %2 = vector.load %arg2[%c0_1, %c0_2] : memref<1024x512xbf16, #tpu.memory_space<vmem>>, vector<1024x512xbf16>
    %cst = arith.constant dense<0.000000e+00> : vector<8x512xf32>
    %3 = tpu.matmul %1, %2, %cst {dimension_numbers = #tpu.dot_dimension_numbers<[1], [0], [0], [1], [0, 0, 1, 1], [], []>} : vector<8x1024xbf16>, vector<1024x512xbf16>, vector<8x512xf32> -> vector<8x512xf32>
    %c0_3 = arith.constant 0 : index
    %c0_4 = arith.constant 0 : index
    %4 = vector.load %arg3[%c0_3, %c0_4] : memref<1x512xf32, #tpu.memory_space<vmem>>, vector<1x512xf32>
    %5 = vector.broadcast %4 : vector<1x512xf32> to vector<8x512xf32>
    %6 = arith.addf %3, %5 : vector<8x512xf32>
    %cst_5 = arith.constant 0.000000e+00 : f32
    %7 = vector.broadcast %cst_5 : f32 to vector<8x512xf32>
    %8 = arith.maximumf %6, %7 : vector<8x512xf32>
    %c0_6 = arith.constant 0 : index
    %c0_7 = arith.constant 0 : index
    %9 = vector.load %arg6[%c0_6, %c0_7] : memref<8x512xf32, #tpu.memory_space<vmem>>, vector<8x512xf32>
    tpu.vector_store %arg6[%c0_6, %c0_7], %8 {strides = array<i32>} : memref<8x512xf32, #tpu.memory_space<vmem>>, vector<8x512xf32>,
    %10 = arith.truncf %8 : vector<8x512xf32> to vector<8x512xbf16>
    %c0_8 = arith.constant 0 : index
    %c0_9 = arith.constant 0 : index
    %11 = vector.load %arg4[%c0_8, %c0_9] : memref<512x1024xbf16, #tpu.memory_space<vmem>>, vector<512x1024xbf16>
    %cst_10 = arith.constant dense<0.000000e+00> : vector<8x1024xf32>
    %12 = tpu.matmul %10, %11, %cst_10 {dimension_numbers = #tpu.dot_dimension_numbers<[1], [0], [0], [1], [0, 0, 1, 1], [], []>} : vector<8x512xbf16>, vector<512x1024xbf16>, vector<8x1024xf32> -> vector<8x1024xf32>
    %c0_11 = arith.constant 0 : index
    %c0_12 = arith.constant 0 : index
    %13 = vector.load %arg5[%c0_11, %c0_12] : memref<1x1024xf32, #tpu.memory_space<vmem>>, vector<1x1024xf32>
    %14 = vector.broadcast %13 : vector<1x1024xf32> to vector<8x1024xf32>
    %15 = arith.addf %12, %14 : vector<8x1024xf32>
    %c0_13 = arith.constant 0 : index
    %c0_14 = arith.constant 0 : index
    %16 = vector.load %arg7[%c0_13, %c0_14] : memref<8x1024xf32, #tpu.memory_space<vmem>>, vector<8x1024xf32>
    tpu.vector_store %arg7[%c0_13, %c0_14], %15 {strides = array<i32>} : memref<8x1024xf32, #tpu.memory_space<vmem>>, vector<8x1024xf32>,
    return
  }
  func.func @transform_0(%arg0: i32) -> (i32, i32) {
    %c0_i32 = arith.constant 0 : i32
    %c0_i32_0 = arith.constant 0 : i32
    return %arg0, %c0_i32 : i32, i32
  }
  func.func @transform_1(%arg0: i32) -> (i32, i32) {
    %c0_i32 = arith.constant 0 : i32
    %c0_i32_0 = arith.constant 0 : i32
    %c0_i32_1 = arith.constant 0 : i32
    return %c0_i32, %c0_i32_0 : i32, i32
  }
  func.func @transform_2(%arg0: i32) -> (i32, i32) {
    %c0_i32 = arith.constant 0 : i32
    %c0_i32_0 = arith.constant 0 : i32
    %c0_i32_1 = arith.constant 0 : i32
    return %c0_i32, %c0_i32_0 : i32, i32
  }
  func.func @transform_3(%arg0: i32) -> (i32, i32) {
    %c0_i32 = arith.constant 0 : i32
    %c0_i32_0 = arith.constant 0 : i32
    %c0_i32_1 = arith.constant 0 : i32
    return %c0_i32, %c0_i32_0 : i32, i32
  }
  func.func @transform_4(%arg0: i32) -> (i32, i32) {
    %c0_i32 = arith.constant 0 : i32
    %c0_i32_0 = arith.constant 0 : i32
    %c0_i32_1 = arith.constant 0 : i32
    return %c0_i32, %c0_i32_0 : i32, i32
  }
  func.func @transform_5(%arg0: i32) -> (i32, i32) {
    %c0_i32 = arith.constant 0 : i32
    %c0_i32_0 = arith.constant 0 : i32
    return %arg0, %c0_i32 : i32, i32
  }
  func.func @transform_6(%arg0: i32) -> (i32, i32) {
    %c0_i32 = arith.constant 0 : i32
    %c0_i32_0 = arith.constant 0 : i32
    return %arg0, %c0_i32 : i32, i32
  }
}

</mosaic_0001>

<llo_original>
// kernel: autoencoder_pallas.1
$region0: #{autoencoder_pallas.1}
  #allocation0 [shape = 'u32[]', space=smem, size = 0x4, offset = 0x4, fixed_abs, tag = 'smem constant byte address 0x4 - core index']
  #allocation1 [shape = 'u32[144,128]{1,0:T(1,128)}', space=vmem, size = 0x12000, scoped, tag = 'internal scratch']
  %s0 = inlined_call_operand.hbm [shape: f32[8,1024], index: 0, kind: input, shape index: {}]
  %s1 = inlined_call_operand.hbm [shape: bf16[1024,512], index: 1, kind: input, shape index: {}]
  %s2 = inlined_call_operand.hbm [shape: f32[1,512], index: 2, kind: input, shape index: {}]
  %s3 = inlined_call_operand.hbm [shape: bf16[512,1024], index: 3, kind: input, shape index: {}]
  %s4 = inlined_call_operand.hbm [shape: f32[1,1024], index: 4, kind: input, shape index: {}]
  %s5 = inlined_call_operand.hbm [shape: f32[8,512], index: 5, kind: output, shape index: {0}]
  %s6 = inlined_call_operand.hbm [shape: f32[8,1024], index: 6, kind: output, shape index: {1}]
  %7 = xla_tuple %s5, %s6
  %s8 = sld [smem:[#allocation0]]
  $region58: #{autoencoder_pallas.1} parent=0
    _
  %s10 = ssub.s32 1, %s8
  %s11 = scalar_select 0, %s10, %s8
  $region1: #{autoencoder_pallas.1} parent=0
    #allocation2 [shape = 'u8[32768]{0}', space=vmem, size = 0x8000, scoped, tag = 'input window, operand 0, single buffered']
    #allocation3 [shape = 's32[1]{0}', space=sflag, size = 0x4, scoped, tag = 'scoped memory for autoencoder_pallas.1']
    #allocation4 [shape = 's32[1]{0}', space=sflag, size = 0x4, scoped, tag = 'scoped memory for autoencoder_pallas.1']
    #allocation5 [shape = 'u8[1048576]{0}', space=vmem, size = 0x100000, scoped, tag = 'input window, operand 1, single buffered']
    #allocation6 [shape = 's32[1]{0}', space=sflag, size = 0x4, scoped, tag = 'scoped memory for autoencoder_pallas.1']
    #allocation7 [shape = 'u8[2048]{0}', space=vmem, size = 0x800, scoped, tag = 'input window, operand 2, single buffered']
    #allocation8 [shape = 'u8[1048576]{0}', space=vmem, size = 0x100000, scoped, tag = 'input window, operand 3, single buffered']
    #allocation9 [shape = 's32[1]{0}', space=sflag, size = 0x4, scoped, tag = 'scoped memory for autoencoder_pallas.1']
    #allocation10 [shape = 'u8[4096]{0}', space=vmem, size = 0x1000, scoped, tag = 'input window, operand 4, single buffered']
    #allocation11 [shape = 'u8[16384]{0}', space=vmem, size = 0x4000, scoped, tag = 'output window, operand 0, single buffered']
    #allocation12 [shape = 'u8[32768]{0}', space=vmem, size = 0x8000, scoped, tag = 'output window, operand 1, single buffered']
    #allocation13 [shape = 's32[1]{0}', space=sflag, size = 0x4, scoped, tag = 'scoped memory for autoencoder_pallas.1']
    %12 = vsyncpa [#allocation3], 0
    %13 = vsyncpa [#allocation6], 0
    %14 = vsyncpa [#allocation9], 0
    %15 = vsyncpa [#allocation4], 0
    %16 = vsyncpa [#allocation13], 0
    // Predicated region
    $region2: #{autoencoder_pallas.1} parent=1 // pred_check
      _
    $region3: #{autoencoder_pallas.1} parent=1 // pred_check_branch
      %18 = sbr.rel (0) target = $region5
    $region4: #{autoencoder_pallas.1} parent=1 // pred_region
      %s20 = ssub.s32 1024, 1024
      %21 = vsyncadd [#allocation3], %s20
      %s23 = sshll.u32 [#allocation2], 4
      %s24 = int_to_ptr.vmem [resolvable:$true] %s23
      %26 = dma.hbm_to_vmem [thread:$0]  %s0, 1024, %s24, [#allocation3]
    $region5: #{autoencoder_pallas.1} parent=1 // pred_fallthru
      _
    // Predicated region
    $region6: #{autoencoder_pallas.1} parent=1 // pred_check
      _
    $region7: #{autoencoder_pallas.1} parent=1 // pred_check_branch
      %28 = sbr.rel (0) target = $region9
    $region8: #{autoencoder_pallas.1} parent=1 // pred_region
      %s30 = ssub.s32 32768, 32768
      %31 = vsyncadd [#allocation6], %s30
      %s32 = sshll.u32 [#allocation5], 4
      %s33 = int_to_ptr.vmem [resolvable:$true] %s32
      %38 = dma.hbm_to_vmem [thread:$0]  %s1, 32768, %s33, [#allocation6], 256, 256, 16
    $region9: #{autoencoder_pallas.1} parent=1 // pred_fallthru
      _
    // Predicated region
    $region10: #{autoencoder_pallas.1} parent=1 // pred_check
      _
    $region11: #{autoencoder_pallas.1} parent=1 // pred_check_branch
      %40 = sbr.rel (0) target = $region13
    $region12: #{autoencoder_pallas.1} parent=1 // pred_region
      %s42 = ssub.s32 64, 64
      %43 = vsyncadd [#allocation6], %s42
      %s45 = sshll.u32 [#allocation7], 4
      %s46 = int_to_ptr.vmem [resolvable:$true] %s45
      %48 = dma.hbm_to_vmem [thread:$0]  %s2, 64, %s46, [#allocation6]
    $region13: #{autoencoder_pallas.1} parent=1 // pred_fallthru
      _
    // Predicated region
    $region14: #{autoencoder_pallas.1} parent=1 // pred_check
      _
    $region15: #{autoencoder_pallas.1} parent=1 // pred_check_branch
      %50 = sbr.rel (0) target = $region17
    $region16: #{autoencoder_pallas.1} parent=1 // pred_region
      %s52 = ssub.s32 32768, 32768
      %53 = vsyncadd [#allocation9], %s52
      %s54 = sshll.u32 [#allocation8], 4
      %s55 = int_to_ptr.vmem [resolvable:$true] %s54
      %60 = dma.hbm_to_vmem [thread:$0]  %s3, 32768, %s55, [#allocation9], 512, 512, 32
    $region17: #{autoencoder_pallas.1} parent=1 // pred_fallthru
      _
    // Predicated region
    $region18: #{autoencoder_pallas.1} parent=1 // pred_check
      _
    $region19: #{autoencoder_pallas.1} parent=1 // pred_check_branch
      %62 = sbr.rel (0) target = $region21
    $region20: #{autoencoder_pallas.1} parent=1 // pred_region
      %s64 = ssub.s32 128, 128
      %65 = vsyncadd [#allocation9], %s64
      %s67 = sshll.u32 [#allocation10], 4
      %s68 = int_to_ptr.vmem [resolvable:$true] %s67
      %70 = dma.hbm_to_vmem [thread:$0]  %s4, 128, %s68, [#allocation9]
    $region21: #{autoencoder_pallas.1} parent=1 // pred_fallthru
      _
    // Predicated region
    $region22: #{autoencoder_pallas.1} parent=1 // pred_check
      _
    $region23: #{autoencoder_pallas.1} parent=1 // pred_check_branch
      %72 = sbr.rel (0) target = $region25
    $region24: #{autoencoder_pallas.1} parent=1 // pred_region
      %73 = dma.done [#allocation3], 1024
    $region25: #{autoencoder_pallas.1} parent=1 // pred_fallthru
      _
    // Predicated region
    $region26: #{autoencoder_pallas.1} parent=1 // pred_check
      _
    $region27: #{autoencoder_pallas.1} parent=1 // pred_check_branch
      %75 = sbr.rel (0) target = $region29
    $region28: #{autoencoder_pallas.1} parent=1 // pred_region
      %76 = dma.done [#allocation6], 32768
    $region29: #{autoencoder_pallas.1} parent=1 // pred_fallthru
      _
    // Predicated region
    $region30: #{autoencoder_pallas.1} parent=1 // pred_check
      _
    $region31: #{autoencoder_pallas.1} parent=1 // pred_check_branch
      %78 = sbr.rel (0) target = $region33
    $region32: #{autoencoder_pallas.1} parent=1 // pred_region
      %79 = dma.done [#allocation6], 64
    $region33: #{autoencoder_pallas.1} parent=1 // pred_fallthru
      _
    // Predicated region
    $region34: #{autoencoder_pallas.1} parent=1 // pred_check
      _
    $region35: #{autoencoder_pallas.1} parent=1 // pred_check_branch
      %81 = sbr.rel (0) target = $region37
    $region36: #{autoencoder_pallas.1} parent=1 // pred_region
      %82 = dma.done [#allocation9], 32768
    $region37: #{autoencoder_pallas.1} parent=1 // pred_fallthru
      _
    // Predicated region
    $region38: #{autoencoder_pallas.1} parent=1 // pred_check
      _
    $region39: #{autoencoder_pallas.1} parent=1 // pred_check_branch
      %84 = sbr.rel (0) target = $region41
    $region40: #{autoencoder_pallas.1} parent=1 // pred_region
      %85 = dma.done [#allocation9], 128
    $region41: #{autoencoder_pallas.1} parent=1 // pred_fallthru
      _
    %v86 = vld [vmem:[#allocation2] sm:$0xff]
    %v87 = vld [vmem:[#allocation2 + $0x8] sm:$0xff]
    %v88 = vld [vmem:[#allocation2 + $0x10] sm:$0xff]
    %v89 = vld [vmem:[#allocation2 + $0x18] sm:$0xff]
    %v90 = vld [vmem:[#allocation2 + $0x20] sm:$0xff]
    %v91 = vld [vmem:[#allocation2 + $0x28] sm:$0xff]
    %v92 = vld [vmem:[#allocation2 + $0x30] sm:$0xff]
    %v93 = vld [vmem:[#allocation2 + $0x38] sm:$0xff]
    %v94 = vpack.c.bf16 %v86, %v86
    %v95 = vpack.c.bf16 %v87, %v87
    %v96 = vpack.c.bf16 %v88, %v88
    %v97 = vpack.c.bf16 %v89, %v89
    %v98 = vpack.c.bf16 %v90, %v90
    %v99 = vpack.c.bf16 %v91, %v91
    %v100 = vpack.c.bf16 %v92, %v92
    %v101 = vpack.c.bf16 %v93, %v93
    %v102 = vld [vmem:[#allocation5] sm:$0xff]
    %v103 = vld [vmem:[#allocation5 + $0x8] sm:$0xff]
    %v104 = vld [vmem:[#allocation5 + $0x10] sm:$0xff]
    %v105 = vld [vmem:[#allocation5 + $0x18] sm:$0xff]
    %v106 = vld [vmem:[#allocation5 + $0x20] sm:$0xff]
    %v107 = vld [vmem:[#allocation5 + $0x28] sm:$0xff]
    %v108 = vld [vmem:[#allocation5 + $0x30] sm:$0xff]
    %v109 = vld [vmem:[#allocation5 + $0x38] sm:$0xff]
    %v110 = vld [vmem:[#allocation5 + $0x40] sm:$0xff]
    %v111 = vld [vmem:[#allocation5 + $0x48] sm:$0xff]
    %v112 = vld [vmem:[#allocation5 + $0x50] sm:$0xff]
    %v113 = vld [vmem:[#allocation5 + $0x58] sm:$0xff]
    %v114 = vld [vmem:[#allocation5 + $0x60] sm:$0xff]
    %v115 = vld [vmem:[#allocation5 + $0x68] sm:$0xff]
    %v116 = vld [vmem:[#allocation5 + $0x70] sm:$0xff]
    %v117 = vld [vmem:[#allocation5 + $0x78] sm:$0xff]
    %v118 = vld [vmem:[#allocation5 + $0x80] sm:$0xff]
    %v119 = vld [vmem:[#allocation5 + $0x88] sm:$0xff]
    %v120 = vld [vmem:[#allocation5 + $0x90] sm:$0xff]
    %v121 = vld [vmem:[#allocation5 + $0x98] sm:$0xff]
    %v122 = vld [vmem:[#allocation5 + $0xa0] sm:$0xff]
    %v123 = vld [vmem:[#allocation5 + $0xa8] sm:$0xff]
    %v124 = vld [vmem:[#allocation5 + $0xb0] sm:$0xff]
    %v125 = vld [vmem:[#allocation5 + $0xb8] sm:$0xff]
    %v126 = vld [vmem:[#allocation5 + $0xc0] sm:$0xff]
    %v127 = vld [vmem:[#allocation5 + $0xc8] sm:$0xff]
    %v128 = vld [vmem:[#allocation5 + $0xd0] sm:$0xff]
    %v129 = vld [vmem:[#allocation5 + $0xd8] sm:$0xff]
    %v130 = vld [vmem:[#allocation5 + $0xe0] sm:$0xff]
    %v131 = vld [vmem:[#allocation5 + $0xe8] sm:$0xff]
    %v132 = vld [vmem:[#allocation5 + $0xf0] sm:$0xff]
    %v133 = vld [vmem:[#allocation5 + $0xf8] sm:$0xff]
    %v134 = vld [vmem:[#allocation5 + $0x100] sm:$0xff]
    %v135 = vld [vmem:[#allocation5 + $0x108] sm:$0xff]
    %v136 = vld [vmem:[#allocation5 + $0x110] sm:$0xff]
    %v137 = vld [vmem:[#allocation5 + $0x118] sm:$0xff]
    %v138 = vld [vmem:[#allocation5 + $0x120] sm:$0xff]
    %v139 = vld [vmem:[#allocation5 + $0x128] sm:$0xff]
    %v140 = vld [vmem:[#allocation5 + $0x130] sm:$0xff]
    %v141 = vld [vmem:[#allocation5 + $0x138] sm:$0xff]
    %v142 = vld [vmem:[#allocation5 + $0x140] sm:$0xff]
    %v143 = vld [vmem:[#allocation5 + $0x148] sm:$0xff]
    %v144 = vld [vmem:[#allocation5 + $0x150] sm:$0xff]
    %v145 = vld [vmem:[#allocation5 + $0x158] sm:$0xff]
    %v146 = vld [vmem:[#allocation5 + $0x160] sm:$0xff]
    %v147 = vld [vmem:[#allocation5 + $0x168] sm:$0xff]
    %v148 = vld [vmem:[#allocation5 + $0x170] sm:$0xff]
    %v149 = vld [vmem:[#allocation5 + $0x178] sm:$0xff]
    %v150 = vld [vmem:[#allocation5 + $0x180] sm:$0xff]
    %v151 = vld [vmem:[#allocation5 + $0x188] sm:$0xff]
    %v152 = vld [vmem:[#allocation5 + $0x190] sm:$0xff]
    %v153 = vld [vmem:[#allocation5 + $0x198] sm:$0xff]
    %v154 = vld [vmem:[#allocation5 + $0x1a0] sm:$0xff]
    %v155 = vld [vmem:[#allocation5 + $0x1a8] sm:$0xff]
    %v156 = vld [vmem:[#allocation5 + $0x1b0] sm:$0xff]
    %v157 = vld [vmem:[#allocation5 + $0x1b8] sm:$0xff]
    %v158 = vld [vmem:[#allocation5 + $0x1c0] sm:$0xff]
    %v159 = vld [vmem:[#allocation5 + $0x1c8] sm:$0xff]
    %v160 = vld [vmem:[#allocation5 + $0x1d0] sm:$0xff]
    %v161 = vld [vmem:[#allocation5 + $0x1d8] sm:$0xff]
    %v162 = vld [vmem:[#allocation5 + $0x1e0] sm:$0xff]
    %v163 = vld [vmem:[#allocation5 + $0x1e8] sm:$0xff]
    %v164 = vld [vmem:[#allocation5 + $0x1f0] sm:$0xff]
    %v165 = vld [vmem:[#allocation5 + $0x1f8] sm:$0xff]
    %v166 = vld [vmem:[#allocation5 + $0x200] sm:$0xff]
    %v167 = vld [vmem:[#allocation5 + $0x208] sm:$0xff]
    %v168 = vld [vmem:[#allocation5 + $0x210] sm:$0xff]
    %v169 = vld [vmem:[#allocation5 + $0x218] sm:$0xff]
    %v170 = vld [vmem:[#allocation5 + $0x220] sm:$0xff]
    %v171 = vld [vmem:[#allocation5 + $0x228] sm:$0xff]
    %v172 = vld [vmem:[#allocation5 + $0x230] sm:$0xff]
    %v173 = vld [vmem:[#allocation5 + $0x238] sm:$0xff]
    %v174 = vld [vmem:[#allocation5 + $0x240] sm:$0xff]
    %v175 = vld [vmem:[#allocation5 + $0x248] sm:$0xff]
    %v176 = vld [vmem:[#allocation5 + $0x250] sm:$0xff]
    %v177 = vld [vmem:[#allocation5 + $0x258] sm:$0xff]
    %v178 = vld [vmem:[#allocation5 + $0x260] sm:$0xff]
    %v179 = vld [vmem:[#allocation5 + $0x268] sm:$0xff]
    %v180 = vld [vmem:[#allocation5 + $0x270] sm:$0xff]
    %v181 = vld [vmem:[#allocation5 + $0x278] sm:$0xff]
    %v182 = vld [vmem:[#allocation5 + $0x280] sm:$0xff]
    %v183 = vld [vmem:[#allocation5 + $0x288] sm:$0xff]
    %v184 = vld [vmem:[#allocation5 + $0x290] sm:$0xff]
    %v185 = vld [vmem:[#allocation5 + $0x298] sm:$0xff]
    %v186 = vld [vmem:[#allocation5 + $0x2a0] sm:$0xff]
    %v187 = vld [vmem:[#allocation5 + $0x2a8] sm:$0xff]
    %v188 = vld [vmem:[#allocation5 + $0x2b0] sm:$0xff]
    %v189 = vld [vmem:[#allocation5 + $0x2b8] sm:$0xff]
    %v190 = vld [vmem:[#allocation5 + $0x2c0] sm:$0xff]
    %v191 = vld [vmem:[#allocation5 + $0x2c8] sm:$0xff]
    %v192 = vld [vmem:[#allocation5 + $0x2d0] sm:$0xff]
    %v193 = vld [vmem:[#allocation5 + $0x2d8] sm:$0xff]
    %v194 = vld [vmem:[#allocation5 + $0x2e0] sm:$0xff]
    %v195 = vld [vmem:[#allocation5 + $0x2e8] sm:$0xff]
    %v196 = vld [vmem:[#allocation5 + $0x2f0] sm:$0xff]
    %v197 = vld [vmem:[#allocation5 + $0x2f8] sm:$0xff]
    %v198 = vld [vmem:[#allocation5 + $0x300] sm:$0xff]
    %v199 = vld [vmem:[#allocation5 + $0x308] sm:$0xff]
    %v200 = vld [vmem:[#allocation5 + $0x310] sm:$0xff]
    %v201 = vld [vmem:[#allocation5 + $0x318] sm:$0xff]
    %v202 = vld [vmem:[#allocation5 + $0x320] sm:$0xff]
    %v203 = vld [vmem:[#allocation5 + $0x328] sm:$0xff]
    %v204 = vld [vmem:[#allocation5 + $0x330] sm:$0xff]
    %v205 = vld [vmem:[#allocation5 + $0x338] sm:$0xff]
    %v206 = vld [vmem:[#allocation5 + $0x340] sm:$0xff]
    %v207 = vld [vmem:[#allocation5 + $0x348] sm:$0xff]
    %v208 = vld [vmem:[#allocation5 + $0x350] sm:$0xff]
    %v209 = vld [vmem:[#allocation5 + $0x358] sm:$0xff]
    %v210 = vld [vmem:[#allocation5 + $0x360] sm:$0xff]
    %v211 = vld [vmem:[#allocation5 + $0x368] sm:$0xff]
    %v212 = vld [vmem:[#allocation5 + $0x370] sm:$0xff]
    %v213 = vld [vmem:[#allocation5 + $0x378] sm:$0xff]
    %v214 = vld [vmem:[#allocation5 + $0x380] sm:$0xff]
    %v215 = vld [vmem:[#allocation5 + $0x388] sm:$0xff]
    %v216 = vld [vmem:[#allocation5 + $0x390] sm:$0xff]
    %v217 = vld [vmem:[#allocation5 + $0x398] sm:$0xff]
    %v218 = vld [vmem:[#allocation5 + $0x3a0] sm:$0xff]
    %v219 = vld [vmem:[#allocation5 + $0x3a8] sm:$0xff]
    %v220 = vld [vmem:[#allocation5 + $0x3b0] sm:$0xff]
    %v221 = vld [vmem:[#allocation5 + $0x3b8] sm:$0xff]
    %v222 = vld [vmem:[#allocation5 + $0x3c0] sm:$0xff]
    %v223 = vld [vmem:[#allocation5 + $0x3c8] sm:$0xff]
    %v224 = vld [vmem:[#allocation5 + $0x3d0] sm:$0xff]
    %v225 = vld [vmem:[#allocation5 + $0x3d8] sm:$0xff]
    %v226 = vld [vmem:[#allocation5 + $0x3e0] sm:$0xff]
    %v227 = vld [vmem:[#allocation5 + $0x3e8] sm:$0xff]
    %v228 = vld [vmem:[#allocation5 + $0x3f0] sm:$0xff]
    %v229 = vld [vmem:[#allocation5 + $0x3f8] sm:$0xff]
    %v230 = vld [vmem:[#allocation5 + $0x400] sm:$0xff]
    %v231 = vld [vmem:[#allocation5 + $0x408] sm:$0xff]
    %v232 = vld [vmem:[#allocation5 + $0x410] sm:$0xff]
    %v233 = vld [vmem:[#allocation5 + $0x418] sm:$0xff]
    %v234 = vld [vmem:[#allocation5 + $0x420] sm:$0xff]
    %v235 = vld [vmem:[#allocation5 + $0x428] sm:$0xff]
    %v236 = vld [vmem:[#allocation5 + $0x430] sm:$0xff]
    %v237 = vld [vmem:[#allocation5 + $0x438] sm:$0xff]
    %v238 = vld [vmem:[#allocation5 + $0x440] sm:$0xff]
    %v239 = vld [vmem:[#allocation5 + $0x448] sm:$0xff]
    %v240 = vld [vmem:[#allocation5 + $0x450] sm:$0xff]
    %v241 = vld [vmem:[#allocation5 + $0x458] sm:$0xff]
    %v242 = vld [vmem:[#allocation5 + $0x460] sm:$0xff]
    %v243 = vld [vmem:[#allocation5 + $0x468] sm:$0xff]
    %v244 = vld [vmem:[#allocation5 + $0x470] sm:$0xff]
    %v245 = vld [vmem:[#allocation5 + $0x478] sm:$0xff]
    %v246 = vld [vmem:[#allocation5 + $0x480] sm:$0xff]
    %v247 = vld [vmem:[#allocation5 + $0x488] sm:$0xff]
    %v248 = vld [vmem:[#allocation5 + $0x490] sm:$0xff]
    %v249 = vld [vmem:[#allocation5 + $0x498] sm:$0xff]
    %v250 = vld [vmem:[#allocation5 + $0x4a0] sm:$0xff]
    %v251 = vld [vmem:[#allocation5 + $0x4a8] sm:$0xff]
    %v252 = vld [vmem:[#allocation5 + $0x4b0] sm:$0xff]
    %v253 = vld [vmem:[#allocation5 + $0x4b8] sm:$0xff]
    %v254 = vld [vmem:[#allocation5 + $0x4c0] sm:$0xff]
    %v255 = vld [vmem:[#allocation5 + $0x4c8] sm:$0xff]
    %v256 = vld [vmem:[#allocation5 + $0x4d0] sm:$0xff]
    %v257 = vld [vmem:[#allocation5 + $0x4d8] sm:$0xff]
    %v258 = vld [vmem:[#allocation5 + $0x4e0] sm:$0xff]
    %v259 = vld [vmem:[#allocation5 + $0x4e8] sm:$0xff]
    %v260 = vld [vmem:[#allocation5 + $0x4f0] sm:$0xff]
    %v261 = vld [vmem:[#allocation5 + $0x4f8] sm:$0xff]
    %v262 = vld [vmem:[#allocation5 + $0x500] sm:$0xff]
    %v263 = vld [vmem:[#allocation5 + $0x508] sm:$0xff]
    %v264 = vld [vmem:[#allocation5 + $0x510] sm:$0xff]
    %v265 = vld [vmem:[#allocation5 + $0x518] sm:$0xff]
    %v266 = vld [vmem:[#allocation5 + $0x520] sm:$0xff]
    %v267 = vld [vmem:[#allocation5 + $0x528] sm:$0xff]
    %v268 = vld [vmem:[#allocation5 + $0x530] sm:$0xff]
    %v269 = vld [vmem:[#allocation5 + $0x538] sm:$0xff]
    %v270 = vld [vmem:[#allocation5 + $0x540] sm:$0xff]
    %v271 = vld [vmem:[#allocation5 + $0x548] sm:$0xff]
    %v272 = vld [vmem:[#allocation5 + $0x550] sm:$0xff]
    %v273 = vld [vmem:[#allocation5 + $0x558] sm:$0xff]
    %v274 = vld [vmem:[#allocation5 + $0x560] sm:$0xff]
    %v275 = vld [vmem:[#allocation5 + $0x568] sm:$0xff]
    %v276 = vld [vmem:[#allocation5 + $0x570] sm:$0xff]
    %v277 = vld [vmem:[#allocation5 + $0x578] sm:$0xff]
    %v278 = vld [vmem:[#allocation5 + $0x580] sm:$0xff]
    %v279 = vld [vmem:[#allocation5 + $0x588] sm:$0xff]
    %v280 = vld [vmem:[#allocation5 + $0x590] sm:$0xff]
    %v281 = vld [vmem:[#allocation5 + $0x598] sm:$0xff]
    %v282 = vld [vmem:[#allocation5 + $0x5a0] sm:$0xff]
    %v283 = vld [vmem:[#allocation5 + $0x5a8] sm:$0xff]
    %v284 = vld [vmem:[#allocation5 + $0x5b0] sm:$0xff]
    %v285 = vld [vmem:[#allocation5 + $0x5b8] sm:$0xff]
    %v286 = vld [vmem:[#allocation5 + $0x5c0] sm:$0xff]
    %v287 = vld [vmem:[#allocation5 + $0x5c8] sm:$0xff]
    %v288 = vld [vmem:[#allocation5 + $0x5d0] sm:$0xff]
    %v289 = vld [vmem:[#allocation5 + $0x5d8] sm:$0xff]
    %v290 = vld [vmem:[#allocation5 + $0x5e0] sm:$0xff]
    %v291 = vld [vmem:[#allocation5 + $0x5e8] sm:$0xff]
    %v292 = vld [vmem:[#allocation5 + $0x5f0] sm:$0xff]
    %v293 = vld [vmem:[#allocation5 + $0x5f8] sm:$0xff]
    %v294 = vld [vmem:[#allocation5 + $0x600] sm:$0xff]
    %v295 = vld [vmem:[#allocation5 + $0x608] sm:$0xff]
    %v296 = vld [vmem:[#allocation5 + $0x610] sm:$0xff]
    %v297 = vld [vmem:[#allocation5 + $0x618] sm:$0xff]
    %v298 = vld [vmem:[#allocation5 + $0x620] sm:$0xff]
    %v299 = vld [vmem:[#allocation5 + $0x628] sm:$0xff]
    %v300 = vld [vmem:[#allocation5 + $0x630] sm:$0xff]
    %v301 = vld [vmem:[#allocation5 + $0x638] sm:$0xff]
    %v302 = vld [vmem:[#allocation5 + $0x640] sm:$0xff]
    %v303 = vld [vmem:[#allocation5 + $0x648] sm:$0xff]
    %v304 = vld [vmem:[#allocation5 + $0x650] sm:$0xff]
    %v305 = vld [vmem:[#allocation5 + $0x658] sm:$0xff]
    %v306 = vld [vmem:[#allocation5 + $0x660] sm:$0xff]
    %v307 = vld [vmem:[#allocation5 + $0x668] sm:$0xff]
    %v308 = vld [vmem:[#allocation5 + $0x670] sm:$0xff]
    %v309 = vld [vmem:[#allocation5 + $0x678] sm:$0xff]
    %v310 = vld [vmem:[#allocation5 + $0x680] sm:$0xff]
    %v311 = vld [vmem:[#allocation5 + $0x688] sm:$0xff]
    %v312 = vld [vmem:[#allocation5 + $0x690] sm:$0xff]
    %v313 = vld [vmem:[#allocation5 + $0x698] sm:$0xff]
    %v314 = vld [vmem:[#allocation5 + $0x6a0] sm:$0xff]
    %v315 = vld [vmem:[#allocation5 + $0x6a8] sm:$0xff]
    %v316 = vld [vmem:[#allocation5 + $0x6b0] sm:$0xff]
    %v317 = vld [vmem:[#allocation5 + $0x6b8] sm:$0xff]
    %v318 = vld [vmem:[#allocation5 + $0x6c0] sm:$0xff]
    %v319 = vld [vmem:[#allocation5 + $0x6c8] sm:$0xff]
    %v320 = vld [vmem:[#allocation5 + $0x6d0] sm:$0xff]
    %v321 = vld [vmem:[#allocation5 + $0x6d8] sm:$0xff]
    %v322 = vld [vmem:[#allocation5 + $0x6e0] sm:$0xff]
    %v323 = vld [vmem:[#allocation5 + $0x6e8] sm:$0xff]
    %v324 = vld [vmem:[#allocation5 + $0x6f0] sm:$0xff]
    %v325 = vld [vmem:[#allocation5 + $0x6f8] sm:$0xff]
    %v326 = vld [vmem:[#allocation5 + $0x700] sm:$0xff]
    %v327 = vld [vmem:[#allocation5 + $0x708] sm:$0xff]
    %v328 = vld [vmem:[#allocation5 + $0x710] sm:$0xff]
    %v329 = vld [vmem:[#allocation5 + $0x718] sm:$0xff]
    %v330 = vld [vmem:[#allocation5 + $0x720] sm:$0xff]
    %v331 = vld [vmem:[#allocation5 + $0x728] sm:$0xff]
    %v332 = vld [vmem:[#allocation5 + $0x730] sm:$0xff]
    %v333 = vld [vmem:[#allocation5 + $0x738] sm:$0xff]
    %v334 = vld [vmem:[#allocation5 + $0x740] sm:$0xff]
    %v335 = vld [vmem:[#allocation5 + $0x748] sm:$0xff]
    %v336 = vld [vmem:[#allocation5 + $0x750] sm:$0xff]
    %v337 = vld [vmem:[#allocation5 + $0x758] sm:$0xff]
    %v338 = vld [vmem:[#allocation5 + $0x760] sm:$0xff]
    %v339 = vld [vmem:[#allocation5 + $0x768] sm:$0xff]
    %v340 = vld [vmem:[#allocation5 + $0x770] sm:$0xff]
    %v341 = vld [vmem:[#allocation5 + $0x778] sm:$0xff]
    %v342 = vld [vmem:[#allocation5 + $0x780] sm:$0xff]
    %v343 = vld [vmem:[#allocation5 + $0x788] sm:$0xff]
    %v344 = vld [vmem:[#allocation5 + $0x790] sm:$0xff]
    %v345 = vld [vmem:[#allocation5 + $0x798] sm:$0xff]
    %v346 = vld [vmem:[#allocation5 + $0x7a0] sm:$0xff]
    %v347 = vld [vmem:[#allocation5 + $0x7a8] sm:$0xff]
    %v348 = vld [vmem:[#allocation5 + $0x7b0] sm:$0xff]
    %v349 = vld [vmem:[#allocation5 + $0x7b8] sm:$0xff]
    %v350 = vld [vmem:[#allocation5 + $0x7c0] sm:$0xff]
    %v351 = vld [vmem:[#allocation5 + $0x7c8] sm:$0xff]
    %v352 = vld [vmem:[#allocation5 + $0x7d0] sm:$0xff]
    %v353 = vld [vmem:[#allocation5 + $0x7d8] sm:$0xff]
    %v354 = vld [vmem:[#allocation5 + $0x7e0] sm:$0xff]
    %v355 = vld [vmem:[#allocation5 + $0x7e8] sm:$0xff]
    %v356 = vld [vmem:[#allocation5 + $0x7f0] sm:$0xff]
    %v357 = vld [vmem:[#allocation5 + $0x7f8] sm:$0xff]
    %v358 = vld [vmem:[#allocation7] sm:$0xf]
    %v360 = vlaneseq
    %v361 = vshrl.u32 %v360, 7
    %v362 = vsub.s32 0, %v361
    %v363 = vrot.slane %v358, %v362
    %v364 = vlaneseq
    %v365 = vshrl.u32 %v364, 7
    %v366 = vsub.s32 1, %v365
    %v367 = vrot.slane %v358, %v366
    %v368 = vlaneseq
    %v369 = vshrl.u32 %v368, 7
    %v370 = vsub.s32 2, %v369
    %v371 = vrot.slane %v358, %v370
    %v372 = vlaneseq
    %v373 = vshrl.u32 %v372, 7
    %v374 = vsub.s32 3, %v373
    %v375 = vrot.slane %v358, %v374
    %v636 = vunpack.c.l.b16 %v102
    %v637 = vunpack.c.h.b16 %v102
    %v638 = vunpack.c.l.b16 %v103
    %v639 = vunpack.c.h.b16 %v103
    %v640 = vunpack.c.l.b16 %v104
    %v641 = vunpack.c.h.b16 %v104
    %v642 = vunpack.c.l.b16 %v105
    %v643 = vunpack.c.h.b16 %v105
    %v644 = vunpack.c.l.b16 %v106
    %v645 = vunpack.c.h.b16 %v106
    %v646 = vunpack.c.l.b16 %v107
    %v647 = vunpack.c.h.b16 %v107
    %v648 = vunpack.c.l.b16 %v108
    %v649 = vunpack.c.h.b16 %v108
    %v650 = vunpack.c.l.b16 %v109
    %v651 = vunpack.c.h.b16 %v109
    %v652 = vunpack.c.l.b16 %v110
    %v653 = vunpack.c.h.b16 %v110
    %v654 = vunpack.c.l.b16 %v111
    %v655 = vunpack.c.h.b16 %v111
    %v656 = vunpack.c.l.b16 %v112
    %v657 = vunpack.c.h.b16 %v112
    %v658 = vunpack.c.l.b16 %v113
    %v659 = vunpack.c.h.b16 %v113
    %v660 = vunpack.c.l.b16 %v114
    %v661 = vunpack.c.h.b16 %v114
    %v662 = vunpack.c.l.b16 %v115
    %v663 = vunpack.c.h.b16 %v115
    %v664 = vunpack.c.l.b16 %v116
    %v665 = vunpack.c.h.b16 %v116
    %v666 = vunpack.c.l.b16 %v117
    %v667 = vunpack.c.h.b16 %v117
    %v668 = vunpack.c.l.b16 %v118
    %v669 = vunpack.c.h.b16 %v118
    %v670 = vunpack.c.l.b16 %v119
    %v671 = vunpack.c.h.b16 %v119
    %v672 = vunpack.c.l.b16 %v120
    %v673 = vunpack.c.h.b16 %v120
    %v674 = vunpack.c.l.b16 %v121
    %v675 = vunpack.c.h.b16 %v121
    %v676 = vunpack.c.l.b16 %v122
    %v677 = vunpack.c.h.b16 %v122
    %v678 = vunpack.c.l.b16 %v123
    %v679 = vunpack.c.h.b16 %v123
    %v680 = vunpack.c.l.b16 %v124
    %v681 = vunpack.c.h.b16 %v124
    %v682 = vunpack.c.l.b16 %v125
    %v683 = vunpack.c.h.b16 %v125
    %v684 = vunpack.c.l.b16 %v126
    %v685 = vunpack.c.h.b16 %v126
    %v686 = vunpack.c.l.b16 %v127
    %v687 = vunpack.c.h.b16 %v127
    %v688 = vunpack.c.l.b16 %v128
    %v689 = vunpack.c.h.b16 %v128
    %v690 = vunpack.c.l.b16 %v129
    %v691 = vunpack.c.h.b16 %v129
    %v692 = vunpack.c.l.b16 %v130
    %v693 = vunpack.c.h.b16 %v130
    %v694 = vunpack.c.l.b16 %v131
    %v695 = vunpack.c.h.b16 %v131
    %v696 = vunpack.c.l.b16 %v132
    %v697 = vunpack.c.h.b16 %v132
    %v698 = vunpack.c.l.b16 %v133
    %v699 = vunpack.c.h.b16 %v133
    %v700 = vunpack.c.l.b16 %v134
    %v701 = vunpack.c.h.b16 %v134
    %v702 = vunpack.c.l.b16 %v135
    %v703 = vunpack.c.h.b16 %v135
    %v704 = vunpack.c.l.b16 %v136
    %v705 = vunpack.c.h.b16 %v136
    %v706 = vunpack.c.l.b16 %v137
    %v707 = vunpack.c.h.b16 %v137
    %v708 = vunpack.c.l.b16 %v138
    %v709 = vunpack.c.h.b16 %v138
    %v710 = vunpack.c.l.b16 %v139
    %v711 = vunpack.c.h.b16 %v139
    %v712 = vunpack.c.l.b16 %v140
    %v713 = vunpack.c.h.b16 %v140
    %v714 = vunpack.c.l.b16 %v141
    %v715 = vunpack.c.h.b16 %v141
    %v716 = vunpack.c.l.b16 %v142
    %v717 = vunpack.c.h.b16 %v142
    %v718 = vunpack.c.l.b16 %v143
    %v719 = vunpack.c.h.b16 %v143
    %v720 = vunpack.c.l.b16 %v144
    %v721 = vunpack.c.h.b16 %v144
    %v722 = vunpack.c.l.b16 %v145
    %v723 = vunpack.c.h.b16 %v145
    %v724 = vunpack.c.l.b16 %v146
    %v725 = vunpack.c.h.b16 %v146
    %v726 = vunpack.c.l.b16 %v147
    %v727 = vunpack.c.h.b16 %v147
    %v728 = vunpack.c.l.b16 %v148
    %v729 = vunpack.c.h.b16 %v148
    %v730 = vunpack.c.l.b16 %v149
    %v731 = vunpack.c.h.b16 %v149
    %v732 = vunpack.c.l.b16 %v150
    %v733 = vunpack.c.h.b16 %v150
    %v734 = vunpack.c.l.b16 %v151
    %v735 = vunpack.c.h.b16 %v151
    %v736 = vunpack.c.l.b16 %v152
    %v737 = vunpack.c.h.b16 %v152
    %v738 = vunpack.c.l.b16 %v153
    %v739 = vunpack.c.h.b16 %v153
    %v740 = vunpack.c.l.b16 %v154
    %v741 = vunpack.c.h.b16 %v154
    %v742 = vunpack.c.l.b16 %v155
    %v743 = vunpack.c.h.b16 %v155
    %v744 = vunpack.c.l.b16 %v156
    %v745 = vunpack.c.h.b16 %v156
    %v746 = vunpack.c.l.b16 %v157
    %v747 = vunpack.c.h.b16 %v157
    %v748 = vunpack.c.l.b16 %v158
    %v749 = vunpack.c.h.b16 %v158
    %v750 = vunpack.c.l.b16 %v159
    %v751 = vunpack.c.h.b16 %v159
    %v752 = vunpack.c.l.b16 %v160
    %v753 = vunpack.c.h.b16 %v160
    %v754 = vunpack.c.l.b16 %v161
    %v755 = vunpack.c.h.b16 %v161
    %v756 = vunpack.c.l.b16 %v162
    %v757 = vunpack.c.h.b16 %v162
    %v758 = vunpack.c.l.b16 %v163
    %v759 = vunpack.c.h.b16 %v163
    %v760 = vunpack.c.l.b16 %v164
    %v761 = vunpack.c.h.b16 %v164
    %v762 = vunpack.c.l.b16 %v165
    %v763 = vunpack.c.h.b16 %v165
    %v764 = vunpack.c.l.b16 %v166
    %v765 = vunpack.c.h.b16 %v166
    %v766 = vunpack.c.l.b16 %v167
    %v767 = vunpack.c.h.b16 %v167
    %v768 = vunpack.c.l.b16 %v168
    %v769 = vunpack.c.h.b16 %v168
    %v770 = vunpack.c.l.b16 %v169
    %v771 = vunpack.c.h.b16 %v169
    %v772 = vunpack.c.l.b16 %v170
    %v773 = vunpack.c.h.b16 %v170
    %v774 = vunpack.c.l.b16 %v171
    %v775 = vunpack.c.h.b16 %v171
    %v776 = vunpack.c.l.b16 %v172
    %v777 = vunpack.c.h.b16 %v172
    %v778 = vunpack.c.l.b16 %v173
    %v779 = vunpack.c.h.b16 %v173
    %v780 = vunpack.c.l.b16 %v174
    %v781 = vunpack.c.h.b16 %v174
    %v782 = vunpack.c.l.b16 %v175
    %v783 = vunpack.c.h.b16 %v175
    %v784 = vunpack.c.l.b16 %v176
    %v785 = vunpack.c.h.b16 %v176
    %v786 = vunpack.c.l.b16 %v177
    %v787 = vunpack.c.h.b16 %v177
    %v788 = vunpack.c.l.b16 %v178
    %v789 = vunpack.c.h.b16 %v178
    %v790 = vunpack.c.l.b16 %v179
    %v791 = vunpack.c.h.b16 %v179
    %v792 = vunpack.c.l.b16 %v180
    %v793 = vunpack.c.h.b16 %v180
    %v794 = vunpack.c.l.b16 %v181
    %v795 = vunpack.c.h.b16 %v181
    %v796 = vunpack.c.l.b16 %v182
    %v797 = vunpack.c.h.b16 %v182
    %v798 = vunpack.c.l.b16 %v183
    %v799 = vunpack.c.h.b16 %v183
    %v800 = vunpack.c.l.b16 %v184
    %v801 = vunpack.c.h.b16 %v184
    %v802 = vunpack.c.l.b16 %v185
    %v803 = vunpack.c.h.b16 %v185
    %v804 = vunpack.c.l.b16 %v186
    %v805 = vunpack.c.h.b16 %v186
    %v806 = vunpack.c.l.b16 %v187
    %v807 = vunpack.c.h.b16 %v187
    %v808 = vunpack.c.l.b16 %v188
    %v809 = vunpack.c.h.b16 %v188
    %v810 = vunpack.c.l.b16 %v189
    %v811 = vunpack.c.h.b16 %v189
    %v812 = vunpack.c.l.b16 %v190
    %v813 = vunpack.c.h.b16 %v190
    %v814 = vunpack.c.l.b16 %v191
    %v815 = vunpack.c.h.b16 %v191
    %v816 = vunpack.c.l.b16 %v192
    %v817 = vunpack.c.h.b16 %v192
    %v818 = vunpack.c.l.b16 %v193
    %v819 = vunpack.c.h.b16 %v193
    %v820 = vunpack.c.l.b16 %v194
    %v821 = vunpack.c.h.b16 %v194
    %v822 = vunpack.c.l.b16 %v195
    %v823 = vunpack.c.h.b16 %v195
    %v824 = vunpack.c.l.b16 %v196
    %v825 = vunpack.c.h.b16 %v196
    %v826 = vunpack.c.l.b16 %v197
    %v827 = vunpack.c.h.b16 %v197
    %v828 = vunpack.c.l.b16 %v198
    %v829 = vunpack.c.h.b16 %v198
    %v830 = vunpack.c.l.b16 %v199
    %v831 = vunpack.c.h.b16 %v199
    %v832 = vunpack.c.l.b16 %v200
    %v833 = vunpack.c.h.b16 %v200
    %v834 = vunpack.c.l.b16 %v201
    %v835 = vunpack.c.h.b16 %v201
    %v836 = vunpack.c.l.b16 %v202
    %v837 = vunpack.c.h.b16 %v202
    %v838 = vunpack.c.l.b16 %v203
    %v839 = vunpack.c.h.b16 %v203
    %v840 = vunpack.c.l.b16 %v204
    %v841 = vunpack.c.h.b16 %v204
    %v842 = vunpack.c.l.b16 %v205
    %v843 = vunpack.c.h.b16 %v205
    %v844 = vunpack.c.l.b16 %v206
    %v845 = vunpack.c.h.b16 %v206
    %v846 = vunpack.c.l.b16 %v207
    %v847 = vunpack.c.h.b16 %v207
    %v848 = vunpack.c.l.b16 %v208
    %v849 = vunpack.c.h.b16 %v208
    %v850 = vunpack.c.l.b16 %v209
    %v851 = vunpack.c.h.b16 %v209
    %v852 = vunpack.c.l.b16 %v210
    %v853 = vunpack.c.h.b16 %v210
    %v854 = vunpack.c.l.b16 %v211
    %v855 = vunpack.c.h.b16 %v211
    %v856 = vunpack.c.l.b16 %v212
    %v857 = vunpack.c.h.b16 %v212
    %v858 = vunpack.c.l.b16 %v213
    %v859 = vunpack.c.h.b16 %v213
    %v860 = vunpack.c.l.b16 %v214
    %v861 = vunpack.c.h.b16 %v214
    %v862 = vunpack.c.l.b16 %v215
    %v863 = vunpack.c.h.b16 %v215
    %v864 = vunpack.c.l.b16 %v216
    %v865 = vunpack.c.h.b16 %v216
    %v866 = vunpack.c.l.b16 %v217
    %v867 = vunpack.c.h.b16 %v217
    %v868 = vunpack.c.l.b16 %v218
    %v869 = vunpack.c.h.b16 %v218
    %v870 = vunpack.c.l.b16 %v219
    %v871 = vunpack.c.h.b16 %v219
    %v872 = vunpack.c.l.b16 %v220
    %v873 = vunpack.c.h.b16 %v220
    %v874 = vunpack.c.l.b16 %v221
    %v875 = vunpack.c.h.b16 %v221
    %v876 = vunpack.c.l.b16 %v222
    %v877 = vunpack.c.h.b16 %v222
    %v878 = vunpack.c.l.b16 %v223
    %v879 = vunpack.c.h.b16 %v223
    %v880 = vunpack.c.l.b16 %v224
    %v881 = vunpack.c.h.b16 %v224
    %v882 = vunpack.c.l.b16 %v225
    %v883 = vunpack.c.h.b16 %v225
    %v884 = vunpack.c.l.b16 %v226
    %v885 = vunpack.c.h.b16 %v226
    %v886 = vunpack.c.l.b16 %v227
    %v887 = vunpack.c.h.b16 %v227
    %v888 = vunpack.c.l.b16 %v228
    %v889 = vunpack.c.h.b16 %v228
    %v890 = vunpack.c.l.b16 %v229
    %v891 = vunpack.c.h.b16 %v229
    %v892 = vunpack.c.l.b16 %v230
    %v893 = vunpack.c.h.b16 %v230
    %v894 = vunpack.c.l.b16 %v231
    %v895 = vunpack.c.h.b16 %v231
    %v896 = vunpack.c.l.b16 %v232
    %v897 = vunpack.c.h.b16 %v232
    %v898 = vunpack.c.l.b16 %v233
    %v899 = vunpack.c.h.b16 %v233
    %v900 = vunpack.c.l.b16 %v234
    %v901 = vunpack.c.h.b16 %v234
    %v902 = vunpack.c.l.b16 %v235
    %v903 = vunpack.c.h.b16 %v235
    %v904 = vunpack.c.l.b16 %v236
    %v905 = vunpack.c.h.b16 %v236
    %v906 = vunpack.c.l.b16 %v237
    %v907 = vunpack.c.h.b16 %v237
    %v908 = vunpack.c.l.b16 %v238
    %v909 = vunpack.c.h.b16 %v238
    %v910 = vunpack.c.l.b16 %v239
    %v911 = vunpack.c.h.b16 %v239
    %v912 = vunpack.c.l.b16 %v240
    %v913 = vunpack.c.h.b16 %v240
    %v914 = vunpack.c.l.b16 %v241
    %v915 = vunpack.c.h.b16 %v241
    %v916 = vunpack.c.l.b16 %v242
    %v917 = vunpack.c.h.b16 %v242
    %v918 = vunpack.c.l.b16 %v243
    %v919 = vunpack.c.h.b16 %v243
    %v920 = vunpack.c.l.b16 %v244
    %v921 = vunpack.c.h.b16 %v244
    %v922 = vunpack.c.l.b16 %v245
    %v923 = vunpack.c.h.b16 %v245
    %v924 = vunpack.c.l.b16 %v246
    %v925 = vunpack.c.h.b16 %v246
    %v926 = vunpack.c.l.b16 %v247
    %v927 = vunpack.c.h.b16 %v247
    %v928 = vunpack.c.l.b16 %v248
    %v929 = vunpack.c.h.b16 %v248
    %v930 = vunpack.c.l.b16 %v249
    %v931 = vunpack.c.h.b16 %v249
    %v932 = vunpack.c.l.b16 %v250
    %v933 = vunpack.c.h.b16 %v250
    %v934 = vunpack.c.l.b16 %v251
    %v935 = vunpack.c.h.b16 %v251
    %v936 = vunpack.c.l.b16 %v252
    %v937 = vunpack.c.h.b16 %v252
    %v938 = vunpack.c.l.b16 %v253
    %v939 = vunpack.c.h.b16 %v253
    %v940 = vunpack.c.l.b16 %v254
    %v941 = vunpack.c.h.b16 %v254
    %v942 = vunpack.c.l.b16 %v255
    %v943 = vunpack.c.h.b16 %v255
    %v944 = vunpack.c.l.b16 %v256
    %v945 = vunpack.c.h.b16 %v256
    %v946 = vunpack.c.l.b16 %v257
    %v947 = vunpack.c.h.b16 %v257
    %v948 = vunpack.c.l.b16 %v258
    %v949 = vunpack.c.h.b16 %v258
    %v950 = vunpack.c.l.b16 %v259
    %v951 = vunpack.c.h.b16 %v259
    %v952 = vunpack.c.l.b16 %v260
    %v953 = vunpack.c.h.b16 %v260
    %v954 = vunpack.c.l.b16 %v261
    %v955 = vunpack.c.h.b16 %v261
    %v956 = vunpack.c.l.b16 %v262
    %v957 = vunpack.c.h.b16 %v262
    %v958 = vunpack.c.l.b16 %v263
    %v959 = vunpack.c.h.b16 %v263
    %v960 = vunpack.c.l.b16 %v264
    %v961 = vunpack.c.h.b16 %v264
    %v962 = vunpack.c.l.b16 %v265
    %v963 = vunpack.c.h.b16 %v265
    %v964 = vunpack.c.l.b16 %v266
    %v965 = vunpack.c.h.b16 %v266
    %v966 = vunpack.c.l.b16 %v267
    %v967 = vunpack.c.h.b16 %v267
    %v968 = vunpack.c.l.b16 %v268
    %v969 = vunpack.c.h.b16 %v268
    %v970 = vunpack.c.l.b16 %v269
    %v971 = vunpack.c.h.b16 %v269
    %v972 = vunpack.c.l.b16 %v270
    %v973 = vunpack.c.h.b16 %v270
    %v974 = vunpack.c.l.b16 %v271
    %v975 = vunpack.c.h.b16 %v271
    %v976 = vunpack.c.l.b16 %v272
    %v977 = vunpack.c.h.b16 %v272
    %v978 = vunpack.c.l.b16 %v273
    %v979 = vunpack.c.h.b16 %v273
    %v980 = vunpack.c.l.b16 %v274
    %v981 = vunpack.c.h.b16 %v274
    %v982 = vunpack.c.l.b16 %v275
    %v983 = vunpack.c.h.b16 %v275
    %v984 = vunpack.c.l.b16 %v276
    %v985 = vunpack.c.h.b16 %v276
    %v986 = vunpack.c.l.b16 %v277
    %v987 = vunpack.c.h.b16 %v277
    %v988 = vunpack.c.l.b16 %v278
    %v989 = vunpack.c.h.b16 %v278
    %v990 = vunpack.c.l.b16 %v279
    %v991 = vunpack.c.h.b16 %v279
    %v992 = vunpack.c.l.b16 %v280
    %v993 = vunpack.c.h.b16 %v280
    %v994 = vunpack.c.l.b16 %v281
    %v995 = vunpack.c.h.b16 %v281
    %v996 = vunpack.c.l.b16 %v282
    %v997 = vunpack.c.h.b16 %v282
    %v998 = vunpack.c.l.b16 %v283
    %v999 = vunpack.c.h.b16 %v283
    %v1000 = vunpack.c.l.b16 %v284
    %v1001 = vunpack.c.h.b16 %v284
    %v1002 = vunpack.c.l.b16 %v285
    %v1003 = vunpack.c.h.b16 %v285
    %v1004 = vunpack.c.l.b16 %v286
    %v1005 = vunpack.c.h.b16 %v286
    %v1006 = vunpack.c.l.b16 %v287
    %v1007 = vunpack.c.h.b16 %v287
    %v1008 = vunpack.c.l.b16 %v288
    %v1009 = vunpack.c.h.b16 %v288
    %v1010 = vunpack.c.l.b16 %v289
    %v1011 = vunpack.c.h.b16 %v289
    %v1012 = vunpack.c.l.b16 %v290
    %v1013 = vunpack.c.h.b16 %v290
    %v1014 = vunpack.c.l.b16 %v291
    %v1015 = vunpack.c.h.b16 %v291
    %v1016 = vunpack.c.l.b16 %v292
    %v1017 = vunpack.c.h.b16 %v292
    %v1018 = vunpack.c.l.b16 %v293
    %v1019 = vunpack.c.h.b16 %v293
    %v1020 = vunpack.c.l.b16 %v294
    %v1021 = vunpack.c.h.b16 %v294
    %v1022 = vunpack.c.l.b16 %v295
    %v1023 = vunpack.c.h.b16 %v295
    %v1024 = vunpack.c.l.b16 %v296
    %v1025 = vunpack.c.h.b16 %v296
    %v1026 = vunpack.c.l.b16 %v297
    %v1027 = vunpack.c.h.b16 %v297
    %v1028 = vunpack.c.l.b16 %v298
    %v1029 = vunpack.c.h.b16 %v298
    %v1030 = vunpack.c.l.b16 %v299
    %v1031 = vunpack.c.h.b16 %v299
    %v1032 = vunpack.c.l.b16 %v300
    %v1033 = vunpack.c.h.b16 %v300
    %v1034 = vunpack.c.l.b16 %v301
    %v1035 = vunpack.c.h.b16 %v301
    %v1036 = vunpack.c.l.b16 %v302
    %v1037 = vunpack.c.h.b16 %v302
    %v1038 = vunpack.c.l.b16 %v303
    %v1039 = vunpack.c.h.b16 %v303
    %v1040 = vunpack.c.l.b16 %v304
    %v1041 = vunpack.c.h.b16 %v304
    %v1042 = vunpack.c.l.b16 %v305
    %v1043 = vunpack.c.h.b16 %v305
    %v1044 = vunpack.c.l.b16 %v306
    %v1045 = vunpack.c.h.b16 %v306
    %v1046 = vunpack.c.l.b16 %v307
    %v1047 = vunpack.c.h.b16 %v307
    %v1048 = vunpack.c.l.b16 %v308
    %v1049 = vunpack.c.h.b16 %v308
    %v1050 = vunpack.c.l.b16 %v309
    %v1051 = vunpack.c.h.b16 %v309
    %v1052 = vunpack.c.l.b16 %v310
    %v1053 = vunpack.c.h.b16 %v310
    %v1054 = vunpack.c.l.b16 %v311
    %v1055 = vunpack.c.h.b16 %v311
    %v1056 = vunpack.c.l.b16 %v312
    %v1057 = vunpack.c.h.b16 %v312
    %v1058 = vunpack.c.l.b16 %v313
    %v1059 = vunpack.c.h.b16 %v313
    %v1060 = vunpack.c.l.b16 %v314
    %v1061 = vunpack.c.h.b16 %v314
    %v1062 = vunpack.c.l.b16 %v315
    %v1063 = vunpack.c.h.b16 %v315
    %v1064 = vunpack.c.l.b16 %v316
    %v1065 = vunpack.c.h.b16 %v316
    %v1066 = vunpack.c.l.b16 %v317
    %v1067 = vunpack.c.h.b16 %v317
    %v1068 = vunpack.c.l.b16 %v318
    %v1069 = vunpack.c.h.b16 %v318
    %v1070 = vunpack.c.l.b16 %v319
    %v1071 = vunpack.c.h.b16 %v319
    %v1072 = vunpack.c.l.b16 %v320
    %v1073 = vunpack.c.h.b16 %v320
    %v1074 = vunpack.c.l.b16 %v321
    %v1075 = vunpack.c.h.b16 %v321
    %v1076 = vunpack.c.l.b16 %v322
    %v1077 = vunpack.c.h.b16 %v322
    %v1078 = vunpack.c.l.b16 %v323
    %v1079 = vunpack.c.h.b16 %v323
    %v1080 = vunpack.c.l.b16 %v324
    %v1081 = vunpack.c.h.b16 %v324
    %v1082 = vunpack.c.l.b16 %v325
    %v1083 = vunpack.c.h.b16 %v325
    %v1084 = vunpack.c.l.b16 %v326
    %v1085 = vunpack.c.h.b16 %v326
    %v1086 = vunpack.c.l.b16 %v327
    %v1087 = vunpack.c.h.b16 %v327
    %v1088 = vunpack.c.l.b16 %v328
    %v1089 = vunpack.c.h.b16 %v328
    %v1090 = vunpack.c.l.b16 %v329
    %v1091 = vunpack.c.h.b16 %v329
    %v1092 = vunpack.c.l.b16 %v330
    %v1093 = vunpack.c.h.b16 %v330
    %v1094 = vunpack.c.l.b16 %v331
    %v1095 = vunpack.c.h.b16 %v331
    %v1096 = vunpack.c.l.b16 %v332
    %v1097 = vunpack.c.h.b16 %v332
    %v1098 = vunpack.c.l.b16 %v333
    %v1099 = vunpack.c.h.b16 %v333
    %v1100 = vunpack.c.l.b16 %v334
    %v1101 = vunpack.c.h.b16 %v334
    %v1102 = vunpack.c.l.b16 %v335
    %v1103 = vunpack.c.h.b16 %v335
    %v1104 = vunpack.c.l.b16 %v336
    %v1105 = vunpack.c.h.b16 %v336
    %v1106 = vunpack.c.l.b16 %v337
    %v1107 = vunpack.c.h.b16 %v337
    %v1108 = vunpack.c.l.b16 %v338
    %v1109 = vunpack.c.h.b16 %v338
    %v1110 = vunpack.c.l.b16 %v339
    %v1111 = vunpack.c.h.b16 %v339
    %v1112 = vunpack.c.l.b16 %v340
    %v1113 = vunpack.c.h.b16 %v340
    %v1114 = vunpack.c.l.b16 %v341
    %v1115 = vunpack.c.h.b16 %v341
    %v1116 = vunpack.c.l.b16 %v342
    %v1117 = vunpack.c.h.b16 %v342
    %v1118 = vunpack.c.l.b16 %v343
    %v1119 = vunpack.c.h.b16 %v343
    %v1120 = vunpack.c.l.b16 %v344
    %v1121 = vunpack.c.h.b16 %v344
    %v1122 = vunpack.c.l.b16 %v345
    %v1123 = vunpack.c.h.b16 %v345
    %v1124 = vunpack.c.l.b16 %v346
    %v1125 = vunpack.c.h.b16 %v346
    %v1126 = vunpack.c.l.b16 %v347
    %v1127 = vunpack.c.h.b16 %v347
    %v1128 = vunpack.c.l.b16 %v348
    %v1129 = vunpack.c.h.b16 %v348
    %v1130 = vunpack.c.l.b16 %v349
    %v1131 = vunpack.c.h.b16 %v349
    %v1132 = vunpack.c.l.b16 %v350
    %v1133 = vunpack.c.h.b16 %v350
    %v1134 = vunpack.c.l.b16 %v351
    %v1135 = vunpack.c.h.b16 %v351
    %v1136 = vunpack.c.l.b16 %v352
    %v1137 = vunpack.c.h.b16 %v352
    %v1138 = vunpack.c.l.b16 %v353
    %v1139 = vunpack.c.h.b16 %v353
    %v1140 = vunpack.c.l.b16 %v354
    %v1141 = vunpack.c.h.b16 %v354
    %v1142 = vunpack.c.l.b16 %v355
    %v1143 = vunpack.c.h.b16 %v355
    %v1144 = vunpack.c.l.b16 %v356
    %v1145 = vunpack.c.h.b16 %v356
    %v1146 = vunpack.c.l.b16 %v357
    %v1147 = vunpack.c.h.b16 %v357
    %v1148 = vpack.c.b16 %v640, %v636
    %v1149 = vpack.c.b16 %v641, %v637
    %v1150 = vpack.c.b16 %v642, %v638
    %v1151 = vpack.c.b16 %v643, %v639
    %v1152 = vpack.c.b16 %v648, %v644
    %v1153 = vpack.c.b16 %v649, %v645
    %v1154 = vpack.c.b16 %v650, %v646
    %v1155 = vpack.c.b16 %v651, %v647
    %v1156 = vpack.c.b16 %v656, %v652
    %v1157 = vpack.c.b16 %v657, %v653
    %v1158 = vpack.c.b16 %v658, %v654
    %v1159 = vpack.c.b16 %v659, %v655
    %v1160 = vpack.c.b16 %v664, %v660
    %v1161 = vpack.c.b16 %v665, %v661
    %v1162 = vpack.c.b16 %v666, %v662
    %v1163 = vpack.c.b16 %v667, %v663
    %v1164 = vpack.c.b16 %v672, %v668
    %v1165 = vpack.c.b16 %v673, %v669
    %v1166 = vpack.c.b16 %v674, %v670
    %v1167 = vpack.c.b16 %v675, %v671
    %v1168 = vpack.c.b16 %v680, %v676
    %v1169 = vpack.c.b16 %v681, %v677
    %v1170 = vpack.c.b16 %v682, %v678
    %v1171 = vpack.c.b16 %v683, %v679
    %v1172 = vpack.c.b16 %v688, %v684
    %v1173 = vpack.c.b16 %v689, %v685
    %v1174 = vpack.c.b16 %v690, %v686
    %v1175 = vpack.c.b16 %v691, %v687
    %v1176 = vpack.c.b16 %v696, %v692
    %v1177 = vpack.c.b16 %v697, %v693
    %v1178 = vpack.c.b16 %v698, %v694
    %v1179 = vpack.c.b16 %v699, %v695
    %v1180 = vpack.c.b16 %v704, %v700
    %v1181 = vpack.c.b16 %v705, %v701
    %v1182 = vpack.c.b16 %v706, %v702
    %v1183 = vpack.c.b16 %v707, %v703
    %v1184 = vpack.c.b16 %v712, %v708
    %v1185 = vpack.c.b16 %v713, %v709
    %v1186 = vpack.c.b16 %v714, %v710
    %v1187 = vpack.c.b16 %v715, %v711
    %v1188 = vpack.c.b16 %v720, %v716
    %v1189 = vpack.c.b16 %v721, %v717
    %v1190 = vpack.c.b16 %v722, %v718
    %v1191 = vpack.c.b16 %v723, %v719
    %v1192 = vpack.c.b16 %v728, %v724
    %v1193 = vpack.c.b16 %v729, %v725
    %v1194 = vpack.c.b16 %v730, %v726
    %v1195 = vpack.c.b16 %v731, %v727
    %v1196 = vpack.c.b16 %v736, %v732
    %v1197 = vpack.c.b16 %v737, %v733
    %v1198 = vpack.c.b16 %v738, %v734
    %v1199 = vpack.c.b16 %v739, %v735
    %v1200 = vpack.c.b16 %v744, %v740
    %v1201 = vpack.c.b16 %v745, %v741
    %v1202 = vpack.c.b16 %v746, %v742
    %v1203 = vpack.c.b16 %v747, %v743
    %v1204 = vpack.c.b16 %v752, %v748
    %v1205 = vpack.c.b16 %v753, %v749
    %v1206 = vpack.c.b16 %v754, %v750
    %v1207 = vpack.c.b16 %v755, %v751
    %v1208 = vpack.c.b16 %v760, %v756
    %v1209 = vpack.c.b16 %v761, %v757
    %v1210 = vpack.c.b16 %v762, %v758
    %v1211 = vpack.c.b16 %v763, %v759
    %v1212 = vpack.c.b16 %v768, %v764
    %v1213 = vpack.c.b16 %v769, %v765
    %v1214 = vpack.c.b16 %v770, %v766
    %v1215 = vpack.c.b16 %v771, %v767
    %v1216 = vpack.c.b16 %v776, %v772
    %v1217 = vpack.c.b16 %v777, %v773
    %v1218 = vpack.c.b16 %v778, %v774
    %v1219 = vpack.c.b16 %v779, %v775
    %v1220 = vpack.c.b16 %v784, %v780
    %v1221 = vpack.c.b16 %v785, %v781
    %v1222 = vpack.c.b16 %v786, %v782
    %v1223 = vpack.c.b16 %v787, %v783
    %v1224 = vpack.c.b16 %v792, %v788
    %v1225 = vpack.c.b16 %v793, %v789
    %v1226 = vpack.c.b16 %v794, %v790
    %v1227 = vpack.c.b16 %v795, %v791
    %v1228 = vpack.c.b16 %v800, %v796
    %v1229 = vpack.c.b16 %v801, %v797
    %v1230 = vpack.c.b16 %v802, %v798
    %v1231 = vpack.c.b16 %v803, %v799
    %v1232 = vpack.c.b16 %v808, %v804
    %v1233 = vpack.c.b16 %v809, %v805
    %v1234 = vpack.c.b16 %v810, %v806
    %v1235 = vpack.c.b16 %v811, %v807
    %v1236 = vpack.c.b16 %v816, %v812
    %v1237 = vpack.c.b16 %v817, %v813
    %v1238 = vpack.c.b16 %v818, %v814
    %v1239 = vpack.c.b16 %v819, %v815
    %v1240 = vpack.c.b16 %v824, %v820
    %v1241 = vpack.c.b16 %v825, %v821
    %v1242 = vpack.c.b16 %v826, %v822
    %v1243 = vpack.c.b16 %v827, %v823
    %v1244 = vpack.c.b16 %v832, %v828
    %v1245 = vpack.c.b16 %v833, %v829
    %v1246 = vpack.c.b16 %v834, %v830
    %v1247 = vpack.c.b16 %v835, %v831
    %v1248 = vpack.c.b16 %v840, %v836
    %v1249 = vpack.c.b16 %v841, %v837
    %v1250 = vpack.c.b16 %v842, %v838
    %v1251 = vpack.c.b16 %v843, %v839
    %v1252 = vpack.c.b16 %v848, %v844
    %v1253 = vpack.c.b16 %v849, %v845
    %v1254 = vpack.c.b16 %v850, %v846
    %v1255 = vpack.c.b16 %v851, %v847
    %v1256 = vpack.c.b16 %v856, %v852
    %v1257 = vpack.c.b16 %v857, %v853
    %v1258 = vpack.c.b16 %v858, %v854
    %v1259 = vpack.c.b16 %v859, %v855
    %v1260 = vpack.c.b16 %v864, %v860
    %v1261 = vpack.c.b16 %v865, %v861
    %v1262 = vpack.c.b16 %v866, %v862
    %v1263 = vpack.c.b16 %v867, %v863
    %v1264 = vpack.c.b16 %v872, %v868
    %v1265 = vpack.c.b16 %v873, %v869
    %v1266 = vpack.c.b16 %v874, %v870
    %v1267 = vpack.c.b16 %v875, %v871
    %v1268 = vpack.c.b16 %v880, %v876
    %v1269 = vpack.c.b16 %v881, %v877
    %v1270 = vpack.c.b16 %v882, %v878
    %v1271 = vpack.c.b16 %v883, %v879
    %v1272 = vpack.c.b16 %v888, %v884
    %v1273 = vpack.c.b16 %v889, %v885
    %v1274 = vpack.c.b16 %v890, %v886
    %v1275 = vpack.c.b16 %v891, %v887
    %v1276 = vpack.c.b16 %v896, %v892
    %v1277 = vpack.c.b16 %v897, %v893
    %v1278 = vpack.c.b16 %v898, %v894
    %v1279 = vpack.c.b16 %v899, %v895
    %v1280 = vpack.c.b16 %v904, %v900
    %v1281 = vpack.c.b16 %v905, %v901
    %v1282 = vpack.c.b16 %v906, %v902
    %v1283 = vpack.c.b16 %v907, %v903
    %v1284 = vpack.c.b16 %v912, %v908
    %v1285 = vpack.c.b16 %v913, %v909
    %v1286 = vpack.c.b16 %v914, %v910
    %v1287 = vpack.c.b16 %v915, %v911
    %v1288 = vpack.c.b16 %v920, %v916
    %v1289 = vpack.c.b16 %v921, %v917
    %v1290 = vpack.c.b16 %v922, %v918
    %v1291 = vpack.c.b16 %v923, %v919
    %v1292 = vpack.c.b16 %v928, %v924
    %v1293 = vpack.c.b16 %v929, %v925
    %v1294 = vpack.c.b16 %v930, %v926
    %v1295 = vpack.c.b16 %v931, %v927
    %v1296 = vpack.c.b16 %v936, %v932
    %v1297 = vpack.c.b16 %v937, %v933
    %v1298 = vpack.c.b16 %v938, %v934
    %v1299 = vpack.c.b16 %v939, %v935
    %v1300 = vpack.c.b16 %v944, %v940
    %v1301 = vpack.c.b16 %v945, %v941
    %v1302 = vpack.c.b16 %v946, %v942
    %v1303 = vpack.c.b16 %v947, %v943
    %v1304 = vpack.c.b16 %v952, %v948
    %v1305 = vpack.c.b16 %v953, %v949
    %v1306 = vpack.c.b16 %v954, %v950
    %v1307 = vpack.c.b16 %v955, %v951
    %v1308 = vpack.c.b16 %v960, %v956
    %v1309 = vpack.c.b16 %v961, %v957
    %v1310 = vpack.c.b16 %v962, %v958
    %v1311 = vpack.c.b16 %v963, %v959
    %v1312 = vpack.c.b16 %v968, %v964
    %v1313 = vpack.c.b16 %v969, %v965
    %v1314 = vpack.c.b16 %v970, %v966
    %v1315 = vpack.c.b16 %v971, %v967
    %v1316 = vpack.c.b16 %v976, %v972
    %v1317 = vpack.c.b16 %v977, %v973
    %v1318 = vpack.c.b16 %v978, %v974
    %v1319 = vpack.c.b16 %v979, %v975
    %v1320 = vpack.c.b16 %v984, %v980
    %v1321 = vpack.c.b16 %v985, %v981
    %v1322 = vpack.c.b16 %v986, %v982
    %v1323 = vpack.c.b16 %v987, %v983
    %v1324 = vpack.c.b16 %v992, %v988
    %v1325 = vpack.c.b16 %v993, %v989
    %v1326 = vpack.c.b16 %v994, %v990
    %v1327 = vpack.c.b16 %v995, %v991
    %v1328 = vpack.c.b16 %v1000, %v996
    %v1329 = vpack.c.b16 %v1001, %v997
    %v1330 = vpack.c.b16 %v1002, %v998
    %v1331 = vpack.c.b16 %v1003, %v999
    %v1332 = vpack.c.b16 %v1008, %v1004
    %v1333 = vpack.c.b16 %v1009, %v1005
    %v1334 = vpack.c.b16 %v1010, %v1006
    %v1335 = vpack.c.b16 %v1011, %v1007
    %v1336 = vpack.c.b16 %v1016, %v1012
    %v1337 = vpack.c.b16 %v1017, %v1013
    %v1338 = vpack.c.b16 %v1018, %v1014
    %v1339 = vpack.c.b16 %v1019, %v1015
    %v1340 = vpack.c.b16 %v1024, %v1020
    %v1341 = vpack.c.b16 %v1025, %v1021
    %v1342 = vpack.c.b16 %v1026, %v1022
    %v1343 = vpack.c.b16 %v1027, %v1023
    %v1344 = vpack.c.b16 %v1032, %v1028
    %v1345 = vpack.c.b16 %v1033, %v1029
    %v1346 = vpack.c.b16 %v1034, %v1030
    %v1347 = vpack.c.b16 %v1035, %v1031
    %v1348 = vpack.c.b16 %v1040, %v1036
    %v1349 = vpack.c.b16 %v1041, %v1037
    %v1350 = vpack.c.b16 %v1042, %v1038
    %v1351 = vpack.c.b16 %v1043, %v1039
    %v1352 = vpack.c.b16 %v1048, %v1044
    %v1353 = vpack.c.b16 %v1049, %v1045
    %v1354 = vpack.c.b16 %v1050, %v1046
    %v1355 = vpack.c.b16 %v1051, %v1047
    %v1356 = vpack.c.b16 %v1056, %v1052
    %v1357 = vpack.c.b16 %v1057, %v1053
    %v1358 = vpack.c.b16 %v1058, %v1054
    %v1359 = vpack.c.b16 %v1059, %v1055
    %v1360 = vpack.c.b16 %v1064, %v1060
    %v1361 = vpack.c.b16 %v1065, %v1061
    %v1362 = vpack.c.b16 %v1066, %v1062
    %v1363 = vpack.c.b16 %v1067, %v1063
    %v1364 = vpack.c.b16 %v1072, %v1068
    %v1365 = vpack.c.b16 %v1073, %v1069
    %v1366 = vpack.c.b16 %v1074, %v1070
    %v1367 = vpack.c.b16 %v1075, %v1071
    %v1368 = vpack.c.b16 %v1080, %v1076
    %v1369 = vpack.c.b16 %v1081, %v1077
    %v1370 = vpack.c.b16 %v1082, %v1078
    %v1371 = vpack.c.b16 %v1083, %v1079
    %v1372 = vpack.c.b16 %v1088, %v1084
    %v1373 = vpack.c.b16 %v1089, %v1085
    %v1374 = vpack.c.b16 %v1090, %v1086
    %v1375 = vpack.c.b16 %v1091, %v1087
    %v1376 = vpack.c.b16 %v1096, %v1092
    %v1377 = vpack.c.b16 %v1097, %v1093
    %v1378 = vpack.c.b16 %v1098, %v1094
    %v1379 = vpack.c.b16 %v1099, %v1095
    %v1380 = vpack.c.b16 %v1104, %v1100
    %v1381 = vpack.c.b16 %v1105, %v1101
    %v1382 = vpack.c.b16 %v1106, %v1102
    %v1383 = vpack.c.b16 %v1107, %v1103
    %v1384 = vpack.c.b16 %v1112, %v1108
    %v1385 = vpack.c.b16 %v1113, %v1109
    %v1386 = vpack.c.b16 %v1114, %v1110
    %v1387 = vpack.c.b16 %v1115, %v1111
    %v1388 = vpack.c.b16 %v1120, %v1116
    %v1389 = vpack.c.b16 %v1121, %v1117
    %v1390 = vpack.c.b16 %v1122, %v1118
    %v1391 = vpack.c.b16 %v1123, %v1119
    %v1392 = vpack.c.b16 %v1128, %v1124
    %v1393 = vpack.c.b16 %v1129, %v1125
    %v1394 = vpack.c.b16 %v1130, %v1126
    %v1395 = vpack.c.b16 %v1131, %v1127
    %v1396 = vpack.c.b16 %v1136, %v1132
    %v1397 = vpack.c.b16 %v1137, %v1133
    %v1398 = vpack.c.b16 %v1138, %v1134
    %v1399 = vpack.c.b16 %v1139, %v1135
    %v1400 = vpack.c.b16 %v1144, %v1140
    %v1401 = vpack.c.b16 %v1145, %v1141
    %v1402 = vpack.c.b16 %v1146, %v1142
    %v1403 = vpack.c.b16 %v1147, %v1143
    %1660 = vmatprep.subr.bf16.mxu0 %v1149
    %1661 = vmatpush1.bf16.msra.mxu0 %v1148
    %1662 = vmatprep.subr.bf16.mxu0 %v1153
    %1663 = vmatpush1.bf16.msra.mxu0 %v1152
    %1664 = vmatprep.subr.bf16.mxu0 %v1157
    %1665 = vmatpush1.bf16.msra.mxu0 %v1156
    %1666 = vmatprep.subr.bf16.mxu0 %v1161
    %1667 = vmatpush1.bf16.msra.mxu0 %v1160
    %1668 = vmatprep.subr.bf16.mxu0 %v1165
    %1669 = vmatpush1.bf16.msra.mxu0 %v1164
    %1670 = vmatprep.subr.bf16.mxu0 %v1169
    %1671 = vmatpush1.bf16.msra.mxu0 %v1168
    %1672 = vmatprep.subr.bf16.mxu0 %v1173
    %1673 = vmatpush1.bf16.msra.mxu0 %v1172
    %1674 = vmatprep.subr.bf16.mxu0 %v1177
    %1675 = vmatpush1.bf16.msra.mxu0 %v1176
    %1676 = vmatprep.subr.bf16.mxu0 %v1181
    %1677 = vmatpush1.bf16.msra.mxu0 %v1180
    %1678 = vmatprep.subr.bf16.mxu0 %v1185
    %1679 = vmatpush1.bf16.msra.mxu0 %v1184
    %1680 = vmatprep.subr.bf16.mxu0 %v1189
    %1681 = vmatpush1.bf16.msra.mxu0 %v1188
    %1682 = vmatprep.subr.bf16.mxu0 %v1193
    %1683 = vmatpush1.bf16.msra.mxu0 %v1192
    %1684 = vmatprep.subr.bf16.mxu0 %v1197
    %1685 = vmatpush1.bf16.msra.mxu0 %v1196
    %1686 = vmatprep.subr.bf16.mxu0 %v1201
    %1687 = vmatpush1.bf16.msra.mxu0 %v1200
    %1688 = vmatprep.subr.bf16.mxu0 %v1205
    %1689 = vmatpush1.bf16.msra.mxu0 %v1204
    %1690 = vmatprep.subr.bf16.mxu0 %v1209
    %1691 = vmatpush1.bf16.msra.mxu0 %v1208
    %1692 = vmatprep.mubr.bf16.mxu0 %v95
    %1693 = vmatmul.mubr.bf16.gmra.mrb[0].mxu0 %v94
    %v1694 = vpop.f32.mrb[0].mxu0
    %v1695 = vadd.f32 %v363, %v1694
    %v1696 = vpop.f32.mrb[0].mxu0
    %v1697 = vadd.f32 %v367, %v1696
    %v1698 = vpop.f32.mrb[0].mxu0
    %v1699 = vpop.f32.mrb[0].mxu0
    %1700 = vdwg.mxu0
    %1701 = vmatprep.subr.bf16.mxu0 %v1213
    %1702 = vmatpush1.bf16.msra.mxu0 %v1212
    %1703 = vmatprep.subr.bf16.mxu0 %v1217
    %1704 = vmatpush1.bf16.msra.mxu0 %v1216
    %1705 = vmatprep.subr.bf16.mxu0 %v1221
    %1706 = vmatpush1.bf16.msra.mxu0 %v1220
    %1707 = vmatprep.subr.bf16.mxu0 %v1225
    %1708 = vmatpush1.bf16.msra.mxu0 %v1224
    %1709 = vmatprep.subr.bf16.mxu0 %v1229
    %1710 = vmatpush1.bf16.msra.mxu0 %v1228
    %1711 = vmatprep.subr.bf16.mxu0 %v1233
    %1712 = vmatpush1.bf16.msra.mxu0 %v1232
    %1713 = vmatprep.subr.bf16.mxu0 %v1237
    %1714 = vmatpush1.bf16.msra.mxu0 %v1236
    %1715 = vmatprep.subr.bf16.mxu0 %v1241
    %1716 = vmatpush1.bf16.msra.mxu0 %v1240
    %1717 = vmatprep.subr.bf16.mxu0 %v1245
    %1718 = vmatpush1.bf16.msra.mxu0 %v1244
    %1719 = vmatprep.subr.bf16.mxu0 %v1249
    %1720 = vmatpush1.bf16.msra.mxu0 %v1248
    %1721 = vmatprep.subr.bf16.mxu0 %v1253
    %1722 = vmatpush1.bf16.msra.mxu0 %v1252
    %1723 = vmatprep.subr.bf16.mxu0 %v1257
    %1724 = vmatpush1.bf16.msra.mxu0 %v1256
    %1725 = vmatprep.subr.bf16.mxu0 %v1261
    %1726 = vmatpush1.bf16.msra.mxu0 %v1260
    %1727 = vmatprep.subr.bf16.mxu0 %v1265
    %1728 = vmatpush1.bf16.msra.mxu0 %v1264
    %1729 = vmatprep.subr.bf16.mxu0 %v1269
    %1730 = vmatpush1.bf16.msra.mxu0 %v1268
    %1731 = vmatprep.subr.bf16.mxu0 %v1273
    %1732 = vmatpush1.bf16.msra.mxu0 %v1272
    %1733 = vmatprep.mubr.bf16.mxu0 %v97
    %1734 = vmatmul.mubr.bf16.gmra.mrb[0].mxu0 %v96
    %v1735 = vpop.f32.mrb[0].mxu0
    %v1736 = vadd.f32 %v1695, %v1735
    %v1737 = vpop.f32.mrb[0].mxu0
    %v1738 = vadd.f32 %v1697, %v1737
    %v1739 = vpop.f32.mrb[0].mxu0
    %v1740 = vpop.f32.mrb[0].mxu0
    %1741 = vdwg.mxu0
    %1742 = vmatprep.subr.bf16.mxu0 %v1277
    %1743 = vmatpush1.bf16.msra.mxu0 %v1276
    %1744 = vmatprep.subr.bf16.mxu0 %v1281
    %1745 = vmatpush1.bf16.msra.mxu0 %v1280
    %1746 = vmatprep.subr.bf16.mxu0 %v1285
    %1747 = vmatpush1.bf16.msra.mxu0 %v1284
    %1748 = vmatprep.subr.bf16.mxu0 %v1289
    %1749 = vmatpush1.bf16.msra.mxu0 %v1288
    %1750 = vmatprep.subr.bf16.mxu0 %v1293
    %1751 = vmatpush1.bf16.msra.mxu0 %v1292
    %1752 = vmatprep.subr.bf16.mxu0 %v1297
    %1753 = vmatpush1.bf16.msra.mxu0 %v1296
    %1754 = vmatprep.subr.bf16.mxu0 %v1301
    %1755 = vmatpush1.bf16.msra.mxu0 %v1300
    %1756 = vmatprep.subr.bf16.mxu0 %v1305
    %1757 = vmatpush1.bf16.msra.mxu0 %v1304
    %1758 = vmatprep.subr.bf16.mxu0 %v1309
    %1759 = vmatpush1.bf16.msra.mxu0 %v1308
    %1760 = vmatprep.subr.bf16.mxu0 %v1313
    %1761 = vmatpush1.bf16.msra.mxu0 %v1312
    %1762 = vmatprep.subr.bf16.mxu0 %v1317
    %1763 = vmatpush1.bf16.msra.mxu0 %v1316
    %1764 = vmatprep.subr.bf16.mxu0 %v1321
    %1765 = vmatpush1.bf16.msra.mxu0 %v1320
    %1766 = vmatprep.subr.bf16.mxu0 %v1325
    %1767 = vmatpush1.bf16.msra.mxu0 %v1324
    %1768 = vmatprep.subr.bf16.mxu0 %v1329
    %1769 = vmatpush1.bf16.msra.mxu0 %v1328
    %1770 = vmatprep.subr.bf16.mxu0 %v1333
    %1771 = vmatpush1.bf16.msra.mxu0 %v1332
    %1772 = vmatprep.subr.bf16.mxu0 %v1337
    %1773 = vmatpush1.bf16.msra.mxu0 %v1336
    %1774 = vmatprep.mubr.bf16.mxu0 %v99
    %1775 = vmatmul.mubr.bf16.gmra.mrb[0].mxu0 %v98
    %v1776 = vpop.f32.mrb[0].mxu0
    %v1777 = vadd.f32 %v1736, %v1776
    %v1778 = vpop.f32.mrb[0].mxu0
    %v1779 = vadd.f32 %v1738, %v1778
    %v1780 = vpop.f32.mrb[0].mxu0
    %v1781 = vpop.f32.mrb[0].mxu0
    %1782 = vdwg.mxu0
    %1783 = vmatprep.subr.bf16.mxu0 %v1341
    %1784 = vmatpush1.bf16.msra.mxu0 %v1340
    %1785 = vmatprep.subr.bf16.mxu0 %v1345
    %1786 = vmatpush1.bf16.msra.mxu0 %v1344
    %1787 = vmatprep.subr.bf16.mxu0 %v1349
    %1788 = vmatpush1.bf16.msra.mxu0 %v1348
    %1789 = vmatprep.subr.bf16.mxu0 %v1353
    %1790 = vmatpush1.bf16.msra.mxu0 %v1352
    %1791 = vmatprep.subr.bf16.mxu0 %v1357
    %1792 = vmatpush1.bf16.msra.mxu0 %v1356
    %1793 = vmatprep.subr.bf16.mxu0 %v1361
    %1794 = vmatpush1.bf16.msra.mxu0 %v1360
    %1795 = vmatprep.subr.bf16.mxu0 %v1365
    %1796 = vmatpush1.bf16.msra.mxu0 %v1364
    %1797 = vmatprep.subr.bf16.mxu0 %v1369
    %1798 = vmatpush1.bf16.msra.mxu0 %v1368
    %1799 = vmatprep.subr.bf16.mxu0 %v1373
    %1800 = vmatpush1.bf16.msra.mxu0 %v1372
    %1801 = vmatprep.subr.bf16.mxu0 %v1377
    %1802 = vmatpush1.bf16.msra.mxu0 %v1376
    %1803 = vmatprep.subr.bf16.mxu0 %v1381
    %1804 = vmatpush1.bf16.msra.mxu0 %v1380
    %1805 = vmatprep.subr.bf16.mxu0 %v1385
    %1806 = vmatpush1.bf16.msra.mxu0 %v1384
    %1807 = vmatprep.subr.bf16.mxu0 %v1389
    %1808 = vmatpush1.bf16.msra.mxu0 %v1388
    %1809 = vmatprep.subr.bf16.mxu0 %v1393
    %1810 = vmatpush1.bf16.msra.mxu0 %v1392
    %1811 = vmatprep.subr.bf16.mxu0 %v1397
    %1812 = vmatpush1.bf16.msra.mxu0 %v1396
    %1813 = vmatprep.subr.bf16.mxu0 %v1401
    %1814 = vmatpush1.bf16.msra.mxu0 %v1400
    %1815 = vmatprep.mubr.bf16.mxu0 %v101
    %1816 = vmatmul.mubr.bf16.gmra.mrb[0].mxu0 %v100
    %v1817 = vpop.f32.mrb[0].mxu0
    %v1818 = vadd.f32 %v1777, %v1817
    %v1819 = vpop.f32.mrb[0].mxu0
    %v1820 = vadd.f32 %v1779, %v1819
    %v1821 = vpop.f32.mrb[0].mxu0
    %v1822 = vpop.f32.mrb[0].mxu0
    %1823 = vdwg.mxu0
    %1824 = vmatprep.subr.bf16.mxu0 %v1151
    %1825 = vmatpush1.bf16.msra.mxu0 %v1150
    %1826 = vmatprep.subr.bf16.mxu0 %v1155
    %1827 = vmatpush1.bf16.msra.mxu0 %v1154
    %1828 = vmatprep.subr.bf16.mxu0 %v1159
    %1829 = vmatpush1.bf16.msra.mxu0 %v1158
    %1830 = vmatprep.subr.bf16.mxu0 %v1163
    %1831 = vmatpush1.bf16.msra.mxu0 %v1162
    %1832 = vmatprep.subr.bf16.mxu0 %v1167
    %1833 = vmatpush1.bf16.msra.mxu0 %v1166
    %1834 = vmatprep.subr.bf16.mxu0 %v1171
    %1835 = vmatpush1.bf16.msra.mxu0 %v1170
    %1836 = vmatprep.subr.bf16.mxu0 %v1175
    %1837 = vmatpush1.bf16.msra.mxu0 %v1174
    %1838 = vmatprep.subr.bf16.mxu0 %v1179
    %1839 = vmatpush1.bf16.msra.mxu0 %v1178
    %1840 = vmatprep.subr.bf16.mxu0 %v1183
    %1841 = vmatpush1.bf16.msra.mxu0 %v1182
    %1842 = vmatprep.subr.bf16.mxu0 %v1187
    %1843 = vmatpush1.bf16.msra.mxu0 %v1186
    %1844 = vmatprep.subr.bf16.mxu0 %v1191
    %1845 = vmatpush1.bf16.msra.mxu0 %v1190
    %1846 = vmatprep.subr.bf16.mxu0 %v1195
    %1847 = vmatpush1.bf16.msra.mxu0 %v1194
    %1848 = vmatprep.subr.bf16.mxu0 %v1199
    %1849 = vmatpush1.bf16.msra.mxu0 %v1198
    %1850 = vmatprep.subr.bf16.mxu0 %v1203
    %1851 = vmatpush1.bf16.msra.mxu0 %v1202
    %1852 = vmatprep.subr.bf16.mxu0 %v1207
    %1853 = vmatpush1.bf16.msra.mxu0 %v1206
    %1854 = vmatprep.subr.bf16.mxu0 %v1211
    %1855 = vmatpush1.bf16.msra.mxu0 %v1210
    %1856 = vmatprep.mubr.bf16.mxu0 %v95
    %1857 = vmatmul.mubr.bf16.gmra.mrb[0].mxu0 %v94
    %v1858 = vpop.f32.mrb[0].mxu0
    %v1859 = vadd.f32 %v371, %v1858
    %v1860 = vpop.f32.mrb[0].mxu0
    %v1861 = vadd.f32 %v375, %v1860
    %v1862 = vpop.f32.mrb[0].mxu0
    %v1863 = vpop.f32.mrb[0].mxu0
    %1864 = vdwg.mxu0
    %1865 = vmatprep.subr.bf16.mxu0 %v1215
    %1866 = vmatpush1.bf16.msra.mxu0 %v1214
    %1867 = vmatprep.subr.bf16.mxu0 %v1219
    %1868 = vmatpush1.bf16.msra.mxu0 %v1218
    %1869 = vmatprep.subr.bf16.mxu0 %v1223
    %1870 = vmatpush1.bf16.msra.mxu0 %v1222
    %1871 = vmatprep.subr.bf16.mxu0 %v1227
    %1872 = vmatpush1.bf16.msra.mxu0 %v1226
    %1873 = vmatprep.subr.bf16.mxu0 %v1231
    %1874 = vmatpush1.bf16.msra.mxu0 %v1230
    %1875 = vmatprep.subr.bf16.mxu0 %v1235
    %1876 = vmatpush1.bf16.msra.mxu0 %v1234
    %1877 = vmatprep.subr.bf16.mxu0 %v1239
    %1878 = vmatpush1.bf16.msra.mxu0 %v1238
    %1879 = vmatprep.subr.bf16.mxu0 %v1243
    %1880 = vmatpush1.bf16.msra.mxu0 %v1242
    %1881 = vmatprep.subr.bf16.mxu0 %v1247
    %1882 = vmatpush1.bf16.msra.mxu0 %v1246
    %1883 = vmatprep.subr.bf16.mxu0 %v1251
    %1884 = vmatpush1.bf16.msra.mxu0 %v1250
    %1885 = vmatprep.subr.bf16.mxu0 %v1255
    %1886 = vmatpush1.bf16.msra.mxu0 %v1254
    %1887 = vmatprep.subr.bf16.mxu0 %v1259
    %1888 = vmatpush1.bf16.msra.mxu0 %v1258
    %1889 = vmatprep.subr.bf16.mxu0 %v1263
    %1890 = vmatpush1.bf16.msra.mxu0 %v1262
    %1891 = vmatprep.subr.bf16.mxu0 %v1267
    %1892 = vmatpush1.bf16.msra.mxu0 %v1266
    %1893 = vmatprep.subr.bf16.mxu0 %v1271
    %1894 = vmatpush1.bf16.msra.mxu0 %v1270
    %1895 = vmatprep.subr.bf16.mxu0 %v1275
    %1896 = vmatpush1.bf16.msra.mxu0 %v1274
    %1897 = vmatprep.mubr.bf16.mxu0 %v97
    %1898 = vmatmul.mubr.bf16.gmra.mrb[0].mxu0 %v96
    %v1899 = vpop.f32.mrb[0].mxu0
    %v1900 = vadd.f32 %v1859, %v1899
    %v1901 = vpop.f32.mrb[0].mxu0
    %v1902 = vadd.f32 %v1861, %v1901
    %v1903 = vpop.f32.mrb[0].mxu0
    %v1904 = vpop.f32.mrb[0].mxu0
    %1905 = vdwg.mxu0
    %1906 = vmatprep.subr.bf16.mxu0 %v1279
    %1907 = vmatpush1.bf16.msra.mxu0 %v1278
    %1908 = vmatprep.subr.bf16.mxu0 %v1283
    %1909 = vmatpush1.bf16.msra.mxu0 %v1282
    %1910 = vmatprep.subr.bf16.mxu0 %v1287
    %1911 = vmatpush1.bf16.msra.mxu0 %v1286
    %1912 = vmatprep.subr.bf16.mxu0 %v1291
    %1913 = vmatpush1.bf16.msra.mxu0 %v1290
    %1914 = vmatprep.subr.bf16.mxu0 %v1295
    %1915 = vmatpush1.bf16.msra.mxu0 %v1294
    %1916 = vmatprep.subr.bf16.mxu0 %v1299
    %1917 = vmatpush1.bf16.msra.mxu0 %v1298
    %1918 = vmatprep.subr.bf16.mxu0 %v1303
    %1919 = vmatpush1.bf16.msra.mxu0 %v1302
    %1920 = vmatprep.subr.bf16.mxu0 %v1307
    %1921 = vmatpush1.bf16.msra.mxu0 %v1306
    %1922 = vmatprep.subr.bf16.mxu0 %v1311
    %1923 = vmatpush1.bf16.msra.mxu0 %v1310
    %1924 = vmatprep.subr.bf16.mxu0 %v1315
    %1925 = vmatpush1.bf16.msra.mxu0 %v1314
    %1926 = vmatprep.subr.bf16.mxu0 %v1319
    %1927 = vmatpush1.bf16.msra.mxu0 %v1318
    %1928 = vmatprep.subr.bf16.mxu0 %v1323
    %1929 = vmatpush1.bf16.msra.mxu0 %v1322
    %1930 = vmatprep.subr.bf16.mxu0 %v1327
    %1931 = vmatpush1.bf16.msra.mxu0 %v1326
    %1932 = vmatprep.subr.bf16.mxu0 %v1331
    %1933 = vmatpush1.bf16.msra.mxu0 %v1330
    %1934 = vmatprep.subr.bf16.mxu0 %v1335
    %1935 = vmatpush1.bf16.msra.mxu0 %v1334
    %1936 = vmatprep.subr.bf16.mxu0 %v1339
    %1937 = vmatpush1.bf16.msra.mxu0 %v1338
    %1938 = vmatprep.mubr.bf16.mxu0 %v99
    %1939 = vmatmul.mubr.bf16.gmra.mrb[0].mxu0 %v98
    %v1940 = vpop.f32.mrb[0].mxu0
    %v1941 = vadd.f32 %v1900, %v1940
    %v1942 = vpop.f32.mrb[0].mxu0
    %v1943 = vadd.f32 %v1902, %v1942
    %v1944 = vpop.f32.mrb[0].mxu0
    %v1945 = vpop.f32.mrb[0].mxu0
    %1946 = vdwg.mxu0
    %1947 = vmatprep.subr.bf16.mxu0 %v1343
    %1948 = vmatpush1.bf16.msra.mxu0 %v1342
    %1949 = vmatprep.subr.bf16.mxu0 %v1347
    %1950 = vmatpush1.bf16.msra.mxu0 %v1346
    %1951 = vmatprep.subr.bf16.mxu0 %v1351
    %1952 = vmatpush1.bf16.msra.mxu0 %v1350
    %1953 = vmatprep.subr.bf16.mxu0 %v1355
    %1954 = vmatpush1.bf16.msra.mxu0 %v1354
    %1955 = vmatprep.subr.bf16.mxu0 %v1359
    %1956 = vmatpush1.bf16.msra.mxu0 %v1358
    %1957 = vmatprep.subr.bf16.mxu0 %v1363
    %1958 = vmatpush1.bf16.msra.mxu0 %v1362
    %1959 = vmatprep.subr.bf16.mxu0 %v1367
    %1960 = vmatpush1.bf16.msra.mxu0 %v1366
    %1961 = vmatprep.subr.bf16.mxu0 %v1371
    %1962 = vmatpush1.bf16.msra.mxu0 %v1370
    %1963 = vmatprep.subr.bf16.mxu0 %v1375
    %1964 = vmatpush1.bf16.msra.mxu0 %v1374
    %1965 = vmatprep.subr.bf16.mxu0 %v1379
    %1966 = vmatpush1.bf16.msra.mxu0 %v1378
    %1967 = vmatprep.subr.bf16.mxu0 %v1383
    %1968 = vmatpush1.bf16.msra.mxu0 %v1382
    %1969 = vmatprep.subr.bf16.mxu0 %v1387
    %1970 = vmatpush1.bf16.msra.mxu0 %v1386
    %1971 = vmatprep.subr.bf16.mxu0 %v1391
    %1972 = vmatpush1.bf16.msra.mxu0 %v1390
    %1973 = vmatprep.subr.bf16.mxu0 %v1395
    %1974 = vmatpush1.bf16.msra.mxu0 %v1394
    %1975 = vmatprep.subr.bf16.mxu0 %v1399
    %1976 = vmatpush1.bf16.msra.mxu0 %v1398
    %1977 = vmatprep.subr.bf16.mxu0 %v1403
    %1978 = vmatpush1.bf16.msra.mxu0 %v1402
    %1979 = vmatprep.mubr.bf16.mxu0 %v101
    %1980 = vmatmul.mubr.bf16.gmra.mrb[0].mxu0 %v100
    %v1981 = vpop.f32.mrb[0].mxu0
    %v1982 = vadd.f32 %v1941, %v1981
    %v1983 = vpop.f32.mrb[0].mxu0
    %v1984 = vadd.f32 %v1943, %v1983
    %v1985 = vpop.f32.mrb[0].mxu0
    %v1986 = vpop.f32.mrb[0].mxu0
    %1987 = vdwg.mxu0
    %v1988 = vmax.f32 %v1818, 0.0
    %v1989 = vmax.f32 %v1820, 0.0
    %v1990 = vmax.f32 %v1982, 0.0
    %v1991 = vmax.f32 %v1984, 0.0
    %1992 = vst [vmem:[#allocation11] sm:$0xff] %v1988
    %1993 = vst [vmem:[#allocation11 + $0x8] sm:$0xff] %v1989
    %1994 = vst [vmem:[#allocation11 + $0x10] sm:$0xff] %v1990
    %1995 = vst [vmem:[#allocation11 + $0x18] sm:$0xff] %v1991
    %v1996 = vpack.c.bf16 %v1988, %v1988
    %v1997 = vpack.c.bf16 %v1989, %v1989
    %v1998 = vpack.c.bf16 %v1990, %v1990
    %v1999 = vpack.c.bf16 %v1991, %v1991
    %v2000 = vld [vmem:[#allocation8] sm:$0xff]
    %v2001 = vld [vmem:[#allocation8 + $0x8] sm:$0xff]
    %v2002 = vld [vmem:[#allocation8 + $0x10] sm:$0xff]
    %v2003 = vld [vmem:[#allocation8 + $0x18] sm:$0xff]
    %v2004 = vld [vmem:[#allocation8 + $0x20] sm:$0xff]
    %v2005 = vld [vmem:[#allocation8 + $0x28] sm:$0xff]
    %v2006 = vld [vmem:[#allocation8 + $0x30] sm:$0xff]
    %v2007 = vld [vmem:[#allocation8 + $0x38] sm:$0xff]
    %v2008 = vld [vmem:[#allocation8 + $0x40] sm:$0xff]
    %v2009 = vld [vmem:[#allocation8 + $0x48] sm:$0xff]
    %v2010 = vld [vmem:[#allocation8 + $0x50] sm:$0xff]
    %v2011 = vld [vmem:[#allocation8 + $0x58] sm:$0xff]
    %v2012 = vld [vmem:[#allocation8 + $0x60] sm:$0xff]
    %v2013 = vld [vmem:[#allocation8 + $0x68] sm:$0xff]
    %v2014 = vld [vmem:[#allocation8 + $0x70] sm:$0xff]
    %v2015 = vld [vmem:[#allocation8 + $0x78] sm:$0xff]
    %v2016 = vld [vmem:[#allocation8 + $0x80] sm:$0xff]
    %v2017 = vld [vmem:[#allocation8 + $0x88] sm:$0xff]
    %v2018 = vld [vmem:[#allocation8 + $0x90] sm:$0xff]
    %v2019 = vld [vmem:[#allocation8 + $0x98] sm:$0xff]
    %v2020 = vld [vmem:[#allocation8 + $0xa0] sm:$0xff]
    %v2021 = vld [vmem:[#allocation8 + $0xa8] sm:$0xff]
    %v2022 = vld [vmem:[#allocation8 + $0xb0] sm:$0xff]
    %v2023 = vld [vmem:[#allocation8 + $0xb8] sm:$0xff]
    %v2024 = vld [vmem:[#allocation8 + $0xc0] sm:$0xff]
    %v2025 = vld [vmem:[#allocation8 + $0xc8] sm:$0xff]
    %v2026 = vld [vmem:[#allocation8 + $0xd0] sm:$0xff]
    %v2027 = vld [vmem:[#allocation8 + $0xd8] sm:$0xff]
    %v2028 = vld [vmem:[#allocation8 + $0xe0] sm:$0xff]
    %v2029 = vld [vmem:[#allocation8 + $0xe8] sm:$0xff]
    %v2030 = vld [vmem:[#allocation8 + $0xf0] sm:$0xff]
    %v2031 = vld [vmem:[#allocation8 + $0xf8] sm:$0xff]
    %v2032 = vld [vmem:[#allocation8 + $0x100] sm:$0xff]
    %v2033 = vld [vmem:[#allocation8 + $0x108] sm:$0xff]
    %v2034 = vld [vmem:[#allocation8 + $0x110] sm:$0xff]
    %v2035 = vld [vmem:[#allocation8 + $0x118] sm:$0xff]
    %v2036 = vld [vmem:[#allocation8 + $0x120] sm:$0xff]
    %v2037 = vld [vmem:[#allocation8 + $0x128] sm:$0xff]
    %v2038 = vld [vmem:[#allocation8 + $0x130] sm:$0xff]
    %v2039 = vld [vmem:[#allocation8 + $0x138] sm:$0xff]
    %v2040 = vld [vmem:[#allocation8 + $0x140] sm:$0xff]
    %v2041 = vld [vmem:[#allocation8 + $0x148] sm:$0xff]
    %v2042 = vld [vmem:[#allocation8 + $0x150] sm:$0xff]
    %v2043 = vld [vmem:[#allocation8 + $0x158] sm:$0xff]
    %v2044 = vld [vmem:[#allocation8 + $0x160] sm:$0xff]
    %v2045 = vld [vmem:[#allocation8 + $0x168] sm:$0xff]
    %v2046 = vld [vmem:[#allocation8 + $0x170] sm:$0xff]
    %v2047 = vld [vmem:[#allocation8 + $0x178] sm:$0xff]
    %v2048 = vld [vmem:[#allocation8 + $0x180] sm:$0xff]
    %v2049 = vld [vmem:[#allocation8 + $0x188] sm:$0xff]
    %v2050 = vld [vmem:[#allocation8 + $0x190] sm:$0xff]
    %v2051 = vld [vmem:[#allocation8 + $0x198] sm:$0xff]
    %v2052 = vld [vmem:[#allocation8 + $0x1a0] sm:$0xff]
    %v2053 = vld [vmem:[#allocation8 + $0x1a8] sm:$0xff]
    %v2054 = vld [vmem:[#allocation8 + $0x1b0] sm:$0xff]
    %v2055 = vld [vmem:[#allocation8 + $0x1b8] sm:$0xff]
    %v2056 = vld [vmem:[#allocation8 + $0x1c0] sm:$0xff]
    %v2057 = vld [vmem:[#allocation8 + $0x1c8] sm:$0xff]
    %v2058 = vld [vmem:[#allocation8 + $0x1d0] sm:$0xff]
    %v2059 = vld [vmem:[#allocation8 + $0x1d8] sm:$0xff]
    %v2060 = vld [vmem:[#allocation8 + $0x1e0] sm:$0xff]
    %v2061 = vld [vmem:[#allocation8 + $0x1e8] sm:$0xff]
    %v2062 = vld [vmem:[#allocation8 + $0x1f0] sm:$0xff]
    %v2063 = vld [vmem:[#allocation8 + $0x1f8] sm:$0xff]
    %v2064 = vld [vmem:[#allocation8 + $0x200] sm:$0xff]
    %v2065 = vld [vmem:[#allocation8 + $0x208] sm:$0xff]
    %v2066 = vld [vmem:[#allocation8 + $0x210] sm:$0xff]
    %v2067 = vld [vmem:[#allocation8 + $0x218] sm:$0xff]
    %v2068 = vld [vmem:[#allocation8 + $0x220] sm:$0xff]
    %v2069 = vld [vmem:[#allocation8 + $0x228] sm:$0xff]
    %v2070 = vld [vmem:[#allocation8 + $0x230] sm:$0xff]
    %v2071 = vld [vmem:[#allocation8 + $0x238] sm:$0xff]
    %v2072 = vld [vmem:[#allocation8 + $0x240] sm:$0xff]
    %v2073 = vld [vmem:[#allocation8 + $0x248] sm:$0xff]
    %v2074 = vld [vmem:[#allocation8 + $0x250] sm:$0xff]
    %v2075 = vld [vmem:[#allocation8 + $0x258] sm:$0xff]
    %v2076 = vld [vmem:[#allocation8 + $0x260] sm:$0xff]
    %v2077 = vld [vmem:[#allocation8 + $0x268] sm:$0xff]
    %v2078 = vld [vmem:[#allocation8 + $0x270] sm:$0xff]
    %v2079 = vld [vmem:[#allocation8 + $0x278] sm:$0xff]
    %v2080 = vld [vmem:[#allocation8 + $0x280] sm:$0xff]
    %v2081 = vld [vmem:[#allocation8 + $0x288] sm:$0xff]
    %v2082 = vld [vmem:[#allocation8 + $0x290] sm:$0xff]
    %v2083 = vld [vmem:[#allocation8 + $0x298] sm:$0xff]
    %v2084 = vld [vmem:[#allocation8 + $0x2a0] sm:$0xff]
    %v2085 = vld [vmem:[#allocation8 + $0x2a8] sm:$0xff]
    %v2086 = vld [vmem:[#allocation8 + $0x2b0] sm:$0xff]
    %v2087 = vld [vmem:[#allocation8 + $0x2b8] sm:$0xff]
    %v2088 = vld [vmem:[#allocation8 + $0x2c0] sm:$0xff]
    %v2089 = vld [vmem:[#allocation8 + $0x2c8] sm:$0xff]
    %v2090 = vld [vmem:[#allocation8 + $0x2d0] sm:$0xff]
    %v2091 = vld [vmem:[#allocation8 + $0x2d8] sm:$0xff]
    %v2092 = vld [vmem:[#allocation8 + $0x2e0] sm:$0xff]
    %v2093 = vld [vmem:[#allocation8 + $0x2e8] sm:$0xff]
    %v2094 = vld [vmem:[#allocation8 + $0x2f0] sm:$0xff]
    %v2095 = vld [vmem:[#allocation8 + $0x2f8] sm:$0xff]
    %v2096 = vld [vmem:[#allocation8 + $0x300] sm:$0xff]
    %v2097 = vld [vmem:[#allocation8 + $0x308] sm:$0xff]
    %v2098 = vld [vmem:[#allocation8 + $0x310] sm:$0xff]
    %v2099 = vld [vmem:[#allocation8 + $0x318] sm:$0xff]
    %v2100 = vld [vmem:[#allocation8 + $0x320] sm:$0xff]
    %v2101 = vld [vmem:[#allocation8 + $0x328] sm:$0xff]
    %v2102 = vld [vmem:[#allocation8 + $0x330] sm:$0xff]
    %v2103 = vld [vmem:[#allocation8 + $0x338] sm:$0xff]
    %v2104 = vld [vmem:[#allocation8 + $0x340] sm:$0xff]
    %v2105 = vld [vmem:[#allocation8 + $0x348] sm:$0xff]
    %v2106 = vld [vmem:[#allocation8 + $0x350] sm:$0xff]
    %v2107 = vld [vmem:[#allocation8 + $0x358] sm:$0xff]
    %v2108 = vld [vmem:[#allocation8 + $0x360] sm:$0xff]
    %v2109 = vld [vmem:[#allocation8 + $0x368] sm:$0xff]
    %v2110 = vld [vmem:[#allocation8 + $0x370] sm:$0xff]
    %v2111 = vld [vmem:[#allocation8 + $0x378] sm:$0xff]
    %v2112 = vld [vmem:[#allocation8 + $0x380] sm:$0xff]
    %v2113 = vld [vmem:[#allocation8 + $0x388] sm:$0xff]
    %v2114 = vld [vmem:[#allocation8 + $0x390] sm:$0xff]
    %v2115 = vld [vmem:[#allocation8 + $0x398] sm:$0xff]
    %v2116 = vld [vmem:[#allocation8 + $0x3a0] sm:$0xff]
    %v2117 = vld [vmem:[#allocation8 + $0x3a8] sm:$0xff]
    %v2118 = vld [vmem:[#allocation8 + $0x3b0] sm:$0xff]
    %v2119 = vld [vmem:[#allocation8 + $0x3b8] sm:$0xff]
    %v2120 = vld [vmem:[#allocation8 + $0x3c0] sm:$0xff]
    %v2121 = vld [vmem:[#allocation8 + $0x3c8] sm:$0xff]
    %v2122 = vld [vmem:[#allocation8 + $0x3d0] sm:$0xff]
    %v2123 = vld [vmem:[#allocation8 + $0x3d8] sm:$0xff]
    %v2124 = vld [vmem:[#allocation8 + $0x3e0] sm:$0xff]
    %v2125 = vld [vmem:[#allocation8 + $0x3e8] sm:$0xff]
    %v2126 = vld [vmem:[#allocation8 + $0x3f0] sm:$0xff]
    %v2127 = vld [vmem:[#allocation8 + $0x3f8] sm:$0xff]
    %v2128 = vld [vmem:[#allocation8 + $0x400] sm:$0xff]
    %v2129 = vld [vmem:[#allocation8 + $0x408] sm:$0xff]
    %v2130 = vld [vmem:[#allocation8 + $0x410] sm:$0xff]
    %v2131 = vld [vmem:[#allocation8 + $0x418] sm:$0xff]
    %v2132 = vld [vmem:[#allocation8 + $0x420] sm:$0xff]
    %v2133 = vld [vmem:[#allocation8 + $0x428] sm:$0xff]
    %v2134 = vld [vmem:[#allocation8 + $0x430] sm:$0xff]
    %v2135 = vld [vmem:[#allocation8 + $0x438] sm:$0xff]
    %v2136 = vld [vmem:[#allocation8 + $0x440] sm:$0xff]
    %v2137 = vld [vmem:[#allocation8 + $0x448] sm:$0xff]
    %v2138 = vld [vmem:[#allocation8 + $0x450] sm:$0xff]
    %v2139 = vld [vmem:[#allocation8 + $0x458] sm:$0xff]
    %v2140 = vld [vmem:[#allocation8 + $0x460] sm:$0xff]
    %v2141 = vld [vmem:[#allocation8 + $0x468] sm:$0xff]
    %v2142 = vld [vmem:[#allocation8 + $0x470] sm:$0xff]
    %v2143 = vld [vmem:[#allocation8 + $0x478] sm:$0xff]
    %v2144 = vld [vmem:[#allocation8 + $0x480] sm:$0xff]
    %v2145 = vld [vmem:[#allocation8 + $0x488] sm:$0xff]
    %v2146 = vld [vmem:[#allocation8 + $0x490] sm:$0xff]
    %v2147 = vld [vmem:[#allocation8 + $0x498] sm:$0xff]
    %v2148 = vld [vmem:[#allocation8 + $0x4a0] sm:$0xff]
    %v2149 = vld [vmem:[#allocation8 + $0x4a8] sm:$0xff]
    %v2150 = vld [vmem:[#allocation8 + $0x4b0] sm:$0xff]
    %v2151 = vld [vmem:[#allocation8 + $0x4b8] sm:$0xff]
    %v2152 = vld [vmem:[#allocation8 + $0x4c0] sm:$0xff]
    %v2153 = vld [vmem:[#allocation8 + $0x4c8] sm:$0xff]
    %v2154 = vld [vmem:[#allocation8 + $0x4d0] sm:$0xff]
    %v2155 = vld [vmem:[#allocation8 + $0x4d8] sm:$0xff]
    %v2156 = vld [vmem:[#allocation8 + $0x4e0] sm:$0xff]
    %v2157 = vld [vmem:[#allocation8 + $0x4e8] sm:$0xff]
    %v2158 = vld [vmem:[#allocation8 + $0x4f0] sm:$0xff]
    %v2159 = vld [vmem:[#allocation8 + $0x4f8] sm:$0xff]
    %v2160 = vld [vmem:[#allocation8 + $0x500] sm:$0xff]
    %v2161 = vld [vmem:[#allocation8 + $0x508] sm:$0xff]
    %v2162 = vld [vmem:[#allocation8 + $0x510] sm:$0xff]
    %v2163 = vld [vmem:[#allocation8 + $0x518] sm:$0xff]
    %v2164 = vld [vmem:[#allocation8 + $0x520] sm:$0xff]
    %v2165 = vld [vmem:[#allocation8 + $0x528] sm:$0xff]
    %v2166 = vld [vmem:[#allocation8 + $0x530] sm:$0xff]
    %v2167 = vld [vmem:[#allocation8 + $0x538] sm:$0xff]
    %v2168 = vld [vmem:[#allocation8 + $0x540] sm:$0xff]
    %v2169 = vld [vmem:[#allocation8 + $0x548] sm:$0xff]
    %v2170 = vld [vmem:[#allocation8 + $0x550] sm:$0xff]
    %v2171 = vld [vmem:[#allocation8 + $0x558] sm:$0xff]
    %v2172 = vld [vmem:[#allocation8 + $0x560] sm:$0xff]
    %v2173 = vld [vmem:[#allocation8 + $0x568] sm:$0xff]
    %v2174 = vld [vmem:[#allocation8 + $0x570] sm:$0xff]
    %v2175 = vld [vmem:[#allocation8 + $0x578] sm:$0xff]
    %v2176 = vld [vmem:[#allocation8 + $0x580] sm:$0xff]
    %v2177 = vld [vmem:[#allocation8 + $0x588] sm:$0xff]
    %v2178 = vld [vmem:[#allocation8 + $0x590] sm:$0xff]
    %v2179 = vld [vmem:[#allocation8 + $0x598] sm:$0xff]
    %v2180 = vld [vmem:[#allocation8 + $0x5a0] sm:$0xff]
    %v2181 = vld [vmem:[#allocation8 + $0x5a8] sm:$0xff]
    %v2182 = vld [vmem:[#allocation8 + $0x5b0] sm:$0xff]
    %v2183 = vld [vmem:[#allocation8 + $0x5b8] sm:$0xff]
    %v2184 = vld [vmem:[#allocation8 + $0x5c0] sm:$0xff]
    %v2185 = vld [vmem:[#allocation8 + $0x5c8] sm:$0xff]
    %v2186 = vld [vmem:[#allocation8 + $0x5d0] sm:$0xff]
    %v2187 = vld [vmem:[#allocation8 + $0x5d8] sm:$0xff]
    %v2188 = vld [vmem:[#allocation8 + $0x5e0] sm:$0xff]
    %v2189 = vld [vmem:[#allocation8 + $0x5e8] sm:$0xff]
    %v2190 = vld [vmem:[#allocation8 + $0x5f0] sm:$0xff]
    %v2191 = vld [vmem:[#allocation8 + $0x5f8] sm:$0xff]
    %v2192 = vld [vmem:[#allocation8 + $0x600] sm:$0xff]
    %v2193 = vld [vmem:[#allocation8 + $0x608] sm:$0xff]
    %v2194 = vld [vmem:[#allocation8 + $0x610] sm:$0xff]
    %v2195 = vld [vmem:[#allocation8 + $0x618] sm:$0xff]
    %v2196 = vld [vmem:[#allocation8 + $0x620] sm:$0xff]
    %v2197 = vld [vmem:[#allocation8 + $0x628] sm:$0xff]
    %v2198 = vld [vmem:[#allocation8 + $0x630] sm:$0xff]
    %v2199 = vld [vmem:[#allocation8 + $0x638] sm:$0xff]
    %v2200 = vld [vmem:[#allocation8 + $0x640] sm:$0xff]
    %v2201 = vld [vmem:[#allocation8 + $0x648] sm:$0xff]
    %v2202 = vld [vmem:[#allocation8 + $0x650] sm:$0xff]
    %v2203 = vld [vmem:[#allocation8 + $0x658] sm:$0xff]
    %v2204 = vld [vmem:[#allocation8 + $0x660] sm:$0xff]
    %v2205 = vld [vmem:[#allocation8 + $0x668] sm:$0xff]
    %v2206 = vld [vmem:[#allocation8 + $0x670] sm:$0xff]
    %v2207 = vld [vmem:[#allocation8 + $0x678] sm:$0xff]
    %v2208 = vld [vmem:[#allocation8 + $0x680] sm:$0xff]
    %v2209 = vld [vmem:[#allocation8 + $0x688] sm:$0xff]
    %v2210 = vld [vmem:[#allocation8 + $0x690] sm:$0xff]
    %v2211 = vld [vmem:[#allocation8 + $0x698] sm:$0xff]
    %v2212 = vld [vmem:[#allocation8 + $0x6a0] sm:$0xff]
    %v2213 = vld [vmem:[#allocation8 + $0x6a8] sm:$0xff]
    %v2214 = vld [vmem:[#allocation8 + $0x6b0] sm:$0xff]
    %v2215 = vld [vmem:[#allocation8 + $0x6b8] sm:$0xff]
    %v2216 = vld [vmem:[#allocation8 + $0x6c0] sm:$0xff]
    %v2217 = vld [vmem:[#allocation8 + $0x6c8] sm:$0xff]
    %v2218 = vld [vmem:[#allocation8 + $0x6d0] sm:$0xff]
    %v2219 = vld [vmem:[#allocation8 + $0x6d8] sm:$0xff]
    %v2220 = vld [vmem:[#allocation8 + $0x6e0] sm:$0xff]
    %v2221 = vld [vmem:[#allocation8 + $0x6e8] sm:$0xff]
    %v2222 = vld [vmem:[#allocation8 + $0x6f0] sm:$0xff]
    %v2223 = vld [vmem:[#allocation8 + $0x6f8] sm:$0xff]
    %v2224 = vld [vmem:[#allocation8 + $0x700] sm:$0xff]
    %v2225 = vld [vmem:[#allocation8 + $0x708] sm:$0xff]
    %v2226 = vld [vmem:[#allocation8 + $0x710] sm:$0xff]
    %v2227 = vld [vmem:[#allocation8 + $0x718] sm:$0xff]
    %v2228 = vld [vmem:[#allocation8 + $0x720] sm:$0xff]
    %v2229 = vld [vmem:[#allocation8 + $0x728] sm:$0xff]
    %v2230 = vld [vmem:[#allocation8 + $0x730] sm:$0xff]
    %v2231 = vld [vmem:[#allocation8 + $0x738] sm:$0xff]
    %v2232 = vld [vmem:[#allocation8 + $0x740] sm:$0xff]
    %v2233 = vld [vmem:[#allocation8 + $0x748] sm:$0xff]
    %v2234 = vld [vmem:[#allocation8 + $0x750] sm:$0xff]
    %v2235 = vld [vmem:[#allocation8 + $0x758] sm:$0xff]
    %v2236 = vld [vmem:[#allocation8 + $0x760] sm:$0xff]
    %v2237 = vld [vmem:[#allocation8 + $0x768] sm:$0xff]
    %v2238 = vld [vmem:[#allocation8 + $0x770] sm:$0xff]
    %v2239 = vld [vmem:[#allocation8 + $0x778] sm:$0xff]
    %v2240 = vld [vmem:[#allocation8 + $0x780] sm:$0xff]
    %v2241 = vld [vmem:[#allocation8 + $0x788] sm:$0xff]
    %v2242 = vld [vmem:[#allocation8 + $0x790] sm:$0xff]
    %v2243 = vld [vmem:[#allocation8 + $0x798] sm:$0xff]
    %v2244 = vld [vmem:[#allocation8 + $0x7a0] sm:$0xff]
    %v2245 = vld [vmem:[#allocation8 + $0x7a8] sm:$0xff]
    %v2246 = vld [vmem:[#allocation8 + $0x7b0] sm:$0xff]
    %v2247 = vld [vmem:[#allocation8 + $0x7b8] sm:$0xff]
    %v2248 = vld [vmem:[#allocation8 + $0x7c0] sm:$0xff]
    %v2249 = vld [vmem:[#allocation8 + $0x7c8] sm:$0xff]
    %v2250 = vld [vmem:[#allocation8 + $0x7d0] sm:$0xff]
    %v2251 = vld [vmem:[#allocation8 + $0x7d8] sm:$0xff]
    %v2252 = vld [vmem:[#allocation8 + $0x7e0] sm:$0xff]
    %v2253 = vld [vmem:[#allocation8 + $0x7e8] sm:$0xff]
    %v2254 = vld [vmem:[#allocation8 + $0x7f0] sm:$0xff]
    %v2255 = vld [vmem:[#allocation8 + $0x7f8] sm:$0xff]
    %v2256 = vld [vmem:[#allocation10] sm:$0xff]
    %v2258 = vlaneseq
    %v2259 = vshrl.u32 %v2258, 7
    %v2260 = vsub.s32 0, %v2259
    %v2261 = vrot.slane %v2256, %v2260
    %v2262 = vlaneseq
    %v2263 = vshrl.u32 %v2262, 7
    %v2264 = vsub.s32 1, %v2263
    %v2265 = vrot.slane %v2256, %v2264
    %v2266 = vlaneseq
    %v2267 = vshrl.u32 %v2266, 7
    %v2268 = vsub.s32 2, %v2267
    %v2269 = vrot.slane %v2256, %v2268
    %v2270 = vlaneseq
    %v2271 = vshrl.u32 %v2270, 7
    %v2272 = vsub.s32 3, %v2271
    %v2273 = vrot.slane %v2256, %v2272
    %v2274 = vlaneseq
    %v2275 = vshrl.u32 %v2274, 7
    %v2276 = vsub.s32 4, %v2275
    %v2277 = vrot.slane %v2256, %v2276
    %v2278 = vlaneseq
    %v2279 = vshrl.u32 %v2278, 7
    %v2280 = vsub.s32 5, %v2279
    %v2281 = vrot.slane %v2256, %v2280
    %v2282 = vlaneseq
    %v2283 = vshrl.u32 %v2282, 7
    %v2284 = vsub.s32 6, %v2283
    %v2285 = vrot.slane %v2256, %v2284
    %v2286 = vlaneseq
    %v2287 = vshrl.u32 %v2286, 7
    %v2288 = vsub.s32 7, %v2287
    %v2289 = vrot.slane %v2256, %v2288
    %v2554 = vunpack.c.l.b16 %v2000
    %v2555 = vunpack.c.h.b16 %v2000
    %v2556 = vunpack.c.l.b16 %v2001
    %v2557 = vunpack.c.h.b16 %v2001
    %v2558 = vunpack.c.l.b16 %v2002
    %v2559 = vunpack.c.h.b16 %v2002
    %v2560 = vunpack.c.l.b16 %v2003
    %v2561 = vunpack.c.h.b16 %v2003
    %v2562 = vunpack.c.l.b16 %v2004
    %v2563 = vunpack.c.h.b16 %v2004
    %v2564 = vunpack.c.l.b16 %v2005
    %v2565 = vunpack.c.h.b16 %v2005
    %v2566 = vunpack.c.l.b16 %v2006
    %v2567 = vunpack.c.h.b16 %v2006
    %v2568 = vunpack.c.l.b16 %v2007
    %v2569 = vunpack.c.h.b16 %v2007
    %v2570 = vunpack.c.l.b16 %v2008
    %v2571 = vunpack.c.h.b16 %v2008
    %v2572 = vunpack.c.l.b16 %v2009
    %v2573 = vunpack.c.h.b16 %v2009
    %v2574 = vunpack.c.l.b16 %v2010
    %v2575 = vunpack.c.h.b16 %v2010
    %v2576 = vunpack.c.l.b16 %v2011
    %v2577 = vunpack.c.h.b16 %v2011
    %v2578 = vunpack.c.l.b16 %v2012
    %v2579 = vunpack.c.h.b16 %v2012
    %v2580 = vunpack.c.l.b16 %v2013
    %v2581 = vunpack.c.h.b16 %v2013
    %v2582 = vunpack.c.l.b16 %v2014
    %v2583 = vunpack.c.h.b16 %v2014
    %v2584 = vunpack.c.l.b16 %v2015
    %v2585 = vunpack.c.h.b16 %v2015
    %v2586 = vunpack.c.l.b16 %v2016
    %v2587 = vunpack.c.h.b16 %v2016
    %v2588 = vunpack.c.l.b16 %v2017
    %v2589 = vunpack.c.h.b16 %v2017
    %v2590 = vunpack.c.l.b16 %v2018
    %v2591 = vunpack.c.h.b16 %v2018
    %v2592 = vunpack.c.l.b16 %v2019
    %v2593 = vunpack.c.h.b16 %v2019
    %v2594 = vunpack.c.l.b16 %v2020
    %v2595 = vunpack.c.h.b16 %v2020
    %v2596 = vunpack.c.l.b16 %v2021
    %v2597 = vunpack.c.h.b16 %v2021
    %v2598 = vunpack.c.l.b16 %v2022
    %v2599 = vunpack.c.h.b16 %v2022
    %v2600 = vunpack.c.l.b16 %v2023
    %v2601 = vunpack.c.h.b16 %v2023
    %v2602 = vunpack.c.l.b16 %v2024
    %v2603 = vunpack.c.h.b16 %v2024
    %v2604 = vunpack.c.l.b16 %v2025
    %v2605 = vunpack.c.h.b16 %v2025
    %v2606 = vunpack.c.l.b16 %v2026
    %v2607 = vunpack.c.h.b16 %v2026
    %v2608 = vunpack.c.l.b16 %v2027
    %v2609 = vunpack.c.h.b16 %v2027
    %v2610 = vunpack.c.l.b16 %v2028
    %v2611 = vunpack.c.h.b16 %v2028
    %v2612 = vunpack.c.l.b16 %v2029
    %v2613 = vunpack.c.h.b16 %v2029
    %v2614 = vunpack.c.l.b16 %v2030
    %v2615 = vunpack.c.h.b16 %v2030
    %v2616 = vunpack.c.l.b16 %v2031
    %v2617 = vunpack.c.h.b16 %v2031
    %v2618 = vunpack.c.l.b16 %v2032
    %v2619 = vunpack.c.h.b16 %v2032
    %v2620 = vunpack.c.l.b16 %v2033
    %v2621 = vunpack.c.h.b16 %v2033
    %v2622 = vunpack.c.l.b16 %v2034
    %v2623 = vunpack.c.h.b16 %v2034
    %v2624 = vunpack.c.l.b16 %v2035
    %v2625 = vunpack.c.h.b16 %v2035
    %v2626 = vunpack.c.l.b16 %v2036
    %v2627 = vunpack.c.h.b16 %v2036
    %v2628 = vunpack.c.l.b16 %v2037
    %v2629 = vunpack.c.h.b16 %v2037
    %v2630 = vunpack.c.l.b16 %v2038
    %v2631 = vunpack.c.h.b16 %v2038
    %v2632 = vunpack.c.l.b16 %v2039
    %v2633 = vunpack.c.h.b16 %v2039
    %v2634 = vunpack.c.l.b16 %v2040
    %v2635 = vunpack.c.h.b16 %v2040
    %v2636 = vunpack.c.l.b16 %v2041
    %v2637 = vunpack.c.h.b16 %v2041
    %v2638 = vunpack.c.l.b16 %v2042
    %v2639 = vunpack.c.h.b16 %v2042
    %v2640 = vunpack.c.l.b16 %v2043
    %v2641 = vunpack.c.h.b16 %v2043
    %v2642 = vunpack.c.l.b16 %v2044
    %v2643 = vunpack.c.h.b16 %v2044
    %v2644 = vunpack.c.l.b16 %v2045
    %v2645 = vunpack.c.h.b16 %v2045
    %v2646 = vunpack.c.l.b16 %v2046
    %v2647 = vunpack.c.h.b16 %v2046
    %v2648 = vunpack.c.l.b16 %v2047
    %v2649 = vunpack.c.h.b16 %v2047
    %v2650 = vunpack.c.l.b16 %v2048
    %v2651 = vunpack.c.h.b16 %v2048
    %v2652 = vunpack.c.l.b16 %v2049
    %v2653 = vunpack.c.h.b16 %v2049
    %v2654 = vunpack.c.l.b16 %v2050
    %v2655 = vunpack.c.h.b16 %v2050
    %v2656 = vunpack.c.l.b16 %v2051
    %v2657 = vunpack.c.h.b16 %v2051
    %v2658 = vunpack.c.l.b16 %v2052
    %v2659 = vunpack.c.h.b16 %v2052
    %v2660 = vunpack.c.l.b16 %v2053
    %v2661 = vunpack.c.h.b16 %v2053
    %v2662 = vunpack.c.l.b16 %v2054
    %v2663 = vunpack.c.h.b16 %v2054
    %v2664 = vunpack.c.l.b16 %v2055
    %v2665 = vunpack.c.h.b16 %v2055
    %v2666 = vunpack.c.l.b16 %v2056
    %v2667 = vunpack.c.h.b16 %v2056
    %v2668 = vunpack.c.l.b16 %v2057
    %v2669 = vunpack.c.h.b16 %v2057
    %v2670 = vunpack.c.l.b16 %v2058
    %v2671 = vunpack.c.h.b16 %v2058
    %v2672 = vunpack.c.l.b16 %v2059
    %v2673 = vunpack.c.h.b16 %v2059
    %v2674 = vunpack.c.l.b16 %v2060
    %v2675 = vunpack.c.h.b16 %v2060
    %v2676 = vunpack.c.l.b16 %v2061
    %v2677 = vunpack.c.h.b16 %v2061
    %v2678 = vunpack.c.l.b16 %v2062
    %v2679 = vunpack.c.h.b16 %v2062
    %v2680 = vunpack.c.l.b16 %v2063
    %v2681 = vunpack.c.h.b16 %v2063
    %v2682 = vunpack.c.l.b16 %v2064
    %v2683 = vunpack.c.h.b16 %v2064
    %v2684 = vunpack.c.l.b16 %v2065
    %v2685 = vunpack.c.h.b16 %v2065
    %v2686 = vunpack.c.l.b16 %v2066
    %v2687 = vunpack.c.h.b16 %v2066
    %v2688 = vunpack.c.l.b16 %v2067
    %v2689 = vunpack.c.h.b16 %v2067
    %v2690 = vunpack.c.l.b16 %v2068
    %v2691 = vunpack.c.h.b16 %v2068
    %v2692 = vunpack.c.l.b16 %v2069
    %v2693 = vunpack.c.h.b16 %v2069
    %v2694 = vunpack.c.l.b16 %v2070
    %v2695 = vunpack.c.h.b16 %v2070
    %v2696 = vunpack.c.l.b16 %v2071
    %v2697 = vunpack.c.h.b16 %v2071
    %v2698 = vunpack.c.l.b16 %v2072
    %v2699 = vunpack.c.h.b16 %v2072
    %v2700 = vunpack.c.l.b16 %v2073
    %v2701 = vunpack.c.h.b16 %v2073
    %v2702 = vunpack.c.l.b16 %v2074
    %v2703 = vunpack.c.h.b16 %v2074
    %v2704 = vunpack.c.l.b16 %v2075
    %v2705 = vunpack.c.h.b16 %v2075
    %v2706 = vunpack.c.l.b16 %v2076
    %v2707 = vunpack.c.h.b16 %v2076
    %v2708 = vunpack.c.l.b16 %v2077
    %v2709 = vunpack.c.h.b16 %v2077
    %v2710 = vunpack.c.l.b16 %v2078
    %v2711 = vunpack.c.h.b16 %v2078
    %v2712 = vunpack.c.l.b16 %v2079
    %v2713 = vunpack.c.h.b16 %v2079
    %v2714 = vunpack.c.l.b16 %v2080
    %v2715 = vunpack.c.h.b16 %v2080
    %v2716 = vunpack.c.l.b16 %v2081
    %v2717 = vunpack.c.h.b16 %v2081
    %v2718 = vunpack.c.l.b16 %v2082
    %v2719 = vunpack.c.h.b16 %v2082
    %v2720 = vunpack.c.l.b16 %v2083
    %v2721 = vunpack.c.h.b16 %v2083
    %v2722 = vunpack.c.l.b16 %v2084
    %v2723 = vunpack.c.h.b16 %v2084
    %v2724 = vunpack.c.l.b16 %v2085
    %v2725 = vunpack.c.h.b16 %v2085
    %v2726 = vunpack.c.l.b16 %v2086
    %v2727 = vunpack.c.h.b16 %v2086
    %v2728 = vunpack.c.l.b16 %v2087
    %v2729 = vunpack.c.h.b16 %v2087
    %v2730 = vunpack.c.l.b16 %v2088
    %v2731 = vunpack.c.h.b16 %v2088
    %v2732 = vunpack.c.l.b16 %v2089
    %v2733 = vunpack.c.h.b16 %v2089
    %v2734 = vunpack.c.l.b16 %v2090
    %v2735 = vunpack.c.h.b16 %v2090
    %v2736 = vunpack.c.l.b16 %v2091
    %v2737 = vunpack.c.h.b16 %v2091
    %v2738 = vunpack.c.l.b16 %v2092
    %v2739 = vunpack.c.h.b16 %v2092
    %v2740 = vunpack.c.l.b16 %v2093
    %v2741 = vunpack.c.h.b16 %v2093
    %v2742 = vunpack.c.l.b16 %v2094
    %v2743 = vunpack.c.h.b16 %v2094
    %v2744 = vunpack.c.l.b16 %v2095
    %v2745 = vunpack.c.h.b16 %v2095
    %v2746 = vunpack.c.l.b16 %v2096
    %v2747 = vunpack.c.h.b16 %v2096
    %v2748 = vunpack.c.l.b16 %v2097
    %v2749 = vunpack.c.h.b16 %v2097
    %v2750 = vunpack.c.l.b16 %v2098
    %v2751 = vunpack.c.h.b16 %v2098
    %v2752 = vunpack.c.l.b16 %v2099
    %v2753 = vunpack.c.h.b16 %v2099
    %v2754 = vunpack.c.l.b16 %v2100
    %v2755 = vunpack.c.h.b16 %v2100
    %v2756 = vunpack.c.l.b16 %v2101
    %v2757 = vunpack.c.h.b16 %v2101
    %v2758 = vunpack.c.l.b16 %v2102
    %v2759 = vunpack.c.h.b16 %v2102
    %v2760 = vunpack.c.l.b16 %v2103
    %v2761 = vunpack.c.h.b16 %v2103
    %v2762 = vunpack.c.l.b16 %v2104
    %v2763 = vunpack.c.h.b16 %v2104
    %v2764 = vunpack.c.l.b16 %v2105
    %v2765 = vunpack.c.h.b16 %v2105
    %v2766 = vunpack.c.l.b16 %v2106
    %v2767 = vunpack.c.h.b16 %v2106
    %v2768 = vunpack.c.l.b16 %v2107
    %v2769 = vunpack.c.h.b16 %v2107
    %v2770 = vunpack.c.l.b16 %v2108
    %v2771 = vunpack.c.h.b16 %v2108
    %v2772 = vunpack.c.l.b16 %v2109
    %v2773 = vunpack.c.h.b16 %v2109
    %v2774 = vunpack.c.l.b16 %v2110
    %v2775 = vunpack.c.h.b16 %v2110
    %v2776 = vunpack.c.l.b16 %v2111
    %v2777 = vunpack.c.h.b16 %v2111
    %v2778 = vunpack.c.l.b16 %v2112
    %v2779 = vunpack.c.h.b16 %v2112
    %v2780 = vunpack.c.l.b16 %v2113
    %v2781 = vunpack.c.h.b16 %v2113
    %v2782 = vunpack.c.l.b16 %v2114
    %v2783 = vunpack.c.h.b16 %v2114
    %v2784 = vunpack.c.l.b16 %v2115
    %v2785 = vunpack.c.h.b16 %v2115
    %v2786 = vunpack.c.l.b16 %v2116
    %v2787 = vunpack.c.h.b16 %v2116
    %v2788 = vunpack.c.l.b16 %v2117
    %v2789 = vunpack.c.h.b16 %v2117
    %v2790 = vunpack.c.l.b16 %v2118
    %v2791 = vunpack.c.h.b16 %v2118
    %v2792 = vunpack.c.l.b16 %v2119
    %v2793 = vunpack.c.h.b16 %v2119
    %v2794 = vunpack.c.l.b16 %v2120
    %v2795 = vunpack.c.h.b16 %v2120
    %v2796 = vunpack.c.l.b16 %v2121
    %v2797 = vunpack.c.h.b16 %v2121
    %v2798 = vunpack.c.l.b16 %v2122
    %v2799 = vunpack.c.h.b16 %v2122
    %v2800 = vunpack.c.l.b16 %v2123
    %v2801 = vunpack.c.h.b16 %v2123
    %v2802 = vunpack.c.l.b16 %v2124
    %v2803 = vunpack.c.h.b16 %v2124
    %v2804 = vunpack.c.l.b16 %v2125
    %v2805 = vunpack.c.h.b16 %v2125
    %v2806 = vunpack.c.l.b16 %v2126
    %v2807 = vunpack.c.h.b16 %v2126
    %v2808 = vunpack.c.l.b16 %v2127
    %v2809 = vunpack.c.h.b16 %v2127
    %v2810 = vunpack.c.l.b16 %v2128
    %v2811 = vunpack.c.h.b16 %v2128
    %v2812 = vunpack.c.l.b16 %v2129
    %v2813 = vunpack.c.h.b16 %v2129
    %v2814 = vunpack.c.l.b16 %v2130
    %v2815 = vunpack.c.h.b16 %v2130
    %v2816 = vunpack.c.l.b16 %v2131
    %v2817 = vunpack.c.h.b16 %v2131
    %v2818 = vunpack.c.l.b16 %v2132
    %v2819 = vunpack.c.h.b16 %v2132
    %v2820 = vunpack.c.l.b16 %v2133
    %v2821 = vunpack.c.h.b16 %v2133
    %v2822 = vunpack.c.l.b16 %v2134
    %v2823 = vunpack.c.h.b16 %v2134
    %v2824 = vunpack.c.l.b16 %v2135
    %v2825 = vunpack.c.h.b16 %v2135
    %v2826 = vunpack.c.l.b16 %v2136
    %v2827 = vunpack.c.h.b16 %v2136
    %v2828 = vunpack.c.l.b16 %v2137
    %v2829 = vunpack.c.h.b16 %v2137
    %v2830 = vunpack.c.l.b16 %v2138
    %v2831 = vunpack.c.h.b16 %v2138
    %v2832 = vunpack.c.l.b16 %v2139
    %v2833 = vunpack.c.h.b16 %v2139
    %v2834 = vunpack.c.l.b16 %v2140
    %v2835 = vunpack.c.h.b16 %v2140
    %v2836 = vunpack.c.l.b16 %v2141
    %v2837 = vunpack.c.h.b16 %v2141
    %v2838 = vunpack.c.l.b16 %v2142
    %v2839 = vunpack.c.h.b16 %v2142
    %v2840 = vunpack.c.l.b16 %v2143
    %v2841 = vunpack.c.h.b16 %v2143
    %v2842 = vunpack.c.l.b16 %v2144
    %v2843 = vunpack.c.h.b16 %v2144
    %v2844 = vunpack.c.l.b16 %v2145
    %v2845 = vunpack.c.h.b16 %v2145
    %v2846 = vunpack.c.l.b16 %v2146
    %v2847 = vunpack.c.h.b16 %v2146
    %v2848 = vunpack.c.l.b16 %v2147
    %v2849 = vunpack.c.h.b16 %v2147
    %v2850 = vunpack.c.l.b16 %v2148
    %v2851 = vunpack.c.h.b16 %v2148
    %v2852 = vunpack.c.l.b16 %v2149
    %v2853 = vunpack.c.h.b16 %v2149
    %v2854 = vunpack.c.l.b16 %v2150
    %v2855 = vunpack.c.h.b16 %v2150
    %v2856 = vunpack.c.l.b16 %v2151
    %v2857 = vunpack.c.h.b16 %v2151
    %v2858 = vunpack.c.l.b16 %v2152
    %v2859 = vunpack.c.h.b16 %v2152
    %v2860 = vunpack.c.l.b16 %v2153
    %v2861 = vunpack.c.h.b16 %v2153
    %v2862 = vunpack.c.l.b16 %v2154
    %v2863 = vunpack.c.h.b16 %v2154
    %v2864 = vunpack.c.l.b16 %v2155
    %v2865 = vunpack.c.h.b16 %v2155
    %v2866 = vunpack.c.l.b16 %v2156
    %v2867 = vunpack.c.h.b16 %v2156
    %v2868 = vunpack.c.l.b16 %v2157
    %v2869 = vunpack.c.h.b16 %v2157
    %v2870 = vunpack.c.l.b16 %v2158
    %v2871 = vunpack.c.h.b16 %v2158
    %v2872 = vunpack.c.l.b16 %v2159
    %v2873 = vunpack.c.h.b16 %v2159
    %v2874 = vunpack.c.l.b16 %v2160
    %v2875 = vunpack.c.h.b16 %v2160
    %v2876 = vunpack.c.l.b16 %v2161
    %v2877 = vunpack.c.h.b16 %v2161
    %v2878 = vunpack.c.l.b16 %v2162
    %v2879 = vunpack.c.h.b16 %v2162
    %v2880 = vunpack.c.l.b16 %v2163
    %v2881 = vunpack.c.h.b16 %v2163
    %v2882 = vunpack.c.l.b16 %v2164
    %v2883 = vunpack.c.h.b16 %v2164
    %v2884 = vunpack.c.l.b16 %v2165
    %v2885 = vunpack.c.h.b16 %v2165
    %v2886 = vunpack.c.l.b16 %v2166
    %v2887 = vunpack.c.h.b16 %v2166
    %v2888 = vunpack.c.l.b16 %v2167
    %v2889 = vunpack.c.h.b16 %v2167
    %v2890 = vunpack.c.l.b16 %v2168
    %v2891 = vunpack.c.h.b16 %v2168
    %v2892 = vunpack.c.l.b16 %v2169
    %v2893 = vunpack.c.h.b16 %v2169
    %v2894 = vunpack.c.l.b16 %v2170
    %v2895 = vunpack.c.h.b16 %v2170
    %v2896 = vunpack.c.l.b16 %v2171
    %v2897 = vunpack.c.h.b16 %v2171
    %v2898 = vunpack.c.l.b16 %v2172
    %v2899 = vunpack.c.h.b16 %v2172
    %v2900 = vunpack.c.l.b16 %v2173
    %v2901 = vunpack.c.h.b16 %v2173
    %v2902 = vunpack.c.l.b16 %v2174
    %v2903 = vunpack.c.h.b16 %v2174
    %v2904 = vunpack.c.l.b16 %v2175
    %v2905 = vunpack.c.h.b16 %v2175
    %v2906 = vunpack.c.l.b16 %v2176
    %v2907 = vunpack.c.h.b16 %v2176
    %v2908 = vunpack.c.l.b16 %v2177
    %v2909 = vunpack.c.h.b16 %v2177
    %v2910 = vunpack.c.l.b16 %v2178
    %v2911 = vunpack.c.h.b16 %v2178
    %v2912 = vunpack.c.l.b16 %v2179
    %v2913 = vunpack.c.h.b16 %v2179
    %v2914 = vunpack.c.l.b16 %v2180
    %v2915 = vunpack.c.h.b16 %v2180
    %v2916 = vunpack.c.l.b16 %v2181
    %v2917 = vunpack.c.h.b16 %v2181
    %v2918 = vunpack.c.l.b16 %v2182
    %v2919 = vunpack.c.h.b16 %v2182
    %v2920 = vunpack.c.l.b16 %v2183
    %v2921 = vunpack.c.h.b16 %v2183
    %v2922 = vunpack.c.l.b16 %v2184
    %v2923 = vunpack.c.h.b16 %v2184
    %v2924 = vunpack.c.l.b16 %v2185
    %v2925 = vunpack.c.h.b16 %v2185
    %v2926 = vunpack.c.l.b16 %v2186
    %v2927 = vunpack.c.h.b16 %v2186
    %v2928 = vunpack.c.l.b16 %v2187
    %v2929 = vunpack.c.h.b16 %v2187
    %v2930 = vunpack.c.l.b16 %v2188
    %v2931 = vunpack.c.h.b16 %v2188
    %v2932 = vunpack.c.l.b16 %v2189
    %v2933 = vunpack.c.h.b16 %v2189
    %v2934 = vunpack.c.l.b16 %v2190
    %v2935 = vunpack.c.h.b16 %v2190
    %v2936 = vunpack.c.l.b16 %v2191
    %v2937 = vunpack.c.h.b16 %v2191
    %v2938 = vunpack.c.l.b16 %v2192
    %v2939 = vunpack.c.h.b16 %v2192
    %v2940 = vunpack.c.l.b16 %v2193
    %v2941 = vunpack.c.h.b16 %v2193
    %v2942 = vunpack.c.l.b16 %v2194
    %v2943 = vunpack.c.h.b16 %v2194
    %v2944 = vunpack.c.l.b16 %v2195
    %v2945 = vunpack.c.h.b16 %v2195
    %v2946 = vunpack.c.l.b16 %v2196
    %v2947 = vunpack.c.h.b16 %v2196
    %v2948 = vunpack.c.l.b16 %v2197
    %v2949 = vunpack.c.h.b16 %v2197
    %v2950 = vunpack.c.l.b16 %v2198
    %v2951 = vunpack.c.h.b16 %v2198
    %v2952 = vunpack.c.l.b16 %v2199
    %v2953 = vunpack.c.h.b16 %v2199
    %v2954 = vunpack.c.l.b16 %v2200
    %v2955 = vunpack.c.h.b16 %v2200
    %v2956 = vunpack.c.l.b16 %v2201
    %v2957 = vunpack.c.h.b16 %v2201
    %v2958 = vunpack.c.l.b16 %v2202
    %v2959 = vunpack.c.h.b16 %v2202
    %v2960 = vunpack.c.l.b16 %v2203
    %v2961 = vunpack.c.h.b16 %v2203
    %v2962 = vunpack.c.l.b16 %v2204
    %v2963 = vunpack.c.h.b16 %v2204
    %v2964 = vunpack.c.l.b16 %v2205
    %v2965 = vunpack.c.h.b16 %v2205
    %v2966 = vunpack.c.l.b16 %v2206
    %v2967 = vunpack.c.h.b16 %v2206
    %v2968 = vunpack.c.l.b16 %v2207
    %v2969 = vunpack.c.h.b16 %v2207
    %v2970 = vunpack.c.l.b16 %v2208
    %v2971 = vunpack.c.h.b16 %v2208
    %v2972 = vunpack.c.l.b16 %v2209
    %v2973 = vunpack.c.h.b16 %v2209
    %v2974 = vunpack.c.l.b16 %v2210
    %v2975 = vunpack.c.h.b16 %v2210
    %v2976 = vunpack.c.l.b16 %v2211
    %v2977 = vunpack.c.h.b16 %v2211
    %v2978 = vunpack.c.l.b16 %v2212
    %v2979 = vunpack.c.h.b16 %v2212
    %v2980 = vunpack.c.l.b16 %v2213
    %v2981 = vunpack.c.h.b16 %v2213
    %v2982 = vunpack.c.l.b16 %v2214
    %v2983 = vunpack.c.h.b16 %v2214
    %v2984 = vunpack.c.l.b16 %v2215
    %v2985 = vunpack.c.h.b16 %v2215
    %v2986 = vunpack.c.l.b16 %v2216
    %v2987 = vunpack.c.h.b16 %v2216
    %v2988 = vunpack.c.l.b16 %v2217
    %v2989 = vunpack.c.h.b16 %v2217
    %v2990 = vunpack.c.l.b16 %v2218
    %v2991 = vunpack.c.h.b16 %v2218
    %v2992 = vunpack.c.l.b16 %v2219
    %v2993 = vunpack.c.h.b16 %v2219
    %v2994 = vunpack.c.l.b16 %v2220
    %v2995 = vunpack.c.h.b16 %v2220
    %v2996 = vunpack.c.l.b16 %v2221
    %v2997 = vunpack.c.h.b16 %v2221
    %v2998 = vunpack.c.l.b16 %v2222
    %v2999 = vunpack.c.h.b16 %v2222
    %v3000 = vunpack.c.l.b16 %v2223
    %v3001 = vunpack.c.h.b16 %v2223
    %v3002 = vunpack.c.l.b16 %v2224
    %v3003 = vunpack.c.h.b16 %v2224
    %v3004 = vunpack.c.l.b16 %v2225
    %v3005 = vunpack.c.h.b16 %v2225
    %v3006 = vunpack.c.l.b16 %v2226
    %v3007 = vunpack.c.h.b16 %v2226
    %v3008 = vunpack.c.l.b16 %v2227
    %v3009 = vunpack.c.h.b16 %v2227
    %v3010 = vunpack.c.l.b16 %v2228
    %v3011 = vunpack.c.h.b16 %v2228
    %v3012 = vunpack.c.l.b16 %v2229
    %v3013 = vunpack.c.h.b16 %v2229
    %v3014 = vunpack.c.l.b16 %v2230
    %v3015 = vunpack.c.h.b16 %v2230
    %v3016 = vunpack.c.l.b16 %v2231
    %v3017 = vunpack.c.h.b16 %v2231
    %v3018 = vunpack.c.l.b16 %v2232
    %v3019 = vunpack.c.h.b16 %v2232
    %v3020 = vunpack.c.l.b16 %v2233
    %v3021 = vunpack.c.h.b16 %v2233
    %v3022 = vunpack.c.l.b16 %v2234
    %v3023 = vunpack.c.h.b16 %v2234
    %v3024 = vunpack.c.l.b16 %v2235
    %v3025 = vunpack.c.h.b16 %v2235
    %v3026 = vunpack.c.l.b16 %v2236
    %v3027 = vunpack.c.h.b16 %v2236
    %v3028 = vunpack.c.l.b16 %v2237
    %v3029 = vunpack.c.h.b16 %v2237
    %v3030 = vunpack.c.l.b16 %v2238
    %v3031 = vunpack.c.h.b16 %v2238
    %v3032 = vunpack.c.l.b16 %v2239
    %v3033 = vunpack.c.h.b16 %v2239
    %v3034 = vunpack.c.l.b16 %v2240
    %v3035 = vunpack.c.h.b16 %v2240
    %v3036 = vunpack.c.l.b16 %v2241
    %v3037 = vunpack.c.h.b16 %v2241
    %v3038 = vunpack.c.l.b16 %v2242
    %v3039 = vunpack.c.h.b16 %v2242
    %v3040 = vunpack.c.l.b16 %v2243
    %v3041 = vunpack.c.h.b16 %v2243
    %v3042 = vunpack.c.l.b16 %v2244
    %v3043 = vunpack.c.h.b16 %v2244
    %v3044 = vunpack.c.l.b16 %v2245
    %v3045 = vunpack.c.h.b16 %v2245
    %v3046 = vunpack.c.l.b16 %v2246
    %v3047 = vunpack.c.h.b16 %v2246
    %v3048 = vunpack.c.l.b16 %v2247
    %v3049 = vunpack.c.h.b16 %v2247
    %v3050 = vunpack.c.l.b16 %v2248
    %v3051 = vunpack.c.h.b16 %v2248
    %v3052 = vunpack.c.l.b16 %v2249
    %v3053 = vunpack.c.h.b16 %v2249
    %v3054 = vunpack.c.l.b16 %v2250
    %v3055 = vunpack.c.h.b16 %v2250
    %v3056 = vunpack.c.l.b16 %v2251
    %v3057 = vunpack.c.h.b16 %v2251
    %v3058 = vunpack.c.l.b16 %v2252
    %v3059 = vunpack.c.h.b16 %v2252
    %v3060 = vunpack.c.l.b16 %v2253
    %v3061 = vunpack.c.h.b16 %v2253
    %v3062 = vunpack.c.l.b16 %v2254
    %v3063 = vunpack.c.h.b16 %v2254
    %v3064 = vunpack.c.l.b16 %v2255
    %v3065 = vunpack.c.h.b16 %v2255
    %v3066 = vpack.c.b16 %v2562, %v2554
    %v3067 = vpack.c.b16 %v2563, %v2555
    %v3068 = vpack.c.b16 %v2564, %v2556
    %v3069 = vpack.c.b16 %v2565, %v2557
    %v3070 = vpack.c.b16 %v2566, %v2558
    %v3071 = vpack.c.b16 %v2567, %v2559
    %v3072 = vpack.c.b16 %v2568, %v2560
    %v3073 = vpack.c.b16 %v2569, %v2561
    %v3074 = vpack.c.b16 %v2578, %v2570
    %v3075 = vpack.c.b16 %v2579, %v2571
    %v3076 = vpack.c.b16 %v2580, %v2572
    %v3077 = vpack.c.b16 %v2581, %v2573
    %v3078 = vpack.c.b16 %v2582, %v2574
    %v3079 = vpack.c.b16 %v2583, %v2575
    %v3080 = vpack.c.b16 %v2584, %v2576
    %v3081 = vpack.c.b16 %v2585, %v2577
    %v3082 = vpack.c.b16 %v2594, %v2586
    %v3083 = vpack.c.b16 %v2595, %v2587
    %v3084 = vpack.c.b16 %v2596, %v2588
    %v3085 = vpack.c.b16 %v2597, %v2589
    %v3086 = vpack.c.b16 %v2598, %v2590
    %v3087 = vpack.c.b16 %v2599, %v2591
    %v3088 = vpack.c.b16 %v2600, %v2592
    %v3089 = vpack.c.b16 %v2601, %v2593
    %v3090 = vpack.c.b16 %v2610, %v2602
    %v3091 = vpack.c.b16 %v2611, %v2603
    %v3092 = vpack.c.b16 %v2612, %v2604
    %v3093 = vpack.c.b16 %v2613, %v2605
    %v3094 = vpack.c.b16 %v2614, %v2606
    %v3095 = vpack.c.b16 %v2615, %v2607
    %v3096 = vpack.c.b16 %v2616, %v2608
    %v3097 = vpack.c.b16 %v2617, %v2609
    %v3098 = vpack.c.b16 %v2626, %v2618
    %v3099 = vpack.c.b16 %v2627, %v2619
    %v3100 = vpack.c.b16 %v2628, %v2620
    %v3101 = vpack.c.b16 %v2629, %v2621
    %v3102 = vpack.c.b16 %v2630, %v2622
    %v3103 = vpack.c.b16 %v2631, %v2623
    %v3104 = vpack.c.b16 %v2632, %v2624
    %v3105 = vpack.c.b16 %v2633, %v2625
    %v3106 = vpack.c.b16 %v2642, %v2634
    %v3107 = vpack.c.b16 %v2643, %v2635
    %v3108 = vpack.c.b16 %v2644, %v2636
    %v3109 = vpack.c.b16 %v2645, %v2637
    %v3110 = vpack.c.b16 %v2646, %v2638
    %v3111 = vpack.c.b16 %v2647, %v2639
    %v3112 = vpack.c.b16 %v2648, %v2640
    %v3113 = vpack.c.b16 %v2649, %v2641
    %v3114 = vpack.c.b16 %v2658, %v2650
    %v3115 = vpack.c.b16 %v2659, %v2651
    %v3116 = vpack.c.b16 %v2660, %v2652
    %v3117 = vpack.c.b16 %v2661, %v2653
    %v3118 = vpack.c.b16 %v2662, %v2654
    %v3119 = vpack.c.b16 %v2663, %v2655
    %v3120 = vpack.c.b16 %v2664, %v2656
    %v3121 = vpack.c.b16 %v2665, %v2657
    %v3122 = vpack.c.b16 %v2674, %v2666
    %v3123 = vpack.c.b16 %v2675, %v2667
    %v3124 = vpack.c.b16 %v2676, %v2668
    %v3125 = vpack.c.b16 %v2677, %v2669
    %v3126 = vpack.c.b16 %v2678, %v2670
    %v3127 = vpack.c.b16 %v2679, %v2671
    %v3128 = vpack.c.b16 %v2680, %v2672
    %v3129 = vpack.c.b16 %v2681, %v2673
    %v3130 = vpack.c.b16 %v2690, %v2682
    %v3131 = vpack.c.b16 %v2691, %v2683
    %v3132 = vpack.c.b16 %v2692, %v2684
    %v3133 = vpack.c.b16 %v2693, %v2685
    %v3134 = vpack.c.b16 %v2694, %v2686
    %v3135 = vpack.c.b16 %v2695, %v2687
    %v3136 = vpack.c.b16 %v2696, %v2688
    %v3137 = vpack.c.b16 %v2697, %v2689
    %v3138 = vpack.c.b16 %v2706, %v2698
    %v3139 = vpack.c.b16 %v2707, %v2699
    %v3140 = vpack.c.b16 %v2708, %v2700
    %v3141 = vpack.c.b16 %v2709, %v2701
    %v3142 = vpack.c.b16 %v2710, %v2702
    %v3143 = vpack.c.b16 %v2711, %v2703
    %v3144 = vpack.c.b16 %v2712, %v2704
    %v3145 = vpack.c.b16 %v2713, %v2705
    %v3146 = vpack.c.b16 %v2722, %v2714
    %v3147 = vpack.c.b16 %v2723, %v2715
    %v3148 = vpack.c.b16 %v2724, %v2716
    %v3149 = vpack.c.b16 %v2725, %v2717
    %v3150 = vpack.c.b16 %v2726, %v2718
    %v3151 = vpack.c.b16 %v2727, %v2719
    %v3152 = vpack.c.b16 %v2728, %v2720
    %v3153 = vpack.c.b16 %v2729, %v2721
    %v3154 = vpack.c.b16 %v2738, %v2730
    %v3155 = vpack.c.b16 %v2739, %v2731
    %v3156 = vpack.c.b16 %v2740, %v2732
    %v3157 = vpack.c.b16 %v2741, %v2733
    %v3158 = vpack.c.b16 %v2742, %v2734
    %v3159 = vpack.c.b16 %v2743, %v2735
    %v3160 = vpack.c.b16 %v2744, %v2736
    %v3161 = vpack.c.b16 %v2745, %v2737
    %v3162 = vpack.c.b16 %v2754, %v2746
    %v3163 = vpack.c.b16 %v2755, %v2747
    %v3164 = vpack.c.b16 %v2756, %v2748
    %v3165 = vpack.c.b16 %v2757, %v2749
    %v3166 = vpack.c.b16 %v2758, %v2750
    %v3167 = vpack.c.b16 %v2759, %v2751
    %v3168 = vpack.c.b16 %v2760, %v2752
    %v3169 = vpack.c.b16 %v2761, %v2753
    %v3170 = vpack.c.b16 %v2770, %v2762
    %v3171 = vpack.c.b16 %v2771, %v2763
    %v3172 = vpack.c.b16 %v2772, %v2764
    %v3173 = vpack.c.b16 %v2773, %v2765
    %v3174 = vpack.c.b16 %v2774, %v2766
    %v3175 = vpack.c.b16 %v2775, %v2767
    %v3176 = vpack.c.b16 %v2776, %v2768
    %v3177 = vpack.c.b16 %v2777, %v2769
    %v3178 = vpack.c.b16 %v2786, %v2778
    %v3179 = vpack.c.b16 %v2787, %v2779
    %v3180 = vpack.c.b16 %v2788, %v2780
    %v3181 = vpack.c.b16 %v2789, %v2781
    %v3182 = vpack.c.b16 %v2790, %v2782
    %v3183 = vpack.c.b16 %v2791, %v2783
    %v3184 = vpack.c.b16 %v2792, %v2784
    %v3185 = vpack.c.b16 %v2793, %v2785
    %v3186 = vpack.c.b16 %v2802, %v2794
    %v3187 = vpack.c.b16 %v2803, %v2795
    %v3188 = vpack.c.b16 %v2804, %v2796
    %v3189 = vpack.c.b16 %v2805, %v2797
    %v3190 = vpack.c.b16 %v2806, %v2798
    %v3191 = vpack.c.b16 %v2807, %v2799
    %v3192 = vpack.c.b16 %v2808, %v2800
    %v3193 = vpack.c.b16 %v2809, %v2801
    %v3194 = vpack.c.b16 %v2818, %v2810
    %v3195 = vpack.c.b16 %v2819, %v2811
    %v3196 = vpack.c.b16 %v2820, %v2812
    %v3197 = vpack.c.b16 %v2821, %v2813
    %v3198 = vpack.c.b16 %v2822, %v2814
    %v3199 = vpack.c.b16 %v2823, %v2815
    %v3200 = vpack.c.b16 %v2824, %v2816
    %v3201 = vpack.c.b16 %v2825, %v2817
    %v3202 = vpack.c.b16 %v2834, %v2826
    %v3203 = vpack.c.b16 %v2835, %v2827
    %v3204 = vpack.c.b16 %v2836, %v2828
    %v3205 = vpack.c.b16 %v2837, %v2829
    %v3206 = vpack.c.b16 %v2838, %v2830
    %v3207 = vpack.c.b16 %v2839, %v2831
    %v3208 = vpack.c.b16 %v2840, %v2832
    %v3209 = vpack.c.b16 %v2841, %v2833
    %v3210 = vpack.c.b16 %v2850, %v2842
    %v3211 = vpack.c.b16 %v2851, %v2843
    %v3212 = vpack.c.b16 %v2852, %v2844
    %v3213 = vpack.c.b16 %v2853, %v2845
    %v3214 = vpack.c.b16 %v2854, %v2846
    %v3215 = vpack.c.b16 %v2855, %v2847
    %v3216 = vpack.c.b16 %v2856, %v2848
    %v3217 = vpack.c.b16 %v2857, %v2849
    %v3218 = vpack.c.b16 %v2866, %v2858
    %v3219 = vpack.c.b16 %v2867, %v2859
    %v3220 = vpack.c.b16 %v2868, %v2860
    %v3221 = vpack.c.b16 %v2869, %v2861
    %v3222 = vpack.c.b16 %v2870, %v2862
    %v3223 = vpack.c.b16 %v2871, %v2863
    %v3224 = vpack.c.b16 %v2872, %v2864
    %v3225 = vpack.c.b16 %v2873, %v2865
    %v3226 = vpack.c.b16 %v2882, %v2874
    %v3227 = vpack.c.b16 %v2883, %v2875
    %v3228 = vpack.c.b16 %v2884, %v2876
    %v3229 = vpack.c.b16 %v2885, %v2877
    %v3230 = vpack.c.b16 %v2886, %v2878
    %v3231 = vpack.c.b16 %v2887, %v2879
    %v3232 = vpack.c.b16 %v2888, %v2880
    %v3233 = vpack.c.b16 %v2889, %v2881
    %v3234 = vpack.c.b16 %v2898, %v2890
    %v3235 = vpack.c.b16 %v2899, %v2891
    %v3236 = vpack.c.b16 %v2900, %v2892
    %v3237 = vpack.c.b16 %v2901, %v2893
    %v3238 = vpack.c.b16 %v2902, %v2894
    %v3239 = vpack.c.b16 %v2903, %v2895
    %v3240 = vpack.c.b16 %v2904, %v2896
    %v3241 = vpack.c.b16 %v2905, %v2897
    %v3242 = vpack.c.b16 %v2914, %v2906
    %v3243 = vpack.c.b16 %v2915, %v2907
    %v3244 = vpack.c.b16 %v2916, %v2908
    %v3245 = vpack.c.b16 %v2917, %v2909
    %v3246 = vpack.c.b16 %v2918, %v2910
    %v3247 = vpack.c.b16 %v2919, %v2911
    %v3248 = vpack.c.b16 %v2920, %v2912
    %v3249 = vpack.c.b16 %v2921, %v2913
    %v3250 = vpack.c.b16 %v2930, %v2922
    %v3251 = vpack.c.b16 %v2931, %v2923
    %v3252 = vpack.c.b16 %v2932, %v2924
    %v3253 = vpack.c.b16 %v2933, %v2925
    %v3254 = vpack.c.b16 %v2934, %v2926
    %v3255 = vpack.c.b16 %v2935, %v2927
    %v3256 = vpack.c.b16 %v2936, %v2928
    %v3257 = vpack.c.b16 %v2937, %v2929
    %v3258 = vpack.c.b16 %v2946, %v2938
    %v3259 = vpack.c.b16 %v2947, %v2939
    %v3260 = vpack.c.b16 %v2948, %v2940
    %v3261 = vpack.c.b16 %v2949, %v2941
    %v3262 = vpack.c.b16 %v2950, %v2942
    %v3263 = vpack.c.b16 %v2951, %v2943
    %v3264 = vpack.c.b16 %v2952, %v2944
    %v3265 = vpack.c.b16 %v2953, %v2945
    %v3266 = vpack.c.b16 %v2962, %v2954
    %v3267 = vpack.c.b16 %v2963, %v2955
    %v3268 = vpack.c.b16 %v2964, %v2956
    %v3269 = vpack.c.b16 %v2965, %v2957
    %v3270 = vpack.c.b16 %v2966, %v2958
    %v3271 = vpack.c.b16 %v2967, %v2959
    %v3272 = vpack.c.b16 %v2968, %v2960
    %v3273 = vpack.c.b16 %v2969, %v2961
    %v3274 = vpack.c.b16 %v2978, %v2970
    %v3275 = vpack.c.b16 %v2979, %v2971
    %v3276 = vpack.c.b16 %v2980, %v2972
    %v3277 = vpack.c.b16 %v2981, %v2973
    %v3278 = vpack.c.b16 %v2982, %v2974
    %v3279 = vpack.c.b16 %v2983, %v2975
    %v3280 = vpack.c.b16 %v2984, %v2976
    %v3281 = vpack.c.b16 %v2985, %v2977
    %v3282 = vpack.c.b16 %v2994, %v2986
    %v3283 = vpack.c.b16 %v2995, %v2987
    %v3284 = vpack.c.b16 %v2996, %v2988
    %v3285 = vpack.c.b16 %v2997, %v2989
    %v3286 = vpack.c.b16 %v2998, %v2990
    %v3287 = vpack.c.b16 %v2999, %v2991
    %v3288 = vpack.c.b16 %v3000, %v2992
    %v3289 = vpack.c.b16 %v3001, %v2993
    %v3290 = vpack.c.b16 %v3010, %v3002
    %v3291 = vpack.c.b16 %v3011, %v3003
    %v3292 = vpack.c.b16 %v3012, %v3004
    %v3293 = vpack.c.b16 %v3013, %v3005
    %v3294 = vpack.c.b16 %v3014, %v3006
    %v3295 = vpack.c.b16 %v3015, %v3007
    %v3296 = vpack.c.b16 %v3016, %v3008
    %v3297 = vpack.c.b16 %v3017, %v3009
    %v3298 = vpack.c.b16 %v3026, %v3018
    %v3299 = vpack.c.b16 %v3027, %v3019
    %v3300 = vpack.c.b16 %v3028, %v3020
    %v3301 = vpack.c.b16 %v3029, %v3021
    %v3302 = vpack.c.b16 %v3030, %v3022
    %v3303 = vpack.c.b16 %v3031, %v3023
    %v3304 = vpack.c.b16 %v3032, %v3024
    %v3305 = vpack.c.b16 %v3033, %v3025
    %v3306 = vpack.c.b16 %v3042, %v3034
    %v3307 = vpack.c.b16 %v3043, %v3035
    %v3308 = vpack.c.b16 %v3044, %v3036
    %v3309 = vpack.c.b16 %v3045, %v3037
    %v3310 = vpack.c.b16 %v3046, %v3038
    %v3311 = vpack.c.b16 %v3047, %v3039
    %v3312 = vpack.c.b16 %v3048, %v3040
    %v3313 = vpack.c.b16 %v3049, %v3041
    %v3314 = vpack.c.b16 %v3058, %v3050
    %v3315 = vpack.c.b16 %v3059, %v3051
    %v3316 = vpack.c.b16 %v3060, %v3052
    %v3317 = vpack.c.b16 %v3061, %v3053
    %v3318 = vpack.c.b16 %v3062, %v3054
    %v3319 = vpack.c.b16 %v3063, %v3055
    %v3320 = vpack.c.b16 %v3064, %v3056
    %v3321 = vpack.c.b16 %v3065, %v3057
    %3578 = vmatprep.subr.bf16.mxu0 %v3067
    %3579 = vmatpush1.bf16.msra.mxu0 %v3066
    %3580 = vmatprep.subr.bf16.mxu0 %v3075
    %3581 = vmatpush1.bf16.msra.mxu0 %v3074
    %3582 = vmatprep.subr.bf16.mxu0 %v3083
    %3583 = vmatpush1.bf16.msra.mxu0 %v3082
    %3584 = vmatprep.subr.bf16.mxu0 %v3091
    %3585 = vmatpush1.bf16.msra.mxu0 %v3090
    %3586 = vmatprep.subr.bf16.mxu0 %v3099
    %3587 = vmatpush1.bf16.msra.mxu0 %v3098
    %3588 = vmatprep.subr.bf16.mxu0 %v3107
    %3589 = vmatpush1.bf16.msra.mxu0 %v3106
    %3590 = vmatprep.subr.bf16.mxu0 %v3115
    %3591 = vmatpush1.bf16.msra.mxu0 %v3114
    %3592 = vmatprep.subr.bf16.mxu0 %v3123
    %3593 = vmatpush1.bf16.msra.mxu0 %v3122
    %3594 = vmatprep.subr.bf16.mxu0 %v3131
    %3595 = vmatpush1.bf16.msra.mxu0 %v3130
    %3596 = vmatprep.subr.bf16.mxu0 %v3139
    %3597 = vmatpush1.bf16.msra.mxu0 %v3138
    %3598 = vmatprep.subr.bf16.mxu0 %v3147
    %3599 = vmatpush1.bf16.msra.mxu0 %v3146
    %3600 = vmatprep.subr.bf16.mxu0 %v3155
    %3601 = vmatpush1.bf16.msra.mxu0 %v3154
    %3602 = vmatprep.subr.bf16.mxu0 %v3163
    %3603 = vmatpush1.bf16.msra.mxu0 %v3162
    %3604 = vmatprep.subr.bf16.mxu0 %v3171
    %3605 = vmatpush1.bf16.msra.mxu0 %v3170
    %3606 = vmatprep.subr.bf16.mxu0 %v3179
    %3607 = vmatpush1.bf16.msra.mxu0 %v3178
    %3608 = vmatprep.subr.bf16.mxu0 %v3187
    %3609 = vmatpush1.bf16.msra.mxu0 %v3186
    %3610 = vmatprep.mubr.bf16.mxu0 %v1997
    %3611 = vmatmul.mubr.bf16.gmra.mrb[0].mxu0 %v1996
    %v3612 = vpop.f32.mrb[0].mxu0
    %v3613 = vadd.f32 %v2261, %v3612
    %v3614 = vpop.f32.mrb[0].mxu0
    %v3615 = vadd.f32 %v2265, %v3614
    %v3616 = vpop.f32.mrb[0].mxu0
    %v3617 = vpop.f32.mrb[0].mxu0
    %3618 = vdwg.mxu0
    %3619 = vmatprep.subr.bf16.mxu0 %v3195
    %3620 = vmatpush1.bf16.msra.mxu0 %v3194
    %3621 = vmatprep.subr.bf16.mxu0 %v3203
    %3622 = vmatpush1.bf16.msra.mxu0 %v3202
    %3623 = vmatprep.subr.bf16.mxu0 %v3211
    %3624 = vmatpush1.bf16.msra.mxu0 %v3210
    %3625 = vmatprep.subr.bf16.mxu0 %v3219
    %3626 = vmatpush1.bf16.msra.mxu0 %v3218
    %3627 = vmatprep.subr.bf16.mxu0 %v3227
    %3628 = vmatpush1.bf16.msra.mxu0 %v3226
    %3629 = vmatprep.subr.bf16.mxu0 %v3235
    %3630 = vmatpush1.bf16.msra.mxu0 %v3234
    %3631 = vmatprep.subr.bf16.mxu0 %v3243
    %3632 = vmatpush1.bf16.msra.mxu0 %v3242
    %3633 = vmatprep.subr.bf16.mxu0 %v3251
    %3634 = vmatpush1.bf16.msra.mxu0 %v3250
    %3635 = vmatprep.subr.bf16.mxu0 %v3259
    %3636 = vmatpush1.bf16.msra.mxu0 %v3258
    %3637 = vmatprep.subr.bf16.mxu0 %v3267
    %3638 = vmatpush1.bf16.msra.mxu0 %v3266
    %3639 = vmatprep.subr.bf16.mxu0 %v3275
    %3640 = vmatpush1.bf16.msra.mxu0 %v3274
    %3641 = vmatprep.subr.bf16.mxu0 %v3283
    %3642 = vmatpush1.bf16.msra.mxu0 %v3282
    %3643 = vmatprep.subr.bf16.mxu0 %v3291
    %3644 = vmatpush1.bf16.msra.mxu0 %v3290
    %3645 = vmatprep.subr.bf16.mxu0 %v3299
    %3646 = vmatpush1.bf16.msra.mxu0 %v3298
    %3647 = vmatprep.subr.bf16.mxu0 %v3307
    %3648 = vmatpush1.bf16.msra.mxu0 %v3306
    %3649 = vmatprep.subr.bf16.mxu0 %v3315
    %3650 = vmatpush1.bf16.msra.mxu0 %v3314
    %3651 = vmatprep.mubr.bf16.mxu0 %v1999
    %3652 = vmatmul.mubr.bf16.gmra.mrb[0].mxu0 %v1998
    %v3653 = vpop.f32.mrb[0].mxu0
    %v3654 = vadd.f32 %v3613, %v3653
    %v3655 = vpop.f32.mrb[0].mxu0
    %v3656 = vadd.f32 %v3615, %v3655
    %v3657 = vpop.f32.mrb[0].mxu0
    %v3658 = vpop.f32.mrb[0].mxu0
    %3659 = vdwg.mxu0
    %3660 = vmatprep.subr.bf16.mxu0 %v3069
    %3661 = vmatpush1.bf16.msra.mxu0 %v3068
    %3662 = vmatprep.subr.bf16.mxu0 %v3077
    %3663 = vmatpush1.bf16.msra.mxu0 %v3076
    %3664 = vmatprep.subr.bf16.mxu0 %v3085
    %3665 = vmatpush1.bf16.msra.mxu0 %v3084
    %3666 = vmatprep.subr.bf16.mxu0 %v3093
    %3667 = vmatpush1.bf16.msra.mxu0 %v3092
    %3668 = vmatprep.subr.bf16.mxu0 %v3101
    %3669 = vmatpush1.bf16.msra.mxu0 %v3100
    %3670 = vmatprep.subr.bf16.mxu0 %v3109
    %3671 = vmatpush1.bf16.msra.mxu0 %v3108
    %3672 = vmatprep.subr.bf16.mxu0 %v3117
    %3673 = vmatpush1.bf16.msra.mxu0 %v3116
    %3674 = vmatprep.subr.bf16.mxu0 %v3125
    %3675 = vmatpush1.bf16.msra.mxu0 %v3124
    %3676 = vmatprep.subr.bf16.mxu0 %v3133
    %3677 = vmatpush1.bf16.msra.mxu0 %v3132
    %3678 = vmatprep.subr.bf16.mxu0 %v3141
    %3679 = vmatpush1.bf16.msra.mxu0 %v3140
    %3680 = vmatprep.subr.bf16.mxu0 %v3149
    %3681 = vmatpush1.bf16.msra.mxu0 %v3148
    %3682 = vmatprep.subr.bf16.mxu0 %v3157
    %3683 = vmatpush1.bf16.msra.mxu0 %v3156
    %3684 = vmatprep.subr.bf16.mxu0 %v3165
    %3685 = vmatpush1.bf16.msra.mxu0 %v3164
    %3686 = vmatprep.subr.bf16.mxu0 %v3173
    %3687 = vmatpush1.bf16.msra.mxu0 %v3172
    %3688 = vmatprep.subr.bf16.mxu0 %v3181
    %3689 = vmatpush1.bf16.msra.mxu0 %v3180
    %3690 = vmatprep.subr.bf16.mxu0 %v3189
    %3691 = vmatpush1.bf16.msra.mxu0 %v3188
    %3692 = vmatprep.mubr.bf16.mxu0 %v1997
    %3693 = vmatmul.mubr.bf16.gmra.mrb[0].mxu0 %v1996
    %v3694 = vpop.f32.mrb[0].mxu0
    %v3695 = vadd.f32 %v2269, %v3694
    %v3696 = vpop.f32.mrb[0].mxu0
    %v3697 = vadd.f32 %v2273, %v3696
    %v3698 = vpop.f32.mrb[0].mxu0
    %v3699 = vpop.f32.mrb[0].mxu0
    %3700 = vdwg.mxu0
    %3701 = vmatprep.subr.bf16.mxu0 %v3197
    %3702 = vmatpush1.bf16.msra.mxu0 %v3196
    %3703 = vmatprep.subr.bf16.mxu0 %v3205
    %3704 = vmatpush1.bf16.msra.mxu0 %v3204
    %3705 = vmatprep.subr.bf16.mxu0 %v3213
    %3706 = vmatpush1.bf16.msra.mxu0 %v3212
    %3707 = vmatprep.subr.bf16.mxu0 %v3221
    %3708 = vmatpush1.bf16.msra.mxu0 %v3220
    %3709 = vmatprep.subr.bf16.mxu0 %v3229
    %3710 = vmatpush1.bf16.msra.mxu0 %v3228
    %3711 = vmatprep.subr.bf16.mxu0 %v3237
    %3712 = vmatpush1.bf16.msra.mxu0 %v3236
    %3713 = vmatprep.subr.bf16.mxu0 %v3245
    %3714 = vmatpush1.bf16.msra.mxu0 %v3244
    %3715 = vmatprep.subr.bf16.mxu0 %v3253
    %3716 = vmatpush1.bf16.msra.mxu0 %v3252
    %3717 = vmatprep.subr.bf16.mxu0 %v3261
    %3718 = vmatpush1.bf16.msra.mxu0 %v3260
    %3719 = vmatprep.subr.bf16.mxu0 %v3269
    %3720 = vmatpush1.bf16.msra.mxu0 %v3268
    %3721 = vmatprep.subr.bf16.mxu0 %v3277
    %3722 = vmatpush1.bf16.msra.mxu0 %v3276
    %3723 = vmatprep.subr.bf16.mxu0 %v3285
    %3724 = vmatpush1.bf16.msra.mxu0 %v3284
    %3725 = vmatprep.subr.bf16.mxu0 %v3293
    %3726 = vmatpush1.bf16.msra.mxu0 %v3292
    %3727 = vmatprep.subr.bf16.mxu0 %v3301
    %3728 = vmatpush1.bf16.msra.mxu0 %v3300
    %3729 = vmatprep.subr.bf16.mxu0 %v3309
    %3730 = vmatpush1.bf16.msra.mxu0 %v3308
    %3731 = vmatprep.subr.bf16.mxu0 %v3317
    %3732 = vmatpush1.bf16.msra.mxu0 %v3316
    %3733 = vmatprep.mubr.bf16.mxu0 %v1999
    %3734 = vmatmul.mubr.bf16.gmra.mrb[0].mxu0 %v1998
    %v3735 = vpop.f32.mrb[0].mxu0
    %v3736 = vadd.f32 %v3695, %v3735
    %v3737 = vpop.f32.mrb[0].mxu0
    %v3738 = vadd.f32 %v3697, %v3737
    %v3739 = vpop.f32.mrb[0].mxu0
    %v3740 = vpop.f32.mrb[0].mxu0
    %3741 = vdwg.mxu0
    %3742 = vmatprep.subr.bf16.mxu0 %v3071
    %3743 = vmatpush1.bf16.msra.mxu0 %v3070
    %3744 = vmatprep.subr.bf16.mxu0 %v3079
    %3745 = vmatpush1.bf16.msra.mxu0 %v3078
    %3746 = vmatprep.subr.bf16.mxu0 %v3087
    %3747 = vmatpush1.bf16.msra.mxu0 %v3086
    %3748 = vmatprep.subr.bf16.mxu0 %v3095
    %3749 = vmatpush1.bf16.msra.mxu0 %v3094
    %3750 = vmatprep.subr.bf16.mxu0 %v3103
    %3751 = vmatpush1.bf16.msra.mxu0 %v3102
    %3752 = vmatprep.subr.bf16.mxu0 %v3111
    %3753 = vmatpush1.bf16.msra.mxu0 %v3110
    %3754 = vmatprep.subr.bf16.mxu0 %v3119
    %3755 = vmatpush1.bf16.msra.mxu0 %v3118
    %3756 = vmatprep.subr.bf16.mxu0 %v3127
    %3757 = vmatpush1.bf16.msra.mxu0 %v3126
    %3758 = vmatprep.subr.bf16.mxu0 %v3135
    %3759 = vmatpush1.bf16.msra.mxu0 %v3134
    %3760 = vmatprep.subr.bf16.mxu0 %v3143
    %3761 = vmatpush1.bf16.msra.mxu0 %v3142
    %3762 = vmatprep.subr.bf16.mxu0 %v3151
    %3763 = vmatpush1.bf16.msra.mxu0 %v3150
    %3764 = vmatprep.subr.bf16.mxu0 %v3159
    %3765 = vmatpush1.bf16.msra.mxu0 %v3158
    %3766 = vmatprep.subr.bf16.mxu0 %v3167
    %3767 = vmatpush1.bf16.msra.mxu0 %v3166
    %3768 = vmatprep.subr.bf16.mxu0 %v3175
    %3769 = vmatpush1.bf16.msra.mxu0 %v3174
    %3770 = vmatprep.subr.bf16.mxu0 %v3183
    %3771 = vmatpush1.bf16.msra.mxu0 %v3182
    %3772 = vmatprep.subr.bf16.mxu0 %v3191
    %3773 = vmatpush1.bf16.msra.mxu0 %v3190
    %3774 = vmatprep.mubr.bf16.mxu0 %v1997
    %3775 = vmatmul.mubr.bf16.gmra.mrb[0].mxu0 %v1996
    %v3776 = vpop.f32.mrb[0].mxu0
    %v3777 = vadd.f32 %v2277, %v3776
    %v3778 = vpop.f32.mrb[0].mxu0
    %v3779 = vadd.f32 %v2281, %v3778
    %v3780 = vpop.f32.mrb[0].mxu0
    %v3781 = vpop.f32.mrb[0].mxu0
    %3782 = vdwg.mxu0
    %3783 = vmatprep.subr.bf16.mxu0 %v3199
    %3784 = vmatpush1.bf16.msra.mxu0 %v3198
    %3785 = vmatprep.subr.bf16.mxu0 %v3207
    %3786 = vmatpush1.bf16.msra.mxu0 %v3206
    %3787 = vmatprep.subr.bf16.mxu0 %v3215
    %3788 = vmatpush1.bf16.msra.mxu0 %v3214
    %3789 = vmatprep.subr.bf16.mxu0 %v3223
    %3790 = vmatpush1.bf16.msra.mxu0 %v3222
    %3791 = vmatprep.subr.bf16.mxu0 %v3231
    %3792 = vmatpush1.bf16.msra.mxu0 %v3230
    %3793 = vmatprep.subr.bf16.mxu0 %v3239
    %3794 = vmatpush1.bf16.msra.mxu0 %v3238
    %3795 = vmatprep.subr.bf16.mxu0 %v3247
    %3796 = vmatpush1.bf16.msra.mxu0 %v3246
    %3797 = vmatprep.subr.bf16.mxu0 %v3255
    %3798 = vmatpush1.bf16.msra.mxu0 %v3254
    %3799 = vmatprep.subr.bf16.mxu0 %v3263
    %3800 = vmatpush1.bf16.msra.mxu0 %v3262
    %3801 = vmatprep.subr.bf16.mxu0 %v3271
    %3802 = vmatpush1.bf16.msra.mxu0 %v3270
    %3803 = vmatprep.subr.bf16.mxu0 %v3279
    %3804 = vmatpush1.bf16.msra.mxu0 %v3278
    %3805 = vmatprep.subr.bf16.mxu0 %v3287
    %3806 = vmatpush1.bf16.msra.mxu0 %v3286
    %3807 = vmatprep.subr.bf16.mxu0 %v3295
    %3808 = vmatpush1.bf16.msra.mxu0 %v3294
    %3809 = vmatprep.subr.bf16.mxu0 %v3303
    %3810 = vmatpush1.bf16.msra.mxu0 %v3302
    %3811 = vmatprep.subr.bf16.mxu0 %v3311
    %3812 = vmatpush1.bf16.msra.mxu0 %v3310
    %3813 = vmatprep.subr.bf16.mxu0 %v3319
    %3814 = vmatpush1.bf16.msra.mxu0 %v3318
    %3815 = vmatprep.mubr.bf16.mxu0 %v1999
    %3816 = vmatmul.mubr.bf16.gmra.mrb[0].mxu0 %v1998
    %v3817 = vpop.f32.mrb[0].mxu0
    %v3818 = vadd.f32 %v3777, %v3817
    %v3819 = vpop.f32.mrb[0].mxu0
    %v3820 = vadd.f32 %v3779, %v3819
    %v3821 = vpop.f32.mrb[0].mxu0
    %v3822 = vpop.f32.mrb[0].mxu0
    %3823 = vdwg.mxu0
    %3824 = vmatprep.subr.bf16.mxu0 %v3073
    %3825 = vmatpush1.bf16.msra.mxu0 %v3072
    %3826 = vmatprep.subr.bf16.mxu0 %v3081
    %3827 = vmatpush1.bf16.msra.mxu0 %v3080
    %3828 = vmatprep.subr.bf16.mxu0 %v3089
    %3829 = vmatpush1.bf16.msra.mxu0 %v3088
    %3830 = vmatprep.subr.bf16.mxu0 %v3097
    %3831 = vmatpush1.bf16.msra.mxu0 %v3096
    %3832 = vmatprep.subr.bf16.mxu0 %v3105
    %3833 = vmatpush1.bf16.msra.mxu0 %v3104
    %3834 = vmatprep.subr.bf16.mxu0 %v3113
    %3835 = vmatpush1.bf16.msra.mxu0 %v3112
    %3836 = vmatprep.subr.bf16.mxu0 %v3121
    %3837 = vmatpush1.bf16.msra.mxu0 %v3120
    %3838 = vmatprep.subr.bf16.mxu0 %v3129
    %3839 = vmatpush1.bf16.msra.mxu0 %v3128
    %3840 = vmatprep.subr.bf16.mxu0 %v3137
    %3841 = vmatpush1.bf16.msra.mxu0 %v3136
    %3842 = vmatprep.subr.bf16.mxu0 %v3145
    %3843 = vmatpush1.bf16.msra.mxu0 %v3144
    %3844 = vmatprep.subr.bf16.mxu0 %v3153
    %3845 = vmatpush1.bf16.msra.mxu0 %v3152
    %3846 = vmatprep.subr.bf16.mxu0 %v3161
    %3847 = vmatpush1.bf16.msra.mxu0 %v3160
    %3848 = vmatprep.subr.bf16.mxu0 %v3169
    %3849 = vmatpush1.bf16.msra.mxu0 %v3168
    %3850 = vmatprep.subr.bf16.mxu0 %v3177
    %3851 = vmatpush1.bf16.msra.mxu0 %v3176
    %3852 = vmatprep.subr.bf16.mxu0 %v3185
    %3853 = vmatpush1.bf16.msra.mxu0 %v3184
    %3854 = vmatprep.subr.bf16.mxu0 %v3193
    %3855 = vmatpush1.bf16.msra.mxu0 %v3192
    %3856 = vmatprep.mubr.bf16.mxu0 %v1997
    %3857 = vmatmul.mubr.bf16.gmra.mrb[0].mxu0 %v1996
    %v3858 = vpop.f32.mrb[0].mxu0
    %v3859 = vadd.f32 %v2285, %v3858
    %v3860 = vpop.f32.mrb[0].mxu0
    %v3861 = vadd.f32 %v2289, %v3860
    %v3862 = vpop.f32.mrb[0].mxu0
    %v3863 = vpop.f32.mrb[0].mxu0
    %3864 = vdwg.mxu0
    %3865 = vmatprep.subr.bf16.mxu0 %v3201
    %3866 = vmatpush1.bf16.msra.mxu0 %v3200
    %3867 = vmatprep.subr.bf16.mxu0 %v3209
    %3868 = vmatpush1.bf16.msra.mxu0 %v3208
    %3869 = vmatprep.subr.bf16.mxu0 %v3217
    %3870 = vmatpush1.bf16.msra.mxu0 %v3216
    %3871 = vmatprep.subr.bf16.mxu0 %v3225
    %3872 = vmatpush1.bf16.msra.mxu0 %v3224
    %3873 = vmatprep.subr.bf16.mxu0 %v3233
    %3874 = vmatpush1.bf16.msra.mxu0 %v3232
    %3875 = vmatprep.subr.bf16.mxu0 %v3241
    %3876 = vmatpush1.bf16.msra.mxu0 %v3240
    %3877 = vmatprep.subr.bf16.mxu0 %v3249
    %3878 = vmatpush1.bf16.msra.mxu0 %v3248
    %3879 = vmatprep.subr.bf16.mxu0 %v3257
    %3880 = vmatpush1.bf16.msra.mxu0 %v3256
    %3881 = vmatprep.subr.bf16.mxu0 %v3265
    %3882 = vmatpush1.bf16.msra.mxu0 %v3264
    %3883 = vmatprep.subr.bf16.mxu0 %v3273
    %3884 = vmatpush1.bf16.msra.mxu0 %v3272
    %3885 = vmatprep.subr.bf16.mxu0 %v3281
    %3886 = vmatpush1.bf16.msra.mxu0 %v3280
    %3887 = vmatprep.subr.bf16.mxu0 %v3289
    %3888 = vmatpush1.bf16.msra.mxu0 %v3288
    %3889 = vmatprep.subr.bf16.mxu0 %v3297
    %3890 = vmatpush1.bf16.msra.mxu0 %v3296
    %3891 = vmatprep.subr.bf16.mxu0 %v3305
    %3892 = vmatpush1.bf16.msra.mxu0 %v3304
    %3893 = vmatprep.subr.bf16.mxu0 %v3313
    %3894 = vmatpush1.bf16.msra.mxu0 %v3312
    %3895 = vmatprep.subr.bf16.mxu0 %v3321
    %3896 = vmatpush1.bf16.msra.mxu0 %v3320
    %3897 = vmatprep.mubr.bf16.mxu0 %v1999
    %3898 = vmatmul.mubr.bf16.gmra.mrb[0].mxu0 %v1998
    %v3899 = vpop.f32.mrb[0].mxu0
    %v3900 = vadd.f32 %v3859, %v3899
    %v3901 = vpop.f32.mrb[0].mxu0
    %v3902 = vadd.f32 %v3861, %v3901
    %v3903 = vpop.f32.mrb[0].mxu0
    %v3904 = vpop.f32.mrb[0].mxu0
    %3905 = vdwg.mxu0
    %3906 = vst [vmem:[#allocation12] sm:$0xff] %v3654
    %3907 = vst [vmem:[#allocation12 + $0x8] sm:$0xff] %v3656
    %3908 = vst [vmem:[#allocation12 + $0x10] sm:$0xff] %v3736
    %3909 = vst [vmem:[#allocation12 + $0x18] sm:$0xff] %v3738
    %3910 = vst [vmem:[#allocation12 + $0x20] sm:$0xff] %v3818
    %3911 = vst [vmem:[#allocation12 + $0x28] sm:$0xff] %v3820
    %3912 = vst [vmem:[#allocation12 + $0x30] sm:$0xff] %v3900
    %3913 = vst [vmem:[#allocation12 + $0x38] sm:$0xff] %v3902
    // Predicated region
    $region42: #{autoencoder_pallas.1} parent=1 // pred_check
      _
    $region43: #{autoencoder_pallas.1} parent=1 // pred_check_branch
      %3915 = sbr.rel (0) target = $region45
    $region44: #{autoencoder_pallas.1} parent=1 // pred_region
      %s3917 = ssub.s32 512, 512
      %3918 = vsyncadd [#allocation4], %s3917
      %s3920 = sshll.u32 [#allocation11], 4
      %s3921 = int_to_ptr.vmem [resolvable:$true] %s3920
      %3923 = dma.vmem_to_hbm [thread:$0]  %s3921, 512, %s5, [#allocation4]
    $region45: #{autoencoder_pallas.1} parent=1 // pred_fallthru
      _
    // Predicated region
    $region46: #{autoencoder_pallas.1} parent=1 // pred_check
      _
    $region47: #{autoencoder_pallas.1} parent=1 // pred_check_branch
      %3925 = sbr.rel (0) target = $region49
    $region48: #{autoencoder_pallas.1} parent=1 // pred_region
      %s3927 = ssub.s32 1024, 1024
      %3928 = vsyncadd [#allocation13], %s3927
      %s3930 = sshll.u32 [#allocation12], 4
      %s3931 = int_to_ptr.vmem [resolvable:$true] %s3930
      %3933 = dma.vmem_to_hbm [thread:$0]  %s3931, 1024, %s6, [#allocation13]
    $region49: #{autoencoder_pallas.1} parent=1 // pred_fallthru
      _
    // Predicated region
    $region50: #{autoencoder_pallas.1} parent=1 // pred_check
      _
    $region51: #{autoencoder_pallas.1} parent=1 // pred_check_branch
      %3935 = sbr.rel (0) target = $region53
    $region52: #{autoencoder_pallas.1} parent=1 // pred_region
      %3936 = dma.done [#allocation4], 512
    $region53: #{autoencoder_pallas.1} parent=1 // pred_fallthru
      _
    // Predicated region
    $region54: #{autoencoder_pallas.1} parent=1 // pred_check
      _
    $region55: #{autoencoder_pallas.1} parent=1 // pred_check_branch
      %3938 = sbr.rel (0) target = $region57
    $region56: #{autoencoder_pallas.1} parent=1 // pred_region
      %3939 = dma.done [#allocation13], 1024
    $region57: #{autoencoder_pallas.1} parent=1 // pred_fallthru
      _
    %3940 = vsyncpa [#allocation3], 1
    %3941 = vsyncpa [#allocation6], 1
    %3942 = vsyncpa [#allocation9], 1
    %3943 = vsyncpa [#allocation4], 1
    %3944 = vsyncpa [#allocation13], 1

</llo_original>
